<compile_context>
chip_gen: v7x
topology: tpu7x:2x2x1
jax: 0.10.0
libtpu: 0.0.40
codegen_flags: <defaults>
</compile_context>

<pallas_src>
import math
import numpy as np
import jax
import jax.numpy as jnp
from jax.experimental import pallas as pl
from jax.experimental.pallas import tpu as pltpu

# ---------------- config (small synthetic FlauBERT) ----------------
VOCAB = 100      # vocab size
MAXPOS = 64      # max position embeddings
H = 32           # hidden size
NH = 4           # attention heads
HD = H // NH     # head dim
F = 4 * H        # FFN inner dim
L = 2            # num layers
O = 3            # output_dim of the classification head
O_PAD = 128      # lane-padded logits width (dense stores); sliced to O in wrapper
QKV_PAD = 128    # lane-padded 3*H fused QKV width
W_PAD = 128      # lane-padded `weights` output width
B, S = 2, 8      # batch, sequence
BS = B * S
LN_EPS = 1e-12
NEG_INF = -1e30


# ---------------- shared math helpers (pure jnp) ----------------
def _layer_norm(x, g, b):
    mu = jnp.mean(x, axis=-1, keepdims=True)
    var = jnp.mean(jnp.square(x - mu), axis=-1, keepdims=True)
    return (x - mu) * jax.lax.rsqrt(var + LN_EPS) * g + b


def _gelu_tanh(x):
    # tanh-approximate GELU: tanh lowers to the (otherwise idle) EUP slot.
    c = math.sqrt(2.0 / math.pi)
    return 0.5 * x * (1.0 + jnp.tanh(c * (x + 0.044715 * x * x * x)))


# ---------------- fused Pallas kernel ----------------
def flaubert_fused_kernel(
        emb_ref, mcol_ref, madd_ref,
        lng_ref, lnb_ref,
        wqkv_ref, bqkv_ref,
        wo_ref, bo_ref, ln1g_ref, ln1b_ref,
        w1_ref, b1_ref, w2_ref, b2_ref, ln2g_ref, ln2b_ref,
        wout_ref, bout_ref,
        logits_ref, weights_ref,
        x_scr, qkv_scr, ctx_scr):
    """Whole forward in one program: emb-LN -> L post-norm XLM blocks -> head."""
    mcol = mcol_ref[...]                                           # (BS, 1)  row mask
    madd = madd_ref[...]                                           # (BS, BS) additive mask

    # --- embedding LayerNorm + padding mask ---
    x_scr[...] = _layer_norm(emb_ref[...], lng_ref[...], lnb_ref[...]) * mcol

    scale = 1.0 / math.sqrt(HD)
    inv_nh = 1.0 / NH

    for l in range(L):                                             # static unroll (L=2)
        x = x_scr[...]                                             # (BS, H) f32 residual
        x_bf = x.astype(jnp.bfloat16)

        # ---- fused QKV: one (BS,H)@(H,128) bf16 matmul + one bias add ----
        qkv = jnp.dot(x_bf, wqkv_ref[l],
                      preferred_element_type=jnp.float32) + bqkv_ref[l]
        qkv_scr[...] = qkv.astype(jnp.bfloat16)                    # (BS, 128) bf16

        if l == L - 1:
            w_acc = jnp.zeros((B, BS), jnp.float32)                # per-sample query-row-0

        # ---- per-head block-diagonal attention over the whole (BS,.) slab ----
        for h in range(NH):                                        # static unroll (NH=4)
            lo = h * HD
            qh = qkv_scr[:, lo:lo + HD]                            # (BS, HD) bf16 ref views
            kh = qkv_scr[:, H + lo:H + lo + HD]
            vh = qkv_scr[:, 2 * H + lo:2 * H + lo + HD]
            # scores: contract head dim of both operands (no explicit transpose)
            sc = jax.lax.dot_general(
                qh, kh, (((1,), (1,)), ((), ())),
                preferred_element_type=jnp.float32) * scale + madd  # (BS, BS)
            sc = sc - jnp.max(sc, axis=-1, keepdims=True)
            e = jnp.exp(sc)
            p = e * pl.reciprocal(jnp.sum(e, axis=-1, keepdims=True), approx=True)
            if l == L - 1:
                # only the query-position-0 row of each sample feeds `weights`
                w_acc = w_acc + jnp.concatenate(
                    [p[b * S:b * S + 1, :] for b in range(B)], axis=0)
            ctx = jnp.dot(p.astype(jnp.bfloat16), vh,
                          preferred_element_type=jnp.float32)      # (BS, HD)
            ctx_scr[:, lo:lo + HD] = ctx.astype(jnp.bfloat16)

        # ---- fused output projection: one (BS,H)@(H,H) matmul ----
        attn = jnp.dot(ctx_scr[...], wo_ref[l],
                       preferred_element_type=jnp.float32) + bo_ref[l]

        # ---- residual + LN, FFN, residual + LN, padding mask (post-norm XLM) ----
        t = _layer_norm(x + attn, ln1g_ref[l], ln1b_ref[l])
        h1 = _gelu_tanh(jnp.dot(t.astype(jnp.bfloat16), w1_ref[l],
                                preferred_element_type=jnp.float32) + b1_ref[l])
        h2 = jnp.dot(h1.astype(jnp.bfloat16), w2_ref[l],
                     preferred_element_type=jnp.float32) + b2_ref[l]
        t = _layer_norm(t + h2, ln2g_ref[l], ln2b_ref[l]) * mcol
        x_scr[...] = t

        if l == L - 1:
            # weights = attentions[-1][:, :, 0, :].mean(heads) -> lane-padded dense store
            w_rows = w_acc * inv_nh                                # (B, BS)
            weights_ref[...] = jnp.concatenate(
                [w_rows, jnp.zeros((B, W_PAD - BS), jnp.float32)], axis=1)

    # ---- output head: lane-padded (BS, O_PAD) logits, dense stores ----
    logits_ref[...] = jnp.dot(x_scr[...].astype(jnp.bfloat16), wout_ref[...],
                              preferred_element_type=jnp.float32) + bout_ref[...]


# ---------------- wrapper ----------------
def flaubert_pallas_forward(params, input_ids, attention_mask):
    m = attention_mask.astype(jnp.float32)                        # (B, S)
    mask_col = m.reshape(BS, 1)

    # Additive attention mask merging key padding with cross-sample blocking for
    # the block-diagonal batched scores.
    key_valid = m.reshape(BS)
    idx = jnp.arange(BS)
    same_sample = (idx[:, None] // S) == (idx[None, :] // S)
    mask_add = jnp.where(same_sample & (key_valid[None, :] > 0.0),
                         0.0, NEG_INF).astype(jnp.float32)         # (BS, BS)

    # TODO(synk): embedding-table gather (word/positional) has no clean Pallas
    # equivalent at this size; done in plain JAX before the fused kernel.
    pos = jnp.arange(S, dtype=jnp.int32)
    emb = (params["word_emb"][input_ids]
           + params["pos_emb"][pos][None, :, :]).reshape(BS, H)

    logits_pad, weights_pad = pl.pallas_call(
        flaubert_fused_kernel,
        out_shape=(jax.ShapeDtypeStruct((BS, O_PAD), jnp.float32),
                   jax.ShapeDtypeStruct((B, W_PAD), jnp.float32)),
        scratch_shapes=[pltpu.VMEM((BS, H), jnp.float32),          # residual activation
                        pltpu.VMEM((BS, QKV_PAD), jnp.bfloat16),   # fused QKV
                        pltpu.VMEM((BS, H), jnp.bfloat16)],        # per-head contexts
        compiler_params=pltpu.CompilerParams(vmem_limit_bytes=16 * 1024 * 1024),
    )(emb, mask_col, mask_add,
      params["ln_emb_g"], params["ln_emb_b"],
      params["wqkv_pad"], params["bqkv_pad"],
      params["wo_bf"], params["bo"],
      params["ln1_g"], params["ln1_b"],
      params["w1_bf"], params["b1"], params["w2_bf"], params["b2"],
      params["ln2_g"], params["ln2_b"],
      params["w_out_pad"], params["b_out_pad"])

    logits = logits_pad[:, :O].reshape(B, S, O)
    # sample b's query-row-0 attention lives in lanes [b*S, (b+1)*S) of row b
    weights = jnp.stack([weights_pad[b, b * S:(b + 1) * S] for b in range(B)], axis=0)
    return logits, weights


# ---------------- pure-JAX reference (same math, exact erf GELU, f32) ----------------
def flaubert_ref_forward(params, input_ids, attention_mask):
    m = attention_mask.astype(jnp.float32)
    pos = jnp.arange(S, dtype=jnp.int32)
    x = params["word_emb"][input_ids] + params["pos_emb"][pos][None, :, :]
    x = _layer_norm(x, params["ln_emb_g"], params["ln_emb_b"]) * m[:, :, None]
    attw = None
    for l in range(L):
        q = x @ params["wq"][l] + params["bq"][l]
        k = x @ params["wk"][l] + params["bk"][l]
        v = x @ params["wv"][l] + params["bv"][l]
        qh = q.reshape(B, S, NH, HD).transpose(0, 2, 1, 3)
        kh = k.reshape(B, S, NH, HD).transpose(0, 2, 1, 3)
        vh = v.reshape(B, S, NH, HD).transpose(0, 2, 1, 3)
        sc = jnp.einsum("bhqd,bhkd->bhqk", qh, kh) / math.sqrt(HD)
        sc = jnp.where(m[:, None, None, :] > 0.0, sc, NEG_INF)
        sc = sc - jnp.max(sc, axis=-1, keepdims=True)
        e = jnp.exp(sc)
        p = e / jnp.sum(e, axis=-1, keepdims=True)
        attw = p
        ctx = jnp.einsum("bhqk,bhkd->bhqd", p, vh).transpose(0, 2, 1, 3).reshape(B, S, H)
        attn = ctx @ params["wo"][l] + params["bo"][l]
        x = _layer_norm(x + attn, params["ln1_g"][l], params["ln1_b"][l])
        h1 = jax.nn.gelu(x @ params["w1"][l] + params["b1"][l], approximate=False)
        h2 = h1 @ params["w2"][l] + params["b2"][l]
        x = _layer_norm(x + h2, params["ln2_g"][l], params["ln2_b"][l])
        x = x * m[:, :, None]
    logits = x @ params["w_out"] + params["b_out"]
    weights = jnp.mean(attw[:, :, 0, :], axis=1)
    return logits, weights


# ---------------- deterministic parameter init (layer-stacked) ----------------
def init_params(key):
    ks = jax.random.split(key, 9)
    scale = 0.02
    p = {
        "word_emb": scale * jax.random.normal(ks[0], (VOCAB, H), jnp.float32),
        "pos_emb": scale * jax.random.normal(ks[1], (MAXPOS, H), jnp.float32),
        "ln_emb_g": jnp.ones((1, H), jnp.float32),
        "ln_emb_b": jnp.zeros((1, H), jnp.float32),
        "wq": scale * jax.random.normal(ks[2], (L, H, H), jnp.float32),
        "wk": scale * jax.random.normal(ks[3], (L, H, H), jnp.float32),
        "wv": scale * jax.random.normal(ks[4], (L, H, H), jnp.float32),
        "wo": scale * jax.random.normal(ks[5], (L, H, H), jnp.float32),
        "w1": scale * jax.random.normal(ks[6], (L, H, F), jnp.float32),
        "w2": scale * jax.random.normal(ks[7], (L, F, H), jnp.float32),
        "bq": jnp.zeros((L, 1, H), jnp.float32),
        "bk": jnp.zeros((L, 1, H), jnp.float32),
        "bv": jnp.zeros((L, 1, H), jnp.float32),
        "bo": jnp.zeros((L, 1, H), jnp.float32),
        "b1": jnp.zeros((L, 1, F), jnp.float32),
        "b2": jnp.zeros((L, 1, H), jnp.float32),
        "ln1_g": jnp.ones((L, 1, H), jnp.float32),
        "ln1_b": jnp.zeros((L, 1, H), jnp.float32),
        "ln2_g": jnp.ones((L, 1, H), jnp.float32),
        "ln2_b": jnp.zeros((L, 1, H), jnp.float32),
    }
    # output_layer: xavier_uniform_ weight, zero bias (deterministic synthetic init)
    bound = math.sqrt(6.0 / (H + O))
    w_out = jax.random.uniform(ks[8], (H, O), jnp.float32, -bound, bound)
    p["w_out"] = w_out
    p["b_out"] = jnp.zeros((1, O), jnp.float32)

    # --- kernel-format weights: fused QKV, lane-padded, bf16 MXU operands ---
    wqkv = jnp.concatenate([p["wq"], p["wk"], p["wv"]], axis=2)            # (L, H, 3H)
    p["wqkv_pad"] = jnp.concatenate(
        [wqkv, jnp.zeros((L, H, QKV_PAD - 3 * H), jnp.float32)],
        axis=2).astype(jnp.bfloat16)                                        # (L, H, 128)
    bqkv = jnp.concatenate([p["bq"], p["bk"], p["bv"]], axis=2)            # (L, 1, 3H)
    p["bqkv_pad"] = jnp.concatenate(
        [bqkv, jnp.zeros((L, 1, QKV_PAD - 3 * H), jnp.float32)], axis=2)    # (L, 1, 128) f32
    p["wo_bf"] = p["wo"].astype(jnp.bfloat16)
    p["w1_bf"] = p["w1"].astype(jnp.bfloat16)
    p["w2_bf"] = p["w2"].astype(jnp.bfloat16)
    p["w_out_pad"] = jnp.concatenate(
        [w_out, jnp.zeros((H, O_PAD - O), jnp.float32)], axis=1).astype(jnp.bfloat16)
    p["b_out_pad"] = jnp.zeros((1, O_PAD), jnp.float32)
    return p


if __name__ == "__main__":
    key = jax.random.PRNGKey(0)
    k_param, k_ids = jax.random.split(key)
    params = init_params(k_param)

    input_ids = jax.random.randint(k_ids, (B, S), 0, VOCAB, dtype=jnp.int32)
    attention_mask = jnp.ones((B, S), jnp.int32).at[1, 6:].set(0)   # pad tail of sample 1

    logits, weights = jax.jit(flaubert_pallas_forward)(params, input_ids, attention_mask)
    jax.block_until_ready((logits, weights))

    ref_logits, ref_weights = flaubert_ref_forward(params, input_ids, attention_mask)
    assert logits.shape == (B, S, O) and weights.shape == (B, S)
    assert np.allclose(np.asarray(logits), np.asarray(ref_logits), atol=2e-2, rtol=2e-2)
    assert np.allclose(np.asarray(weights), np.asarray(ref_weights), atol=2e-2, rtol=2e-2)

    print("KERNEL_OK")
</pallas_src>

<mosaic_0001>
module attributes {stable_mosaic.version = 11 : i64} {
  func.func @flaubert_fused_kernel(%arg0: memref<16x32xf32, #tpu.memory_space<vmem>>, %arg1: memref<16x1xf32, #tpu.memory_space<vmem>>, %arg2: memref<16x16xf32, #tpu.memory_space<vmem>>, %arg3: memref<1x32xf32, #tpu.memory_space<vmem>>, %arg4: memref<1x32xf32, #tpu.memory_space<vmem>>, %arg5: memref<2x32x128xbf16, #tpu.memory_space<vmem>>, %arg6: memref<2x1x128xf32, #tpu.memory_space<vmem>>, %arg7: memref<2x32x32xbf16, #tpu.memory_space<vmem>>, %arg8: memref<2x1x32xf32, #tpu.memory_space<vmem>>, %arg9: memref<2x1x32xf32, #tpu.memory_space<vmem>>, %arg10: memref<2x1x32xf32, #tpu.memory_space<vmem>>, %arg11: memref<2x32x128xbf16, #tpu.memory_space<vmem>>, %arg12: memref<2x1x128xf32, #tpu.memory_space<vmem>>, %arg13: memref<2x128x32xbf16, #tpu.memory_space<vmem>>, %arg14: memref<2x1x32xf32, #tpu.memory_space<vmem>>, %arg15: memref<2x1x32xf32, #tpu.memory_space<vmem>>, %arg16: memref<2x1x32xf32, #tpu.memory_space<vmem>>, %arg17: memref<32x128xbf16, #tpu.memory_space<vmem>>, %arg18: memref<1x128xf32, #tpu.memory_space<vmem>>, %arg19: memref<16x128xf32, #tpu.memory_space<vmem>>, %arg20: memref<2x128xf32, #tpu.memory_space<vmem>>, %arg21: memref<16x32xf32, #tpu.memory_space<vmem>>, %arg22: memref<16x128xbf16, #tpu.memory_space<vmem>>, %arg23: memref<16x32xbf16, #tpu.memory_space<vmem>>) attributes {dimension_semantics = [], scalar_prefetch = 0 : i64, scratch_operands = 3 : i64, tpu.core_type = #tpu.core_type<tc>} {
    %c0 = arith.constant 0 : index
    %c0_0 = arith.constant 0 : index
    %0 = vector.load %arg1[%c0, %c0_0] : memref<16x1xf32, #tpu.memory_space<vmem>>, vector<16x1xf32>
    %c0_1 = arith.constant 0 : index
    %c0_2 = arith.constant 0 : index
    %1 = vector.load %arg2[%c0_1, %c0_2] : memref<16x16xf32, #tpu.memory_space<vmem>>, vector<16x16xf32>
    %c0_3 = arith.constant 0 : index
    %c0_4 = arith.constant 0 : index
    %2 = vector.load %arg0[%c0_3, %c0_4] : memref<16x32xf32, #tpu.memory_space<vmem>>, vector<16x32xf32>
    %c0_5 = arith.constant 0 : index
    %c0_6 = arith.constant 0 : index
    %3 = vector.load %arg3[%c0_5, %c0_6] : memref<1x32xf32, #tpu.memory_space<vmem>>, vector<1x32xf32>
    %c0_7 = arith.constant 0 : index
    %c0_8 = arith.constant 0 : index
    %4 = vector.load %arg4[%c0_7, %c0_8] : memref<1x32xf32, #tpu.memory_space<vmem>>, vector<1x32xf32>
    %cst = arith.constant dense<0.000000e+00> : vector<16xf32>
    %5 = vector.multi_reduction <add>, %2, %cst [1] : vector<16x32xf32> to vector<16xf32>
    %6 = vector.shape_cast %5 : vector<16xf32> to vector<16x1xf32>
    %cst_9 = arith.constant 3.200000e+01 : f32
    %7 = vector.broadcast %cst_9 : f32 to vector<16x1xf32>
    %8 = arith.divf %6, %7 : vector<16x1xf32>
    %9 = vector.broadcast %8 : vector<16x1xf32> to vector<16x32xf32>
    %10 = arith.subf %2, %9 : vector<16x32xf32>
    %11 = arith.mulf %10, %10 : vector<16x32xf32>
    %cst_10 = arith.constant dense<0.000000e+00> : vector<16xf32>
    %12 = vector.multi_reduction <add>, %11, %cst_10 [1] : vector<16x32xf32> to vector<16xf32>
    %13 = vector.shape_cast %12 : vector<16xf32> to vector<16x1xf32>
    %cst_11 = arith.constant 3.200000e+01 : f32
    %14 = vector.broadcast %cst_11 : f32 to vector<16x1xf32>
    %15 = arith.divf %13, %14 : vector<16x1xf32>
    %16 = vector.broadcast %8 : vector<16x1xf32> to vector<16x32xf32>
    %17 = arith.subf %2, %16 : vector<16x32xf32>
    %cst_12 = arith.constant 9.99999996E-13 : f32
    %18 = vector.broadcast %cst_12 : f32 to vector<16x1xf32>
    %19 = arith.addf %15, %18 : vector<16x1xf32>
    %20 = math.rsqrt %19 : vector<16x1xf32>
    %21 = vector.broadcast %20 : vector<16x1xf32> to vector<16x32xf32>
    %22 = arith.mulf %17, %21 : vector<16x32xf32>
    %23 = vector.broadcast %3 : vector<1x32xf32> to vector<16x32xf32>
    %24 = arith.mulf %22, %23 : vector<16x32xf32>
    %25 = vector.broadcast %4 : vector<1x32xf32> to vector<16x32xf32>
    %26 = arith.addf %24, %25 : vector<16x32xf32>
    %27 = vector.broadcast %0 : vector<16x1xf32> to vector<16x32xf32>
    %28 = arith.mulf %26, %27 : vector<16x32xf32>
    %c0_13 = arith.constant 0 : index
    %c0_14 = arith.constant 0 : index
    %29 = vector.load %arg21[%c0_13, %c0_14] : memref<16x32xf32, #tpu.memory_space<vmem>>, vector<16x32xf32>
    tpu.vector_store %arg21[%c0_13, %c0_14], %28 {strides = array<i32>} : memref<16x32xf32, #tpu.memory_space<vmem>>, vector<16x32xf32>,
    %c0_15 = arith.constant 0 : index
    %c0_16 = arith.constant 0 : index
    %30 = vector.load %arg21[%c0_15, %c0_16] : memref<16x32xf32, #tpu.memory_space<vmem>>, vector<16x32xf32>
    %31 = arith.truncf %30 : vector<16x32xf32> to vector<16x32xbf16>
    %c0_17 = arith.constant 0 : index
    %c0_18 = arith.constant 0 : index
    %c0_19 = arith.constant 0 : index
    %32 = vector.load %arg5[%c0_17, %c0_18, %c0_19] : memref<2x32x128xbf16, #tpu.memory_space<vmem>>, vector<1x32x128xbf16>
    %33 = vector.shape_cast %32 : vector<1x32x128xbf16> to vector<32x128xbf16>
    %cst_20 = arith.constant dense<0.000000e+00> : vector<16x128xf32>
    %34 = tpu.matmul %31, %33, %cst_20 {dimension_numbers = #tpu.dot_dimension_numbers<[1], [0], [0], [1], [0, 0, 1, 1], [], []>} : vector<16x32xbf16>, vector<32x128xbf16>, vector<16x128xf32> -> vector<16x128xf32>
    %c0_21 = arith.constant 0 : index
    %c0_22 = arith.constant 0 : index
    %c0_23 = arith.constant 0 : index
    %35 = vector.load %arg6[%c0_21, %c0_22, %c0_23] : memref<2x1x128xf32, #tpu.memory_space<vmem>>, vector<1x1x128xf32>
    %36 = vector.shape_cast %35 : vector<1x1x128xf32> to vector<1x128xf32>
    %37 = vector.broadcast %36 : vector<1x128xf32> to vector<16x128xf32>
    %38 = arith.addf %34, %37 : vector<16x128xf32>
    %39 = arith.truncf %38 : vector<16x128xf32> to vector<16x128xbf16>
    %c0_24 = arith.constant 0 : index
    %c0_25 = arith.constant 0 : index
    %40 = vector.load %arg22[%c0_24, %c0_25] : memref<16x128xbf16, #tpu.memory_space<vmem>>, vector<16x128xbf16>
    tpu.vector_store %arg22[%c0_24, %c0_25], %39 {strides = array<i32>} : memref<16x128xbf16, #tpu.memory_space<vmem>>, vector<16x128xbf16>,
    %c0_26 = arith.constant 0 : index
    %c0_27 = arith.constant 0 : index
    %41 = vector.load %arg22[%c0_26, %c0_27] : memref<16x128xbf16, #tpu.memory_space<vmem>>, vector<16x8xbf16>
    %c0_28 = arith.constant 0 : index
    %c32 = arith.constant 32 : index
    %42 = vector.load %arg22[%c0_28, %c32] : memref<16x128xbf16, #tpu.memory_space<vmem>>, vector<16x8xbf16>
    %c0_29 = arith.constant 0 : index
    %c64 = arith.constant 64 : index
    %43 = vector.load %arg22[%c0_29, %c64] : memref<16x128xbf16, #tpu.memory_space<vmem>>, vector<16x8xbf16>
    %cst_30 = arith.constant dense<0.000000e+00> : vector<16x16xf32>
    %44 = tpu.matmul %41, %42, %cst_30 {dimension_numbers = #tpu.dot_dimension_numbers<[1], [1], [0], [0], [0, 0, 1, 0], [], []>} : vector<16x8xbf16>, vector<16x8xbf16>, vector<16x16xf32> -> vector<16x16xf32>
    %cst_31 = arith.constant 0.353553385 : f32
    %45 = vector.broadcast %cst_31 : f32 to vector<16x16xf32>
    %46 = arith.mulf %44, %45 : vector<16x16xf32>
    %47 = arith.addf %46, %1 : vector<16x16xf32>
    %cst_32 = arith.constant dense<0xFF800000> : vector<16xf32>
    %48 = vector.multi_reduction <maximumf>, %47, %cst_32 [1] : vector<16x16xf32> to vector<16xf32>
    %49 = vector.shape_cast %48 : vector<16xf32> to vector<16x1xf32>
    %50 = vector.broadcast %49 : vector<16x1xf32> to vector<16x16xf32>
    %51 = arith.subf %47, %50 : vector<16x16xf32>
    %52 = math.exp %51 : vector<16x16xf32>
    %cst_33 = arith.constant dense<0.000000e+00> : vector<16xf32>
    %53 = vector.multi_reduction <add>, %52, %cst_33 [1] : vector<16x16xf32> to vector<16xf32>
    %54 = vector.shape_cast %53 : vector<16xf32> to vector<16x1xf32>
    %55 = tpu.reciprocal %54 {approx = true} : vector<16x1xf32> -> vector<16x1xf32>
    %56 = vector.broadcast %55 : vector<16x1xf32> to vector<16x16xf32>
    %57 = arith.mulf %52, %56 : vector<16x16xf32>
    %58 = arith.truncf %57 : vector<16x16xf32> to vector<16x16xbf16>
    %cst_34 = arith.constant dense<0.000000e+00> : vector<16x8xf32>
    %59 = tpu.matmul %58, %43, %cst_34 {dimension_numbers = #tpu.dot_dimension_numbers<[1], [0], [0], [1], [0, 0, 1, 1], [], []>} : vector<16x16xbf16>, vector<16x8xbf16>, vector<16x8xf32> -> vector<16x8xf32>
    %60 = arith.truncf %59 : vector<16x8xf32> to vector<16x8xbf16>
    %c0_35 = arith.constant 0 : index
    %c0_36 = arith.constant 0 : index
    %61 = vector.load %arg23[%c0_35, %c0_36] : memref<16x32xbf16, #tpu.memory_space<vmem>>, vector<16x8xbf16>
    tpu.vector_store %arg23[%c0_35, %c0_36], %60 {strides = array<i32>} : memref<16x32xbf16, #tpu.memory_space<vmem>>, vector<16x8xbf16>,
    %c0_37 = arith.constant 0 : index
    %c8 = arith.constant 8 : index
    %62 = vector.load %arg22[%c0_37, %c8] : memref<16x128xbf16, #tpu.memory_space<vmem>>, vector<16x8xbf16>
    %c0_38 = arith.constant 0 : index
    %c40 = arith.constant 40 : index
    %63 = vector.load %arg22[%c0_38, %c40] : memref<16x128xbf16, #tpu.memory_space<vmem>>, vector<16x8xbf16>
    %c0_39 = arith.constant 0 : index
    %c72 = arith.constant 72 : index
    %64 = vector.load %arg22[%c0_39, %c72] : memref<16x128xbf16, #tpu.memory_space<vmem>>, vector<16x8xbf16>
    %cst_40 = arith.constant dense<0.000000e+00> : vector<16x16xf32>
    %65 = tpu.matmul %62, %63, %cst_40 {dimension_numbers = #tpu.dot_dimension_numbers<[1], [1], [0], [0], [0, 0, 1, 0], [], []>} : vector<16x8xbf16>, vector<16x8xbf16>, vector<16x16xf32> -> vector<16x16xf32>
    %cst_41 = arith.constant 0.353553385 : f32
    %66 = vector.broadcast %cst_41 : f32 to vector<16x16xf32>
    %67 = arith.mulf %65, %66 : vector<16x16xf32>
    %68 = arith.addf %67, %1 : vector<16x16xf32>
    %cst_42 = arith.constant dense<0xFF800000> : vector<16xf32>
    %69 = vector.multi_reduction <maximumf>, %68, %cst_42 [1] : vector<16x16xf32> to vector<16xf32>
    %70 = vector.shape_cast %69 : vector<16xf32> to vector<16x1xf32>
    %71 = vector.broadcast %70 : vector<16x1xf32> to vector<16x16xf32>
    %72 = arith.subf %68, %71 : vector<16x16xf32>
    %73 = math.exp %72 : vector<16x16xf32>
    %cst_43 = arith.constant dense<0.000000e+00> : vector<16xf32>
    %74 = vector.multi_reduction <add>, %73, %cst_43 [1] : vector<16x16xf32> to vector<16xf32>
    %75 = vector.shape_cast %74 : vector<16xf32> to vector<16x1xf32>
    %76 = tpu.reciprocal %75 {approx = true} : vector<16x1xf32> -> vector<16x1xf32>
    %77 = vector.broadcast %76 : vector<16x1xf32> to vector<16x16xf32>
    %78 = arith.mulf %73, %77 : vector<16x16xf32>
    %79 = arith.truncf %78 : vector<16x16xf32> to vector<16x16xbf16>
    %cst_44 = arith.constant dense<0.000000e+00> : vector<16x8xf32>
    %80 = tpu.matmul %79, %64, %cst_44 {dimension_numbers = #tpu.dot_dimension_numbers<[1], [0], [0], [1], [0, 0, 1, 1], [], []>} : vector<16x16xbf16>, vector<16x8xbf16>, vector<16x8xf32> -> vector<16x8xf32>
    %81 = arith.truncf %80 : vector<16x8xf32> to vector<16x8xbf16>
    %c0_45 = arith.constant 0 : index
    %c8_46 = arith.constant 8 : index
    %82 = vector.load %arg23[%c0_45, %c8_46] : memref<16x32xbf16, #tpu.memory_space<vmem>>, vector<16x8xbf16>
    tpu.vector_store %arg23[%c0_45, %c8_46], %81 {strides = array<i32>} : memref<16x32xbf16, #tpu.memory_space<vmem>>, vector<16x8xbf16>,
    %c0_47 = arith.constant 0 : index
    %c16 = arith.constant 16 : index
    %83 = vector.load %arg22[%c0_47, %c16] : memref<16x128xbf16, #tpu.memory_space<vmem>>, vector<16x8xbf16>
    %c0_48 = arith.constant 0 : index
    %c48 = arith.constant 48 : index
    %84 = vector.load %arg22[%c0_48, %c48] : memref<16x128xbf16, #tpu.memory_space<vmem>>, vector<16x8xbf16>
    %c0_49 = arith.constant 0 : index
    %c80 = arith.constant 80 : index
    %85 = vector.load %arg22[%c0_49, %c80] : memref<16x128xbf16, #tpu.memory_space<vmem>>, vector<16x8xbf16>
    %cst_50 = arith.constant dense<0.000000e+00> : vector<16x16xf32>
    %86 = tpu.matmul %83, %84, %cst_50 {dimension_numbers = #tpu.dot_dimension_numbers<[1], [1], [0], [0], [0, 0, 1, 0], [], []>} : vector<16x8xbf16>, vector<16x8xbf16>, vector<16x16xf32> -> vector<16x16xf32>
    %cst_51 = arith.constant 0.353553385 : f32
    %87 = vector.broadcast %cst_51 : f32 to vector<16x16xf32>
    %88 = arith.mulf %86, %87 : vector<16x16xf32>
    %89 = arith.addf %88, %1 : vector<16x16xf32>
    %cst_52 = arith.constant dense<0xFF800000> : vector<16xf32>
    %90 = vector.multi_reduction <maximumf>, %89, %cst_52 [1] : vector<16x16xf32> to vector<16xf32>
    %91 = vector.shape_cast %90 : vector<16xf32> to vector<16x1xf32>
    %92 = vector.broadcast %91 : vector<16x1xf32> to vector<16x16xf32>
    %93 = arith.subf %89, %92 : vector<16x16xf32>
    %94 = math.exp %93 : vector<16x16xf32>
    %cst_53 = arith.constant dense<0.000000e+00> : vector<16xf32>
    %95 = vector.multi_reduction <add>, %94, %cst_53 [1] : vector<16x16xf32> to vector<16xf32>
    %96 = vector.shape_cast %95 : vector<16xf32> to vector<16x1xf32>
    %97 = tpu.reciprocal %96 {approx = true} : vector<16x1xf32> -> vector<16x1xf32>
    %98 = vector.broadcast %97 : vector<16x1xf32> to vector<16x16xf32>
    %99 = arith.mulf %94, %98 : vector<16x16xf32>
    %100 = arith.truncf %99 : vector<16x16xf32> to vector<16x16xbf16>
    %cst_54 = arith.constant dense<0.000000e+00> : vector<16x8xf32>
    %101 = tpu.matmul %100, %85, %cst_54 {dimension_numbers = #tpu.dot_dimension_numbers<[1], [0], [0], [1], [0, 0, 1, 1], [], []>} : vector<16x16xbf16>, vector<16x8xbf16>, vector<16x8xf32> -> vector<16x8xf32>
    %102 = arith.truncf %101 : vector<16x8xf32> to vector<16x8xbf16>
    %c0_55 = arith.constant 0 : index
    %c16_56 = arith.constant 16 : index
    %103 = vector.load %arg23[%c0_55, %c16_56] : memref<16x32xbf16, #tpu.memory_space<vmem>>, vector<16x8xbf16>
    tpu.vector_store %arg23[%c0_55, %c16_56], %102 {strides = array<i32>} : memref<16x32xbf16, #tpu.memory_space<vmem>>, vector<16x8xbf16>,
    %c0_57 = arith.constant 0 : index
    %c24 = arith.constant 24 : index
    %104 = vector.load %arg22[%c0_57, %c24] : memref<16x128xbf16, #tpu.memory_space<vmem>>, vector<16x8xbf16>
    %c0_58 = arith.constant 0 : index
    %c56 = arith.constant 56 : index
    %105 = vector.load %arg22[%c0_58, %c56] : memref<16x128xbf16, #tpu.memory_space<vmem>>, vector<16x8xbf16>
    %c0_59 = arith.constant 0 : index
    %c88 = arith.constant 88 : index
    %106 = vector.load %arg22[%c0_59, %c88] : memref<16x128xbf16, #tpu.memory_space<vmem>>, vector<16x8xbf16>
    %cst_60 = arith.constant dense<0.000000e+00> : vector<16x16xf32>
    %107 = tpu.matmul %104, %105, %cst_60 {dimension_numbers = #tpu.dot_dimension_numbers<[1], [1], [0], [0], [0, 0, 1, 0], [], []>} : vector<16x8xbf16>, vector<16x8xbf16>, vector<16x16xf32> -> vector<16x16xf32>
    %cst_61 = arith.constant 0.353553385 : f32
    %108 = vector.broadcast %cst_61 : f32 to vector<16x16xf32>
    %109 = arith.mulf %107, %108 : vector<16x16xf32>
    %110 = arith.addf %109, %1 : vector<16x16xf32>
    %cst_62 = arith.constant dense<0xFF800000> : vector<16xf32>
    %111 = vector.multi_reduction <maximumf>, %110, %cst_62 [1] : vector<16x16xf32> to vector<16xf32>
    %112 = vector.shape_cast %111 : vector<16xf32> to vector<16x1xf32>
    %113 = vector.broadcast %112 : vector<16x1xf32> to vector<16x16xf32>
    %114 = arith.subf %110, %113 : vector<16x16xf32>
    %115 = math.exp %114 : vector<16x16xf32>
    %cst_63 = arith.constant dense<0.000000e+00> : vector<16xf32>
    %116 = vector.multi_reduction <add>, %115, %cst_63 [1] : vector<16x16xf32> to vector<16xf32>
    %117 = vector.shape_cast %116 : vector<16xf32> to vector<16x1xf32>
    %118 = tpu.reciprocal %117 {approx = true} : vector<16x1xf32> -> vector<16x1xf32>
    %119 = vector.broadcast %118 : vector<16x1xf32> to vector<16x16xf32>
    %120 = arith.mulf %115, %119 : vector<16x16xf32>
    %121 = arith.truncf %120 : vector<16x16xf32> to vector<16x16xbf16>
    %cst_64 = arith.constant dense<0.000000e+00> : vector<16x8xf32>
    %122 = tpu.matmul %121, %106, %cst_64 {dimension_numbers = #tpu.dot_dimension_numbers<[1], [0], [0], [1], [0, 0, 1, 1], [], []>} : vector<16x16xbf16>, vector<16x8xbf16>, vector<16x8xf32> -> vector<16x8xf32>
    %123 = arith.truncf %122 : vector<16x8xf32> to vector<16x8xbf16>
    %c0_65 = arith.constant 0 : index
    %c24_66 = arith.constant 24 : index
    %124 = vector.load %arg23[%c0_65, %c24_66] : memref<16x32xbf16, #tpu.memory_space<vmem>>, vector<16x8xbf16>
    tpu.vector_store %arg23[%c0_65, %c24_66], %123 {strides = array<i32>} : memref<16x32xbf16, #tpu.memory_space<vmem>>, vector<16x8xbf16>,
    %c0_67 = arith.constant 0 : index
    %c0_68 = arith.constant 0 : index
    %125 = vector.load %arg23[%c0_67, %c0_68] : memref<16x32xbf16, #tpu.memory_space<vmem>>, vector<16x32xbf16>
    %c0_69 = arith.constant 0 : index
    %c0_70 = arith.constant 0 : index
    %c0_71 = arith.constant 0 : index
    %126 = vector.load %arg7[%c0_69, %c0_70, %c0_71] : memref<2x32x32xbf16, #tpu.memory_space<vmem>>, vector<1x32x32xbf16>
    %127 = vector.shape_cast %126 : vector<1x32x32xbf16> to vector<32x32xbf16>
    %cst_72 = arith.constant dense<0.000000e+00> : vector<16x32xf32>
    %128 = tpu.matmul %125, %127, %cst_72 {dimension_numbers = #tpu.dot_dimension_numbers<[1], [0], [0], [1], [0, 0, 1, 1], [], []>} : vector<16x32xbf16>, vector<32x32xbf16>, vector<16x32xf32> -> vector<16x32xf32>
    %c0_73 = arith.constant 0 : index
    %c0_74 = arith.constant 0 : index
    %c0_75 = arith.constant 0 : index
    %129 = vector.load %arg8[%c0_73, %c0_74, %c0_75] : memref<2x1x32xf32, #tpu.memory_space<vmem>>, vector<1x1x32xf32>
    %130 = vector.shape_cast %129 : vector<1x1x32xf32> to vector<1x32xf32>
    %131 = vector.broadcast %130 : vector<1x32xf32> to vector<16x32xf32>
    %132 = arith.addf %128, %131 : vector<16x32xf32>
    %133 = arith.addf %30, %132 : vector<16x32xf32>
    %c0_76 = arith.constant 0 : index
    %c0_77 = arith.constant 0 : index
    %c0_78 = arith.constant 0 : index
    %134 = vector.load %arg9[%c0_76, %c0_77, %c0_78] : memref<2x1x32xf32, #tpu.memory_space<vmem>>, vector<1x1x32xf32>
    %135 = vector.shape_cast %134 : vector<1x1x32xf32> to vector<1x32xf32>
    %c0_79 = arith.constant 0 : index
    %c0_80 = arith.constant 0 : index
    %c0_81 = arith.constant 0 : index
    %136 = vector.load %arg10[%c0_79, %c0_80, %c0_81] : memref<2x1x32xf32, #tpu.memory_space<vmem>>, vector<1x1x32xf32>
    %137 = vector.shape_cast %136 : vector<1x1x32xf32> to vector<1x32xf32>
    %cst_82 = arith.constant dense<0.000000e+00> : vector<16xf32>
    %138 = vector.multi_reduction <add>, %133, %cst_82 [1] : vector<16x32xf32> to vector<16xf32>
    %139 = vector.shape_cast %138 : vector<16xf32> to vector<16x1xf32>
    %cst_83 = arith.constant 3.200000e+01 : f32
    %140 = vector.broadcast %cst_83 : f32 to vector<16x1xf32>
    %141 = arith.divf %139, %140 : vector<16x1xf32>
    %142 = vector.broadcast %141 : vector<16x1xf32> to vector<16x32xf32>
    %143 = arith.subf %133, %142 : vector<16x32xf32>
    %144 = arith.mulf %143, %143 : vector<16x32xf32>
    %cst_84 = arith.constant dense<0.000000e+00> : vector<16xf32>
    %145 = vector.multi_reduction <add>, %144, %cst_84 [1] : vector<16x32xf32> to vector<16xf32>
    %146 = vector.shape_cast %145 : vector<16xf32> to vector<16x1xf32>
    %cst_85 = arith.constant 3.200000e+01 : f32
    %147 = vector.broadcast %cst_85 : f32 to vector<16x1xf32>
    %148 = arith.divf %146, %147 : vector<16x1xf32>
    %149 = vector.broadcast %141 : vector<16x1xf32> to vector<16x32xf32>
    %150 = arith.subf %133, %149 : vector<16x32xf32>
    %cst_86 = arith.constant 9.99999996E-13 : f32
    %151 = vector.broadcast %cst_86 : f32 to vector<16x1xf32>
    %152 = arith.addf %148, %151 : vector<16x1xf32>
    %153 = math.rsqrt %152 : vector<16x1xf32>
    %154 = vector.broadcast %153 : vector<16x1xf32> to vector<16x32xf32>
    %155 = arith.mulf %150, %154 : vector<16x32xf32>
    %156 = vector.broadcast %135 : vector<1x32xf32> to vector<16x32xf32>
    %157 = arith.mulf %155, %156 : vector<16x32xf32>
    %158 = vector.broadcast %137 : vector<1x32xf32> to vector<16x32xf32>
    %159 = arith.addf %157, %158 : vector<16x32xf32>
    %160 = arith.truncf %159 : vector<16x32xf32> to vector<16x32xbf16>
    %c0_87 = arith.constant 0 : index
    %c0_88 = arith.constant 0 : index
    %c0_89 = arith.constant 0 : index
    %161 = vector.load %arg11[%c0_87, %c0_88, %c0_89] : memref<2x32x128xbf16, #tpu.memory_space<vmem>>, vector<1x32x128xbf16>
    %162 = vector.shape_cast %161 : vector<1x32x128xbf16> to vector<32x128xbf16>
    %cst_90 = arith.constant dense<0.000000e+00> : vector<16x128xf32>
    %163 = tpu.matmul %160, %162, %cst_90 {dimension_numbers = #tpu.dot_dimension_numbers<[1], [0], [0], [1], [0, 0, 1, 1], [], []>} : vector<16x32xbf16>, vector<32x128xbf16>, vector<16x128xf32> -> vector<16x128xf32>
    %c0_91 = arith.constant 0 : index
    %c0_92 = arith.constant 0 : index
    %c0_93 = arith.constant 0 : index
    %164 = vector.load %arg12[%c0_91, %c0_92, %c0_93] : memref<2x1x128xf32, #tpu.memory_space<vmem>>, vector<1x1x128xf32>
    %165 = vector.shape_cast %164 : vector<1x1x128xf32> to vector<1x128xf32>
    %166 = vector.broadcast %165 : vector<1x128xf32> to vector<16x128xf32>
    %167 = arith.addf %163, %166 : vector<16x128xf32>
    %cst_94 = arith.constant 5.000000e-01 : f32
    %168 = vector.broadcast %cst_94 : f32 to vector<16x128xf32>
    %169 = arith.mulf %168, %167 : vector<16x128xf32>
    %cst_95 = arith.constant 4.471500e-02 : f32
    %170 = vector.broadcast %cst_95 : f32 to vector<16x128xf32>
    %171 = arith.mulf %170, %167 : vector<16x128xf32>
    %172 = arith.mulf %171, %167 : vector<16x128xf32>
    %173 = arith.mulf %172, %167 : vector<16x128xf32>
    %174 = arith.addf %167, %173 : vector<16x128xf32>
    %cst_96 = arith.constant 0.797884583 : f32
    %175 = vector.broadcast %cst_96 : f32 to vector<16x128xf32>
    %176 = arith.mulf %175, %174 : vector<16x128xf32>
    %177 = math.tanh %176 : vector<16x128xf32>
    %cst_97 = arith.constant 1.000000e+00 : f32
    %178 = vector.broadcast %cst_97 : f32 to vector<16x128xf32>
    %179 = arith.addf %178, %177 : vector<16x128xf32>
    %180 = arith.mulf %169, %179 : vector<16x128xf32>
    %181 = arith.truncf %180 : vector<16x128xf32> to vector<16x128xbf16>
    %c0_98 = arith.constant 0 : index
    %c0_99 = arith.constant 0 : index
    %c0_100 = arith.constant 0 : index
    %182 = vector.load %arg13[%c0_98, %c0_99, %c0_100] : memref<2x128x32xbf16, #tpu.memory_space<vmem>>, vector<1x128x32xbf16>
    %183 = vector.shape_cast %182 : vector<1x128x32xbf16> to vector<128x32xbf16>
    %cst_101 = arith.constant dense<0.000000e+00> : vector<16x32xf32>
    %184 = tpu.matmul %181, %183, %cst_101 {dimension_numbers = #tpu.dot_dimension_numbers<[1], [0], [0], [1], [0, 0, 1, 1], [], []>} : vector<16x128xbf16>, vector<128x32xbf16>, vector<16x32xf32> -> vector<16x32xf32>
    %c0_102 = arith.constant 0 : index
    %c0_103 = arith.constant 0 : index
    %c0_104 = arith.constant 0 : index
    %185 = vector.load %arg14[%c0_102, %c0_103, %c0_104] : memref<2x1x32xf32, #tpu.memory_space<vmem>>, vector<1x1x32xf32>
    %186 = vector.shape_cast %185 : vector<1x1x32xf32> to vector<1x32xf32>
    %187 = vector.broadcast %186 : vector<1x32xf32> to vector<16x32xf32>
    %188 = arith.addf %184, %187 : vector<16x32xf32>
    %189 = arith.addf %159, %188 : vector<16x32xf32>
    %c0_105 = arith.constant 0 : index
    %c0_106 = arith.constant 0 : index
    %c0_107 = arith.constant 0 : index
    %190 = vector.load %arg15[%c0_105, %c0_106, %c0_107] : memref<2x1x32xf32, #tpu.memory_space<vmem>>, vector<1x1x32xf32>
    %191 = vector.shape_cast %190 : vector<1x1x32xf32> to vector<1x32xf32>
    %c0_108 = arith.constant 0 : index
    %c0_109 = arith.constant 0 : index
    %c0_110 = arith.constant 0 : index
    %192 = vector.load %arg16[%c0_108, %c0_109, %c0_110] : memref<2x1x32xf32, #tpu.memory_space<vmem>>, vector<1x1x32xf32>
    %193 = vector.shape_cast %192 : vector<1x1x32xf32> to vector<1x32xf32>
    %cst_111 = arith.constant dense<0.000000e+00> : vector<16xf32>
    %194 = vector.multi_reduction <add>, %189, %cst_111 [1] : vector<16x32xf32> to vector<16xf32>
    %195 = vector.shape_cast %194 : vector<16xf32> to vector<16x1xf32>
    %cst_112 = arith.constant 3.200000e+01 : f32
    %196 = vector.broadcast %cst_112 : f32 to vector<16x1xf32>
    %197 = arith.divf %195, %196 : vector<16x1xf32>
    %198 = vector.broadcast %197 : vector<16x1xf32> to vector<16x32xf32>
    %199 = arith.subf %189, %198 : vector<16x32xf32>
    %200 = arith.mulf %199, %199 : vector<16x32xf32>
    %cst_113 = arith.constant dense<0.000000e+00> : vector<16xf32>
    %201 = vector.multi_reduction <add>, %200, %cst_113 [1] : vector<16x32xf32> to vector<16xf32>
    %202 = vector.shape_cast %201 : vector<16xf32> to vector<16x1xf32>
    %cst_114 = arith.constant 3.200000e+01 : f32
    %203 = vector.broadcast %cst_114 : f32 to vector<16x1xf32>
    %204 = arith.divf %202, %203 : vector<16x1xf32>
    %205 = vector.broadcast %197 : vector<16x1xf32> to vector<16x32xf32>
    %206 = arith.subf %189, %205 : vector<16x32xf32>
    %cst_115 = arith.constant 9.99999996E-13 : f32
    %207 = vector.broadcast %cst_115 : f32 to vector<16x1xf32>
    %208 = arith.addf %204, %207 : vector<16x1xf32>
    %209 = math.rsqrt %208 : vector<16x1xf32>
    %210 = vector.broadcast %209 : vector<16x1xf32> to vector<16x32xf32>
    %211 = arith.mulf %206, %210 : vector<16x32xf32>
    %212 = vector.broadcast %191 : vector<1x32xf32> to vector<16x32xf32>
    %213 = arith.mulf %211, %212 : vector<16x32xf32>
    %214 = vector.broadcast %193 : vector<1x32xf32> to vector<16x32xf32>
    %215 = arith.addf %213, %214 : vector<16x32xf32>
    %216 = vector.broadcast %0 : vector<16x1xf32> to vector<16x32xf32>
    %217 = arith.mulf %215, %216 : vector<16x32xf32>
    %c0_116 = arith.constant 0 : index
    %c0_117 = arith.constant 0 : index
    %218 = vector.load %arg21[%c0_116, %c0_117] : memref<16x32xf32, #tpu.memory_space<vmem>>, vector<16x32xf32>
    tpu.vector_store %arg21[%c0_116, %c0_117], %217 {strides = array<i32>} : memref<16x32xf32, #tpu.memory_space<vmem>>, vector<16x32xf32>,
    %c0_118 = arith.constant 0 : index
    %c0_119 = arith.constant 0 : index
    %219 = vector.load %arg21[%c0_118, %c0_119] : memref<16x32xf32, #tpu.memory_space<vmem>>, vector<16x32xf32>
    %220 = arith.truncf %219 : vector<16x32xf32> to vector<16x32xbf16>
    %c1 = arith.constant 1 : index
    %c0_120 = arith.constant 0 : index
    %c0_121 = arith.constant 0 : index
    %221 = vector.load %arg5[%c1, %c0_120, %c0_121] : memref<2x32x128xbf16, #tpu.memory_space<vmem>>, vector<1x32x128xbf16>
    %222 = vector.shape_cast %221 : vector<1x32x128xbf16> to vector<32x128xbf16>
    %cst_122 = arith.constant dense<0.000000e+00> : vector<16x128xf32>
    %223 = tpu.matmul %220, %222, %cst_122 {dimension_numbers = #tpu.dot_dimension_numbers<[1], [0], [0], [1], [0, 0, 1, 1], [], []>} : vector<16x32xbf16>, vector<32x128xbf16>, vector<16x128xf32> -> vector<16x128xf32>
    %c1_123 = arith.constant 1 : index
    %c0_124 = arith.constant 0 : index
    %c0_125 = arith.constant 0 : index
    %224 = vector.load %arg6[%c1_123, %c0_124, %c0_125] : memref<2x1x128xf32, #tpu.memory_space<vmem>>, vector<1x1x128xf32>
    %225 = vector.shape_cast %224 : vector<1x1x128xf32> to vector<1x128xf32>
    %226 = vector.broadcast %225 : vector<1x128xf32> to vector<16x128xf32>
    %227 = arith.addf %223, %226 : vector<16x128xf32>
    %228 = arith.truncf %227 : vector<16x128xf32> to vector<16x128xbf16>
    %c0_126 = arith.constant 0 : index
    %c0_127 = arith.constant 0 : index
    %229 = vector.load %arg22[%c0_126, %c0_127] : memref<16x128xbf16, #tpu.memory_space<vmem>>, vector<16x128xbf16>
    tpu.vector_store %arg22[%c0_126, %c0_127], %228 {strides = array<i32>} : memref<16x128xbf16, #tpu.memory_space<vmem>>, vector<16x128xbf16>,
    %cst_128 = arith.constant 0.000000e+00 : f32
    %230 = vector.broadcast %cst_128 : f32 to vector<2x16xf32>
    %c0_129 = arith.constant 0 : index
    %c0_130 = arith.constant 0 : index
    %231 = vector.load %arg22[%c0_129, %c0_130] : memref<16x128xbf16, #tpu.memory_space<vmem>>, vector<16x8xbf16>
    %c0_131 = arith.constant 0 : index
    %c32_132 = arith.constant 32 : index
    %232 = vector.load %arg22[%c0_131, %c32_132] : memref<16x128xbf16, #tpu.memory_space<vmem>>, vector<16x8xbf16>
    %c0_133 = arith.constant 0 : index
    %c64_134 = arith.constant 64 : index
    %233 = vector.load %arg22[%c0_133, %c64_134] : memref<16x128xbf16, #tpu.memory_space<vmem>>, vector<16x8xbf16>
    %cst_135 = arith.constant dense<0.000000e+00> : vector<16x16xf32>
    %234 = tpu.matmul %231, %232, %cst_135 {dimension_numbers = #tpu.dot_dimension_numbers<[1], [1], [0], [0], [0, 0, 1, 0], [], []>} : vector<16x8xbf16>, vector<16x8xbf16>, vector<16x16xf32> -> vector<16x16xf32>
    %cst_136 = arith.constant 0.353553385 : f32
    %235 = vector.broadcast %cst_136 : f32 to vector<16x16xf32>
    %236 = arith.mulf %234, %235 : vector<16x16xf32>
    %237 = arith.addf %236, %1 : vector<16x16xf32>
    %cst_137 = arith.constant dense<0xFF800000> : vector<16xf32>
    %238 = vector.multi_reduction <maximumf>, %237, %cst_137 [1] : vector<16x16xf32> to vector<16xf32>
    %239 = vector.shape_cast %238 : vector<16xf32> to vector<16x1xf32>
    %240 = vector.broadcast %239 : vector<16x1xf32> to vector<16x16xf32>
    %241 = arith.subf %237, %240 : vector<16x16xf32>
    %242 = math.exp %241 : vector<16x16xf32>
    %cst_138 = arith.constant dense<0.000000e+00> : vector<16xf32>
    %243 = vector.multi_reduction <add>, %242, %cst_138 [1] : vector<16x16xf32> to vector<16xf32>
    %244 = vector.shape_cast %243 : vector<16xf32> to vector<16x1xf32>
    %245 = tpu.reciprocal %244 {approx = true} : vector<16x1xf32> -> vector<16x1xf32>
    %246 = vector.broadcast %245 : vector<16x1xf32> to vector<16x16xf32>
    %247 = arith.mulf %242, %246 : vector<16x16xf32>
    %248 = vector.extract_strided_slice %247 {offsets = [0, 0], sizes = [1, 16], strides = [1, 1]} : vector<16x16xf32> to vector<1x16xf32>
    %249 = vector.extract_strided_slice %247 {offsets = [8, 0], sizes = [1, 16], strides = [1, 1]} : vector<16x16xf32> to vector<1x16xf32>
    %250 = tpu.concatenate %248, %249 in 0 : vector<1x16xf32>, vector<1x16xf32> -> vector<2x16xf32>
    %251 = arith.addf %230, %250 : vector<2x16xf32>
    %252 = arith.truncf %247 : vector<16x16xf32> to vector<16x16xbf16>
    %cst_139 = arith.constant dense<0.000000e+00> : vector<16x8xf32>
    %253 = tpu.matmul %252, %233, %cst_139 {dimension_numbers = #tpu.dot_dimension_numbers<[1], [0], [0], [1], [0, 0, 1, 1], [], []>} : vector<16x16xbf16>, vector<16x8xbf16>, vector<16x8xf32> -> vector<16x8xf32>
    %254 = arith.truncf %253 : vector<16x8xf32> to vector<16x8xbf16>
    %c0_140 = arith.constant 0 : index
    %c0_141 = arith.constant 0 : index
    %255 = vector.load %arg23[%c0_140, %c0_141] : memref<16x32xbf16, #tpu.memory_space<vmem>>, vector<16x8xbf16>
    tpu.vector_store %arg23[%c0_140, %c0_141], %254 {strides = array<i32>} : memref<16x32xbf16, #tpu.memory_space<vmem>>, vector<16x8xbf16>,
    %c0_142 = arith.constant 0 : index
    %c8_143 = arith.constant 8 : index
    %256 = vector.load %arg22[%c0_142, %c8_143] : memref<16x128xbf16, #tpu.memory_space<vmem>>, vector<16x8xbf16>
    %c0_144 = arith.constant 0 : index
    %c40_145 = arith.constant 40 : index
    %257 = vector.load %arg22[%c0_144, %c40_145] : memref<16x128xbf16, #tpu.memory_space<vmem>>, vector<16x8xbf16>
    %c0_146 = arith.constant 0 : index
    %c72_147 = arith.constant 72 : index
    %258 = vector.load %arg22[%c0_146, %c72_147] : memref<16x128xbf16, #tpu.memory_space<vmem>>, vector<16x8xbf16>
    %cst_148 = arith.constant dense<0.000000e+00> : vector<16x16xf32>
    %259 = tpu.matmul %256, %257, %cst_148 {dimension_numbers = #tpu.dot_dimension_numbers<[1], [1], [0], [0], [0, 0, 1, 0], [], []>} : vector<16x8xbf16>, vector<16x8xbf16>, vector<16x16xf32> -> vector<16x16xf32>
    %cst_149 = arith.constant 0.353553385 : f32
    %260 = vector.broadcast %cst_149 : f32 to vector<16x16xf32>
    %261 = arith.mulf %259, %260 : vector<16x16xf32>
    %262 = arith.addf %261, %1 : vector<16x16xf32>
    %cst_150 = arith.constant dense<0xFF800000> : vector<16xf32>
    %263 = vector.multi_reduction <maximumf>, %262, %cst_150 [1] : vector<16x16xf32> to vector<16xf32>
    %264 = vector.shape_cast %263 : vector<16xf32> to vector<16x1xf32>
    %265 = vector.broadcast %264 : vector<16x1xf32> to vector<16x16xf32>
    %266 = arith.subf %262, %265 : vector<16x16xf32>
    %267 = math.exp %266 : vector<16x16xf32>
    %cst_151 = arith.constant dense<0.000000e+00> : vector<16xf32>
    %268 = vector.multi_reduction <add>, %267, %cst_151 [1] : vector<16x16xf32> to vector<16xf32>
    %269 = vector.shape_cast %268 : vector<16xf32> to vector<16x1xf32>
    %270 = tpu.reciprocal %269 {approx = true} : vector<16x1xf32> -> vector<16x1xf32>
    %271 = vector.broadcast %270 : vector<16x1xf32> to vector<16x16xf32>
    %272 = arith.mulf %267, %271 : vector<16x16xf32>
    %273 = vector.extract_strided_slice %272 {offsets = [0, 0], sizes = [1, 16], strides = [1, 1]} : vector<16x16xf32> to vector<1x16xf32>
    %274 = vector.extract_strided_slice %272 {offsets = [8, 0], sizes = [1, 16], strides = [1, 1]} : vector<16x16xf32> to vector<1x16xf32>
    %275 = tpu.concatenate %273, %274 in 0 : vector<1x16xf32>, vector<1x16xf32> -> vector<2x16xf32>
    %276 = arith.addf %251, %275 : vector<2x16xf32>
    %277 = arith.truncf %272 : vector<16x16xf32> to vector<16x16xbf16>
    %cst_152 = arith.constant dense<0.000000e+00> : vector<16x8xf32>
    %278 = tpu.matmul %277, %258, %cst_152 {dimension_numbers = #tpu.dot_dimension_numbers<[1], [0], [0], [1], [0, 0, 1, 1], [], []>} : vector<16x16xbf16>, vector<16x8xbf16>, vector<16x8xf32> -> vector<16x8xf32>
    %279 = arith.truncf %278 : vector<16x8xf32> to vector<16x8xbf16>
    %c0_153 = arith.constant 0 : index
    %c8_154 = arith.constant 8 : index
    %280 = vector.load %arg23[%c0_153, %c8_154] : memref<16x32xbf16, #tpu.memory_space<vmem>>, vector<16x8xbf16>
    tpu.vector_store %arg23[%c0_153, %c8_154], %279 {strides = array<i32>} : memref<16x32xbf16, #tpu.memory_space<vmem>>, vector<16x8xbf16>,
    %c0_155 = arith.constant 0 : index
    %c16_156 = arith.constant 16 : index
    %281 = vector.load %arg22[%c0_155, %c16_156] : memref<16x128xbf16, #tpu.memory_space<vmem>>, vector<16x8xbf16>
    %c0_157 = arith.constant 0 : index
    %c48_158 = arith.constant 48 : index
    %282 = vector.load %arg22[%c0_157, %c48_158] : memref<16x128xbf16, #tpu.memory_space<vmem>>, vector<16x8xbf16>
    %c0_159 = arith.constant 0 : index
    %c80_160 = arith.constant 80 : index
    %283 = vector.load %arg22[%c0_159, %c80_160] : memref<16x128xbf16, #tpu.memory_space<vmem>>, vector<16x8xbf16>
    %cst_161 = arith.constant dense<0.000000e+00> : vector<16x16xf32>
    %284 = tpu.matmul %281, %282, %cst_161 {dimension_numbers = #tpu.dot_dimension_numbers<[1], [1], [0], [0], [0, 0, 1, 0], [], []>} : vector<16x8xbf16>, vector<16x8xbf16>, vector<16x16xf32> -> vector<16x16xf32>
    %cst_162 = arith.constant 0.353553385 : f32
    %285 = vector.broadcast %cst_162 : f32 to vector<16x16xf32>
    %286 = arith.mulf %284, %285 : vector<16x16xf32>
    %287 = arith.addf %286, %1 : vector<16x16xf32>
    %cst_163 = arith.constant dense<0xFF800000> : vector<16xf32>
    %288 = vector.multi_reduction <maximumf>, %287, %cst_163 [1] : vector<16x16xf32> to vector<16xf32>
    %289 = vector.shape_cast %288 : vector<16xf32> to vector<16x1xf32>
    %290 = vector.broadcast %289 : vector<16x1xf32> to vector<16x16xf32>
    %291 = arith.subf %287, %290 : vector<16x16xf32>
    %292 = math.exp %291 : vector<16x16xf32>
    %cst_164 = arith.constant dense<0.000000e+00> : vector<16xf32>
    %293 = vector.multi_reduction <add>, %292, %cst_164 [1] : vector<16x16xf32> to vector<16xf32>
    %294 = vector.shape_cast %293 : vector<16xf32> to vector<16x1xf32>
    %295 = tpu.reciprocal %294 {approx = true} : vector<16x1xf32> -> vector<16x1xf32>
    %296 = vector.broadcast %295 : vector<16x1xf32> to vector<16x16xf32>
    %297 = arith.mulf %292, %296 : vector<16x16xf32>
    %298 = vector.extract_strided_slice %297 {offsets = [0, 0], sizes = [1, 16], strides = [1, 1]} : vector<16x16xf32> to vector<1x16xf32>
    %299 = vector.extract_strided_slice %297 {offsets = [8, 0], sizes = [1, 16], strides = [1, 1]} : vector<16x16xf32> to vector<1x16xf32>
    %300 = tpu.concatenate %298, %299 in 0 : vector<1x16xf32>, vector<1x16xf32> -> vector<2x16xf32>
    %301 = arith.addf %276, %300 : vector<2x16xf32>
    %302 = arith.truncf %297 : vector<16x16xf32> to vector<16x16xbf16>
    %cst_165 = arith.constant dense<0.000000e+00> : vector<16x8xf32>
    %303 = tpu.matmul %302, %283, %cst_165 {dimension_numbers = #tpu.dot_dimension_numbers<[1], [0], [0], [1], [0, 0, 1, 1], [], []>} : vector<16x16xbf16>, vector<16x8xbf16>, vector<16x8xf32> -> vector<16x8xf32>
    %304 = arith.truncf %303 : vector<16x8xf32> to vector<16x8xbf16>
    %c0_166 = arith.constant 0 : index
    %c16_167 = arith.constant 16 : index
    %305 = vector.load %arg23[%c0_166, %c16_167] : memref<16x32xbf16, #tpu.memory_space<vmem>>, vector<16x8xbf16>
    tpu.vector_store %arg23[%c0_166, %c16_167], %304 {strides = array<i32>} : memref<16x32xbf16, #tpu.memory_space<vmem>>, vector<16x8xbf16>,
    %c0_168 = arith.constant 0 : index
    %c24_169 = arith.constant 24 : index
    %306 = vector.load %arg22[%c0_168, %c24_169] : memref<16x128xbf16, #tpu.memory_space<vmem>>, vector<16x8xbf16>
    %c0_170 = arith.constant 0 : index
    %c56_171 = arith.constant 56 : index
    %307 = vector.load %arg22[%c0_170, %c56_171] : memref<16x128xbf16, #tpu.memory_space<vmem>>, vector<16x8xbf16>
    %c0_172 = arith.constant 0 : index
    %c88_173 = arith.constant 88 : index
    %308 = vector.load %arg22[%c0_172, %c88_173] : memref<16x128xbf16, #tpu.memory_space<vmem>>, vector<16x8xbf16>
    %cst_174 = arith.constant dense<0.000000e+00> : vector<16x16xf32>
    %309 = tpu.matmul %306, %307, %cst_174 {dimension_numbers = #tpu.dot_dimension_numbers<[1], [1], [0], [0], [0, 0, 1, 0], [], []>} : vector<16x8xbf16>, vector<16x8xbf16>, vector<16x16xf32> -> vector<16x16xf32>
    %cst_175 = arith.constant 0.353553385 : f32
    %310 = vector.broadcast %cst_175 : f32 to vector<16x16xf32>
    %311 = arith.mulf %309, %310 : vector<16x16xf32>
    %312 = arith.addf %311, %1 : vector<16x16xf32>
    %cst_176 = arith.constant dense<0xFF800000> : vector<16xf32>
    %313 = vector.multi_reduction <maximumf>, %312, %cst_176 [1] : vector<16x16xf32> to vector<16xf32>
    %314 = vector.shape_cast %313 : vector<16xf32> to vector<16x1xf32>
    %315 = vector.broadcast %314 : vector<16x1xf32> to vector<16x16xf32>
    %316 = arith.subf %312, %315 : vector<16x16xf32>
    %317 = math.exp %316 : vector<16x16xf32>
    %cst_177 = arith.constant dense<0.000000e+00> : vector<16xf32>
    %318 = vector.multi_reduction <add>, %317, %cst_177 [1] : vector<16x16xf32> to vector<16xf32>
    %319 = vector.shape_cast %318 : vector<16xf32> to vector<16x1xf32>
    %320 = tpu.reciprocal %319 {approx = true} : vector<16x1xf32> -> vector<16x1xf32>
    %321 = vector.broadcast %320 : vector<16x1xf32> to vector<16x16xf32>
    %322 = arith.mulf %317, %321 : vector<16x16xf32>
    %323 = vector.extract_strided_slice %322 {offsets = [0, 0], sizes = [1, 16], strides = [1, 1]} : vector<16x16xf32> to vector<1x16xf32>
    %324 = vector.extract_strided_slice %322 {offsets = [8, 0], sizes = [1, 16], strides = [1, 1]} : vector<16x16xf32> to vector<1x16xf32>
    %325 = tpu.concatenate %323, %324 in 0 : vector<1x16xf32>, vector<1x16xf32> -> vector<2x16xf32>
    %326 = arith.addf %301, %325 : vector<2x16xf32>
    %327 = arith.truncf %322 : vector<16x16xf32> to vector<16x16xbf16>
    %cst_178 = arith.constant dense<0.000000e+00> : vector<16x8xf32>
    %328 = tpu.matmul %327, %308, %cst_178 {dimension_numbers = #tpu.dot_dimension_numbers<[1], [0], [0], [1], [0, 0, 1, 1], [], []>} : vector<16x16xbf16>, vector<16x8xbf16>, vector<16x8xf32> -> vector<16x8xf32>
    %329 = arith.truncf %328 : vector<16x8xf32> to vector<16x8xbf16>
    %c0_179 = arith.constant 0 : index
    %c24_180 = arith.constant 24 : index
    %330 = vector.load %arg23[%c0_179, %c24_180] : memref<16x32xbf16, #tpu.memory_space<vmem>>, vector<16x8xbf16>
    tpu.vector_store %arg23[%c0_179, %c24_180], %329 {strides = array<i32>} : memref<16x32xbf16, #tpu.memory_space<vmem>>, vector<16x8xbf16>,
    %c0_181 = arith.constant 0 : index
    %c0_182 = arith.constant 0 : index
    %331 = vector.load %arg23[%c0_181, %c0_182] : memref<16x32xbf16, #tpu.memory_space<vmem>>, vector<16x32xbf16>
    %c1_183 = arith.constant 1 : index
    %c0_184 = arith.constant 0 : index
    %c0_185 = arith.constant 0 : index
    %332 = vector.load %arg7[%c1_183, %c0_184, %c0_185] : memref<2x32x32xbf16, #tpu.memory_space<vmem>>, vector<1x32x32xbf16>
    %333 = vector.shape_cast %332 : vector<1x32x32xbf16> to vector<32x32xbf16>
    %cst_186 = arith.constant dense<0.000000e+00> : vector<16x32xf32>
    %334 = tpu.matmul %331, %333, %cst_186 {dimension_numbers = #tpu.dot_dimension_numbers<[1], [0], [0], [1], [0, 0, 1, 1], [], []>} : vector<16x32xbf16>, vector<32x32xbf16>, vector<16x32xf32> -> vector<16x32xf32>
    %c1_187 = arith.constant 1 : index
    %c0_188 = arith.constant 0 : index
    %c0_189 = arith.constant 0 : index
    %335 = vector.load %arg8[%c1_187, %c0_188, %c0_189] : memref<2x1x32xf32, #tpu.memory_space<vmem>>, vector<1x1x32xf32>
    %336 = vector.shape_cast %335 : vector<1x1x32xf32> to vector<1x32xf32>
    %337 = vector.broadcast %336 : vector<1x32xf32> to vector<16x32xf32>
    %338 = arith.addf %334, %337 : vector<16x32xf32>
    %339 = arith.addf %219, %338 : vector<16x32xf32>
    %c1_190 = arith.constant 1 : index
    %c0_191 = arith.constant 0 : index
    %c0_192 = arith.constant 0 : index
    %340 = vector.load %arg9[%c1_190, %c0_191, %c0_192] : memref<2x1x32xf32, #tpu.memory_space<vmem>>, vector<1x1x32xf32>
    %341 = vector.shape_cast %340 : vector<1x1x32xf32> to vector<1x32xf32>
    %c1_193 = arith.constant 1 : index
    %c0_194 = arith.constant 0 : index
    %c0_195 = arith.constant 0 : index
    %342 = vector.load %arg10[%c1_193, %c0_194, %c0_195] : memref<2x1x32xf32, #tpu.memory_space<vmem>>, vector<1x1x32xf32>
    %343 = vector.shape_cast %342 : vector<1x1x32xf32> to vector<1x32xf32>
    %cst_196 = arith.constant dense<0.000000e+00> : vector<16xf32>
    %344 = vector.multi_reduction <add>, %339, %cst_196 [1] : vector<16x32xf32> to vector<16xf32>
    %345 = vector.shape_cast %344 : vector<16xf32> to vector<16x1xf32>
    %cst_197 = arith.constant 3.200000e+01 : f32
    %346 = vector.broadcast %cst_197 : f32 to vector<16x1xf32>
    %347 = arith.divf %345, %346 : vector<16x1xf32>
    %348 = vector.broadcast %347 : vector<16x1xf32> to vector<16x32xf32>
    %349 = arith.subf %339, %348 : vector<16x32xf32>
    %350 = arith.mulf %349, %349 : vector<16x32xf32>
    %cst_198 = arith.constant dense<0.000000e+00> : vector<16xf32>
    %351 = vector.multi_reduction <add>, %350, %cst_198 [1] : vector<16x32xf32> to vector<16xf32>
    %352 = vector.shape_cast %351 : vector<16xf32> to vector<16x1xf32>
    %cst_199 = arith.constant 3.200000e+01 : f32
    %353 = vector.broadcast %cst_199 : f32 to vector<16x1xf32>
    %354 = arith.divf %352, %353 : vector<16x1xf32>
    %355 = vector.broadcast %347 : vector<16x1xf32> to vector<16x32xf32>
    %356 = arith.subf %339, %355 : vector<16x32xf32>
    %cst_200 = arith.constant 9.99999996E-13 : f32
    %357 = vector.broadcast %cst_200 : f32 to vector<16x1xf32>
    %358 = arith.addf %354, %357 : vector<16x1xf32>
    %359 = math.rsqrt %358 : vector<16x1xf32>
    %360 = vector.broadcast %359 : vector<16x1xf32> to vector<16x32xf32>
    %361 = arith.mulf %356, %360 : vector<16x32xf32>
    %362 = vector.broadcast %341 : vector<1x32xf32> to vector<16x32xf32>
    %363 = arith.mulf %361, %362 : vector<16x32xf32>
    %364 = vector.broadcast %343 : vector<1x32xf32> to vector<16x32xf32>
    %365 = arith.addf %363, %364 : vector<16x32xf32>
    %366 = arith.truncf %365 : vector<16x32xf32> to vector<16x32xbf16>
    %c1_201 = arith.constant 1 : index
    %c0_202 = arith.constant 0 : index
    %c0_203 = arith.constant 0 : index
    %367 = vector.load %arg11[%c1_201, %c0_202, %c0_203] : memref<2x32x128xbf16, #tpu.memory_space<vmem>>, vector<1x32x128xbf16>
    %368 = vector.shape_cast %367 : vector<1x32x128xbf16> to vector<32x128xbf16>
    %cst_204 = arith.constant dense<0.000000e+00> : vector<16x128xf32>
    %369 = tpu.matmul %366, %368, %cst_204 {dimension_numbers = #tpu.dot_dimension_numbers<[1], [0], [0], [1], [0, 0, 1, 1], [], []>} : vector<16x32xbf16>, vector<32x128xbf16>, vector<16x128xf32> -> vector<16x128xf32>
    %c1_205 = arith.constant 1 : index
    %c0_206 = arith.constant 0 : index
    %c0_207 = arith.constant 0 : index
    %370 = vector.load %arg12[%c1_205, %c0_206, %c0_207] : memref<2x1x128xf32, #tpu.memory_space<vmem>>, vector<1x1x128xf32>
    %371 = vector.shape_cast %370 : vector<1x1x128xf32> to vector<1x128xf32>
    %372 = vector.broadcast %371 : vector<1x128xf32> to vector<16x128xf32>
    %373 = arith.addf %369, %372 : vector<16x128xf32>
    %cst_208 = arith.constant 5.000000e-01 : f32
    %374 = vector.broadcast %cst_208 : f32 to vector<16x128xf32>
    %375 = arith.mulf %374, %373 : vector<16x128xf32>
    %cst_209 = arith.constant 4.471500e-02 : f32
    %376 = vector.broadcast %cst_209 : f32 to vector<16x128xf32>
    %377 = arith.mulf %376, %373 : vector<16x128xf32>
    %378 = arith.mulf %377, %373 : vector<16x128xf32>
    %379 = arith.mulf %378, %373 : vector<16x128xf32>
    %380 = arith.addf %373, %379 : vector<16x128xf32>
    %cst_210 = arith.constant 0.797884583 : f32
    %381 = vector.broadcast %cst_210 : f32 to vector<16x128xf32>
    %382 = arith.mulf %381, %380 : vector<16x128xf32>
    %383 = math.tanh %382 : vector<16x128xf32>
    %cst_211 = arith.constant 1.000000e+00 : f32
    %384 = vector.broadcast %cst_211 : f32 to vector<16x128xf32>
    %385 = arith.addf %384, %383 : vector<16x128xf32>
    %386 = arith.mulf %375, %385 : vector<16x128xf32>
    %387 = arith.truncf %386 : vector<16x128xf32> to vector<16x128xbf16>
    %c1_212 = arith.constant 1 : index
    %c0_213 = arith.constant 0 : index
    %c0_214 = arith.constant 0 : index
    %388 = vector.load %arg13[%c1_212, %c0_213, %c0_214] : memref<2x128x32xbf16, #tpu.memory_space<vmem>>, vector<1x128x32xbf16>
    %389 = vector.shape_cast %388 : vector<1x128x32xbf16> to vector<128x32xbf16>
    %cst_215 = arith.constant dense<0.000000e+00> : vector<16x32xf32>
    %390 = tpu.matmul %387, %389, %cst_215 {dimension_numbers = #tpu.dot_dimension_numbers<[1], [0], [0], [1], [0, 0, 1, 1], [], []>} : vector<16x128xbf16>, vector<128x32xbf16>, vector<16x32xf32> -> vector<16x32xf32>
    %c1_216 = arith.constant 1 : index
    %c0_217 = arith.constant 0 : index
    %c0_218 = arith.constant 0 : index
    %391 = vector.load %arg14[%c1_216, %c0_217, %c0_218] : memref<2x1x32xf32, #tpu.memory_space<vmem>>, vector<1x1x32xf32>
    %392 = vector.shape_cast %391 : vector<1x1x32xf32> to vector<1x32xf32>
    %393 = vector.broadcast %392 : vector<1x32xf32> to vector<16x32xf32>
    %394 = arith.addf %390, %393 : vector<16x32xf32>
    %395 = arith.addf %365, %394 : vector<16x32xf32>
    %c1_219 = arith.constant 1 : index
    %c0_220 = arith.constant 0 : index
    %c0_221 = arith.constant 0 : index
    %396 = vector.load %arg15[%c1_219, %c0_220, %c0_221] : memref<2x1x32xf32, #tpu.memory_space<vmem>>, vector<1x1x32xf32>
    %397 = vector.shape_cast %396 : vector<1x1x32xf32> to vector<1x32xf32>
    %c1_222 = arith.constant 1 : index
    %c0_223 = arith.constant 0 : index
    %c0_224 = arith.constant 0 : index
    %398 = vector.load %arg16[%c1_222, %c0_223, %c0_224] : memref<2x1x32xf32, #tpu.memory_space<vmem>>, vector<1x1x32xf32>
    %399 = vector.shape_cast %398 : vector<1x1x32xf32> to vector<1x32xf32>
    %cst_225 = arith.constant dense<0.000000e+00> : vector<16xf32>
    %400 = vector.multi_reduction <add>, %395, %cst_225 [1] : vector<16x32xf32> to vector<16xf32>
    %401 = vector.shape_cast %400 : vector<16xf32> to vector<16x1xf32>
    %cst_226 = arith.constant 3.200000e+01 : f32
    %402 = vector.broadcast %cst_226 : f32 to vector<16x1xf32>
    %403 = arith.divf %401, %402 : vector<16x1xf32>
    %404 = vector.broadcast %403 : vector<16x1xf32> to vector<16x32xf32>
    %405 = arith.subf %395, %404 : vector<16x32xf32>
    %406 = arith.mulf %405, %405 : vector<16x32xf32>
    %cst_227 = arith.constant dense<0.000000e+00> : vector<16xf32>
    %407 = vector.multi_reduction <add>, %406, %cst_227 [1] : vector<16x32xf32> to vector<16xf32>
    %408 = vector.shape_cast %407 : vector<16xf32> to vector<16x1xf32>
    %cst_228 = arith.constant 3.200000e+01 : f32
    %409 = vector.broadcast %cst_228 : f32 to vector<16x1xf32>
    %410 = arith.divf %408, %409 : vector<16x1xf32>
    %411 = vector.broadcast %403 : vector<16x1xf32> to vector<16x32xf32>
    %412 = arith.subf %395, %411 : vector<16x32xf32>
    %cst_229 = arith.constant 9.99999996E-13 : f32
    %413 = vector.broadcast %cst_229 : f32 to vector<16x1xf32>
    %414 = arith.addf %410, %413 : vector<16x1xf32>
    %415 = math.rsqrt %414 : vector<16x1xf32>
    %416 = vector.broadcast %415 : vector<16x1xf32> to vector<16x32xf32>
    %417 = arith.mulf %412, %416 : vector<16x32xf32>
    %418 = vector.broadcast %397 : vector<1x32xf32> to vector<16x32xf32>
    %419 = arith.mulf %417, %418 : vector<16x32xf32>
    %420 = vector.broadcast %399 : vector<1x32xf32> to vector<16x32xf32>
    %421 = arith.addf %419, %420 : vector<16x32xf32>
    %422 = vector.broadcast %0 : vector<16x1xf32> to vector<16x32xf32>
    %423 = arith.mulf %421, %422 : vector<16x32xf32>
    %c0_230 = arith.constant 0 : index
    %c0_231 = arith.constant 0 : index
    %424 = vector.load %arg21[%c0_230, %c0_231] : memref<16x32xf32, #tpu.memory_space<vmem>>, vector<16x32xf32>
    tpu.vector_store %arg21[%c0_230, %c0_231], %423 {strides = array<i32>} : memref<16x32xf32, #tpu.memory_space<vmem>>, vector<16x32xf32>,
    %cst_232 = arith.constant 2.500000e-01 : f32
    %425 = vector.broadcast %cst_232 : f32 to vector<2x16xf32>
    %426 = arith.mulf %326, %425 : vector<2x16xf32>
    %cst_233 = arith.constant 0.000000e+00 : f32
    %427 = vector.broadcast %cst_233 : f32 to vector<2x112xf32>
    %428 = tpu.concatenate %426, %427 in 1 : vector<2x16xf32>, vector<2x112xf32> -> vector<2x128xf32>
    %c0_234 = arith.constant 0 : index
    %c0_235 = arith.constant 0 : index
    %429 = vector.load %arg20[%c0_234, %c0_235] : memref<2x128xf32, #tpu.memory_space<vmem>>, vector<2x128xf32>
    tpu.vector_store %arg20[%c0_234, %c0_235], %428 {strides = array<i32>} : memref<2x128xf32, #tpu.memory_space<vmem>>, vector<2x128xf32>,
    %c0_236 = arith.constant 0 : index
    %c0_237 = arith.constant 0 : index
    %430 = vector.load %arg21[%c0_236, %c0_237] : memref<16x32xf32, #tpu.memory_space<vmem>>, vector<16x32xf32>
    %431 = arith.truncf %430 : vector<16x32xf32> to vector<16x32xbf16>
    %c0_238 = arith.constant 0 : index
    %c0_239 = arith.constant 0 : index
    %432 = vector.load %arg17[%c0_238, %c0_239] : memref<32x128xbf16, #tpu.memory_space<vmem>>, vector<32x128xbf16>
    %cst_240 = arith.constant dense<0.000000e+00> : vector<16x128xf32>
    %433 = tpu.matmul %431, %432, %cst_240 {dimension_numbers = #tpu.dot_dimension_numbers<[1], [0], [0], [1], [0, 0, 1, 1], [], []>} : vector<16x32xbf16>, vector<32x128xbf16>, vector<16x128xf32> -> vector<16x128xf32>
    %c0_241 = arith.constant 0 : index
    %c0_242 = arith.constant 0 : index
    %434 = vector.load %arg18[%c0_241, %c0_242] : memref<1x128xf32, #tpu.memory_space<vmem>>, vector<1x128xf32>
    %435 = vector.broadcast %434 : vector<1x128xf32> to vector<16x128xf32>
    %436 = arith.addf %433, %435 : vector<16x128xf32>
    %c0_243 = arith.constant 0 : index
    %c0_244 = arith.constant 0 : index
    %437 = vector.load %arg19[%c0_243, %c0_244] : memref<16x128xf32, #tpu.memory_space<vmem>>, vector<16x128xf32>
    tpu.vector_store %arg19[%c0_243, %c0_244], %436 {strides = array<i32>} : memref<16x128xf32, #tpu.memory_space<vmem>>, vector<16x128xf32>,
    return
  }
}

</mosaic_0001>

<llo_original>
// kernel: flaubert_pallas_forward.1
$region0: #{flaubert_pallas_forward.1}
  #allocation0 [shape = 'u32[]', space=smem, size = 0x4, offset = 0x4, fixed_abs, tag = 'smem constant byte address 0x4 - core index']
  #allocation1 [shape = 'u32[144,128]{1,0:T(1,128)}', space=vmem, size = 0x12000, scoped, tag = 'internal scratch']
  #allocation2 [shape = 'f32[16,32]{1,0:T(8,128)}', space=vmem, size = 0x2000, scoped, tag = 'scratch operand']
  #allocation3 [shape = 'bf16[16,128]{1,0:T(16,128)(2,1)}', space=vmem, size = 0x1000, scoped, tag = 'scratch operand']
  #allocation4 [shape = 'bf16[16,32]{1,0:T(16,128)(2,1)}', space=vmem, size = 0x1000, scoped, tag = 'scratch operand']
  %s0 = inlined_call_operand.vmem [shape: f32[16,32], index: 0, kind: input, shape index: {}]
  %s1 = inlined_call_operand.vmem [shape: f32[16,1], index: 1, kind: input, shape index: {}]
  %s2 = inlined_call_operand.vmem [shape: f32[16,16], index: 2, kind: input, shape index: {}]
  %s3 = inlined_call_operand.vmem [shape: f32[1,32], index: 3, kind: input, shape index: {}]
  %s4 = inlined_call_operand.vmem [shape: f32[1,32], index: 4, kind: input, shape index: {}]
  %s5 = inlined_call_operand.vmem [shape: bf16[2,32,128], index: 5, kind: input, shape index: {}]
  %s6 = inlined_call_operand.vmem [shape: f32[2,1,128], index: 6, kind: input, shape index: {}]
  %s7 = inlined_call_operand.vmem [shape: bf16[2,32,32], index: 7, kind: input, shape index: {}]
  %s8 = inlined_call_operand.vmem [shape: f32[2,1,32], index: 8, kind: input, shape index: {}]
  %s9 = inlined_call_operand.vmem [shape: f32[2,1,32], index: 9, kind: input, shape index: {}]
  %s10 = inlined_call_operand.vmem [shape: f32[2,1,32], index: 10, kind: input, shape index: {}]
  %s11 = inlined_call_operand.vmem [shape: bf16[2,32,128], index: 11, kind: input, shape index: {}]
  %s12 = inlined_call_operand.vmem [shape: f32[2,1,128], index: 12, kind: input, shape index: {}]
  %s13 = inlined_call_operand.vmem [shape: bf16[2,128,32], index: 13, kind: input, shape index: {}]
  %s14 = inlined_call_operand.vmem [shape: f32[2,1,32], index: 14, kind: input, shape index: {}]
  %s15 = inlined_call_operand.vmem [shape: f32[2,1,32], index: 15, kind: input, shape index: {}]
  %s16 = inlined_call_operand.vmem [shape: f32[2,1,32], index: 16, kind: input, shape index: {}]
  %s17 = inlined_call_operand.vmem [shape: bf16[32,128], index: 17, kind: input, shape index: {}]
  %s18 = inlined_call_operand.vmem [shape: f32[1,128], index: 18, kind: input, shape index: {}]
  %s19 = inlined_call_operand.vmem [shape: f32[16,128], index: 19, kind: output, shape index: {0}]
  %s20 = inlined_call_operand.hbm [shape: f32[2,128], index: 20, kind: output, shape index: {1}]
  %21 = xla_tuple %s19, %s20
  %s22 = sld [smem:[#allocation0]]
  $region94: #{flaubert_pallas_forward.1} parent=0
    _
  %s24 = ssub.s32 1, %s22
  %s25 = scalar_select 0, %s24, %s22
  $region1: #{flaubert_pallas_forward.1} parent=0
    #allocation5 [shape = 'u8[1024]{0}', space=vmem, size = 0x400, scoped, tag = 'output window, operand 1, single buffered']
    #allocation6 [shape = 's32[1]{0}', space=sflag, size = 0x4, scoped, tag = 'scoped memory for flaubert_pallas_forward.1']
    %26 = vsyncpa [#allocation6], 0
    // Predicated region
    $region2: #{flaubert_pallas_forward.1} parent=1 // pred_check
      _
    $region3: #{flaubert_pallas_forward.1} parent=1 // pred_check_branch
      %28 = sbr.rel (0) target = $region5
    $region4: #{flaubert_pallas_forward.1} parent=1 // pred_region
      _
    $region5: #{flaubert_pallas_forward.1} parent=1 // pred_fallthru
      _
    // Predicated region
    $region6: #{flaubert_pallas_forward.1} parent=1 // pred_check
      _
    $region7: #{flaubert_pallas_forward.1} parent=1 // pred_check_branch
      %30 = sbr.rel (0) target = $region9
    $region8: #{flaubert_pallas_forward.1} parent=1 // pred_region
      _
    $region9: #{flaubert_pallas_forward.1} parent=1 // pred_fallthru
      _
    // Predicated region
    $region10: #{flaubert_pallas_forward.1} parent=1 // pred_check
      _
    $region11: #{flaubert_pallas_forward.1} parent=1 // pred_check_branch
      %32 = sbr.rel (0) target = $region13
    $region12: #{flaubert_pallas_forward.1} parent=1 // pred_region
      _
    $region13: #{flaubert_pallas_forward.1} parent=1 // pred_fallthru
      _
    // Predicated region
    $region14: #{flaubert_pallas_forward.1} parent=1 // pred_check
      _
    $region15: #{flaubert_pallas_forward.1} parent=1 // pred_check_branch
      %34 = sbr.rel (0) target = $region17
    $region16: #{flaubert_pallas_forward.1} parent=1 // pred_region
      _
    $region17: #{flaubert_pallas_forward.1} parent=1 // pred_fallthru
      _
    // Predicated region
    $region18: #{flaubert_pallas_forward.1} parent=1 // pred_check
      _
    $region19: #{flaubert_pallas_forward.1} parent=1 // pred_check_branch
      %36 = sbr.rel (0) target = $region21
    $region20: #{flaubert_pallas_forward.1} parent=1 // pred_region
      _
    $region21: #{flaubert_pallas_forward.1} parent=1 // pred_fallthru
      _
    // Predicated region
    $region22: #{flaubert_pallas_forward.1} parent=1 // pred_check
      _
    $region23: #{flaubert_pallas_forward.1} parent=1 // pred_check_branch
      %38 = sbr.rel (0) target = $region25
    $region24: #{flaubert_pallas_forward.1} parent=1 // pred_region
      _
    $region25: #{flaubert_pallas_forward.1} parent=1 // pred_fallthru
      _
    // Predicated region
    $region26: #{flaubert_pallas_forward.1} parent=1 // pred_check
      _
    $region27: #{flaubert_pallas_forward.1} parent=1 // pred_check_branch
      %40 = sbr.rel (0) target = $region29
    $region28: #{flaubert_pallas_forward.1} parent=1 // pred_region
      _
    $region29: #{flaubert_pallas_forward.1} parent=1 // pred_fallthru
      _
    // Predicated region
    $region30: #{flaubert_pallas_forward.1} parent=1 // pred_check
      _
    $region31: #{flaubert_pallas_forward.1} parent=1 // pred_check_branch
      %42 = sbr.rel (0) target = $region33
    $region32: #{flaubert_pallas_forward.1} parent=1 // pred_region
      _
    $region33: #{flaubert_pallas_forward.1} parent=1 // pred_fallthru
      _
    // Predicated region
    $region34: #{flaubert_pallas_forward.1} parent=1 // pred_check
      _
    $region35: #{flaubert_pallas_forward.1} parent=1 // pred_check_branch
      %44 = sbr.rel (0) target = $region37
    $region36: #{flaubert_pallas_forward.1} parent=1 // pred_region
      _
    $region37: #{flaubert_pallas_forward.1} parent=1 // pred_fallthru
      _
    // Predicated region
    $region38: #{flaubert_pallas_forward.1} parent=1 // pred_check
      _
    $region39: #{flaubert_pallas_forward.1} parent=1 // pred_check_branch
      %46 = sbr.rel (0) target = $region41
    $region40: #{flaubert_pallas_forward.1} parent=1 // pred_region
      _
    $region41: #{flaubert_pallas_forward.1} parent=1 // pred_fallthru
      _
    // Predicated region
    $region42: #{flaubert_pallas_forward.1} parent=1 // pred_check
      _
    $region43: #{flaubert_pallas_forward.1} parent=1 // pred_check_branch
      %48 = sbr.rel (0) target = $region45
    $region44: #{flaubert_pallas_forward.1} parent=1 // pred_region
      _
    $region45: #{flaubert_pallas_forward.1} parent=1 // pred_fallthru
      _
    // Predicated region
    $region46: #{flaubert_pallas_forward.1} parent=1 // pred_check
      _
    $region47: #{flaubert_pallas_forward.1} parent=1 // pred_check_branch
      %50 = sbr.rel (0) target = $region49
    $region48: #{flaubert_pallas_forward.1} parent=1 // pred_region
      _
    $region49: #{flaubert_pallas_forward.1} parent=1 // pred_fallthru
      _
    // Predicated region
    $region50: #{flaubert_pallas_forward.1} parent=1 // pred_check
      _
    $region51: #{flaubert_pallas_forward.1} parent=1 // pred_check_branch
      %52 = sbr.rel (0) target = $region53
    $region52: #{flaubert_pallas_forward.1} parent=1 // pred_region
      _
    $region53: #{flaubert_pallas_forward.1} parent=1 // pred_fallthru
      _
    // Predicated region
    $region54: #{flaubert_pallas_forward.1} parent=1 // pred_check
      _
    $region55: #{flaubert_pallas_forward.1} parent=1 // pred_check_branch
      %54 = sbr.rel (0) target = $region57
    $region56: #{flaubert_pallas_forward.1} parent=1 // pred_region
      _
    $region57: #{flaubert_pallas_forward.1} parent=1 // pred_fallthru
      _
    // Predicated region
    $region58: #{flaubert_pallas_forward.1} parent=1 // pred_check
      _
    $region59: #{flaubert_pallas_forward.1} parent=1 // pred_check_branch
      %56 = sbr.rel (0) target = $region61
    $region60: #{flaubert_pallas_forward.1} parent=1 // pred_region
      _
    $region61: #{flaubert_pallas_forward.1} parent=1 // pred_fallthru
      _
    // Predicated region
    $region62: #{flaubert_pallas_forward.1} parent=1 // pred_check
      _
    $region63: #{flaubert_pallas_forward.1} parent=1 // pred_check_branch
      %58 = sbr.rel (0) target = $region65
    $region64: #{flaubert_pallas_forward.1} parent=1 // pred_region
      _
    $region65: #{flaubert_pallas_forward.1} parent=1 // pred_fallthru
      _
    // Predicated region
    $region66: #{flaubert_pallas_forward.1} parent=1 // pred_check
      _
    $region67: #{flaubert_pallas_forward.1} parent=1 // pred_check_branch
      %60 = sbr.rel (0) target = $region69
    $region68: #{flaubert_pallas_forward.1} parent=1 // pred_region
      _
    $region69: #{flaubert_pallas_forward.1} parent=1 // pred_fallthru
      _
    // Predicated region
    $region70: #{flaubert_pallas_forward.1} parent=1 // pred_check
      _
    $region71: #{flaubert_pallas_forward.1} parent=1 // pred_check_branch
      %62 = sbr.rel (0) target = $region73
    $region72: #{flaubert_pallas_forward.1} parent=1 // pred_region
      _
    $region73: #{flaubert_pallas_forward.1} parent=1 // pred_fallthru
      _
    // Predicated region
    $region74: #{flaubert_pallas_forward.1} parent=1 // pred_check
      _
    $region75: #{flaubert_pallas_forward.1} parent=1 // pred_check_branch
      %64 = sbr.rel (0) target = $region77
    $region76: #{flaubert_pallas_forward.1} parent=1 // pred_region
      _
    $region77: #{flaubert_pallas_forward.1} parent=1 // pred_fallthru
      _
    %v66 = vld [vmem:[%s1] sm:$0xff]
    %v67 = vld [vmem:[%s1 + $0x8] sm:$0xff]
    %v68 = vld [vmem:[%s2] sm:$0xff]
    %v69 = vld [vmem:[%s2 + $0x8] sm:$0xff]
    %v70 = vld [vmem:[%s0] sm:$0xff]
    %v71 = vld [vmem:[%s0 + $0x8] sm:$0xff]
    %v72 = vld [vmem:[%s3] sm:$0x1]
    %v73 = vld [vmem:[%s4] sm:$0x1]
    %vm74 = vcmask 261120
    %v75 = vsel %vm74, %v70, 0.0
    %76 = vadd.xlane.f32.xlu0 %v75
    %v77 = vpop.xlane.xlu0 %76
    %v78 = vsel %vm74, %v71, 0.0
    %79 = vadd.xlane.f32.xlu0 %v78
    %v80 = vpop.xlane.xlu0 %79
    %v81 = vrcp.pop 32.0
    %v82 = vmul.f32 %v77, %v81
    %v83 = vmul.f32 %v80, %v81
    %v84 = vsub.f32 %v70, %v82
    %v85 = vsub.f32 %v71, %v83
    %v86 = vmul.f32 %v84, %v84
    %v87 = vmul.f32 %v85, %v85
    %v88 = vsel %vm74, %v86, 0.0
    %89 = vadd.xlane.f32.xlu0 %v88
    %v90 = vpop.xlane.xlu0 %89
    %v91 = vsel %vm74, %v87, 0.0
    %92 = vadd.xlane.f32.xlu0 %v91
    %v93 = vpop.xlane.xlu0 %92
    %v94 = vmul.f32 %v90, %v81
    %v95 = vmul.f32 %v93, %v81
    %v96 = vadd.f32 %v94, 1e-12
    %v97 = vadd.f32 %v95, 1e-12
    %v98 = vrsqrt.pop %v96
    %v99 = vrsqrt.pop %v97
    %v100 = vmul.f32 %v84, %v98
    %v101 = vmul.f32 %v85, %v99
    %v103 = vlaneseq
    %v104 = vshrl.u32 %v103, 7
    %v105 = vsub.s32 0, %v104
    %v106 = vrot.slane %v72, %v105
    %v108 = vmul.f32 %v100, %v106
    %v109 = vmul.f32 %v101, %v106
    %v111 = vlaneseq
    %v112 = vshrl.u32 %v111, 7
    %v113 = vsub.s32 0, %v112
    %v114 = vrot.slane %v73, %v113
    %v116 = vadd.f32 %v108, %v114
    %v117 = vadd.f32 %v109, %v114
    %119 = vset.pattern.permute.xlu0 0
    %120 = vperm.xlu0 %119, %v66
    %v121 = vpop.permute.xlu0 %120
    %124 = vset.pattern.permute.xlu0 0
    %125 = vperm.xlu0 %124, %v67
    %v126 = vpop.permute.xlu0 %125
    %v128 = vmul.f32 %v116, %v121
    %v129 = vmul.f32 %v117, %v126
    %130 = vst.msk [vmem:[#allocation2] sm:$0xff] %vm74, %v128
    %131 = vst.msk [vmem:[#allocation2 + $0x8] sm:$0xff] %vm74, %v129
    %v132 = vld [vmem:[#allocation2] sm:$0xff]
    %v133 = vld [vmem:[#allocation2 + $0x8] sm:$0xff]
    %v134 = vpack.c.bf16 %v133, %v132
    %v135 = vld [vmem:[%s5] sm:$0xf]
    %v136 = vld [vmem:[%s5 + $0x4] sm:$0xf]
    %v137 = vld [vmem:[%s5 + $0x8] sm:$0xf]
    %v138 = vld [vmem:[%s5 + $0xc] sm:$0xf]
    %v139 = vld [vmem:[%s6] sm:$0x1]
    %v141 = vlaneseq
    %v142 = vshrl.u32 %v141, 7
    %v143 = vsub.s32 0, %v142
    %v144 = vrot.slane %v139, %v143
    %v150 = vunpack.c.l.b16 %v135
    %v151 = vunpack.c.l.b16 %v136
    %v152 = vunpack.c.l.b16 %v137
    %v153 = vunpack.c.l.b16 %v138
    %v154 = vpack.c.b16 %v151, %v150
    %v155 = vpack.c.b16 %v153, %v152
    %v159 = vsel %vm74, %v134, 0
    %161 = vmatprep.subr.bf16.mxu0 0
    %162 = vmatpush1.bf16.msra.mxu0 %v154
    %163 = vmatprep.subr.bf16.mxu0 0
    %164 = vmatpush1.bf16.msra.mxu0 %v155
    %165 = vmatprep.subr.bf16.mxu0 0
    %166 = vmatpush1.bf16.msra.mxu0 0
    %167 = vmatprep.subr.bf16.mxu0 0
    %168 = vmatpush1.bf16.msra.mxu0 0
    %169 = vmatprep.subr.bf16.mxu0 0
    %170 = vmatpush1.bf16.msra.mxu0 0
    %171 = vmatprep.subr.bf16.mxu0 0
    %172 = vmatpush1.bf16.msra.mxu0 0
    %173 = vmatprep.subr.bf16.mxu0 0
    %174 = vmatpush1.bf16.msra.mxu0 0
    %175 = vmatprep.subr.bf16.mxu0 0
    %176 = vmatpush1.bf16.msra.mxu0 0
    %177 = vmatprep.subr.bf16.mxu0 0
    %178 = vmatpush1.bf16.msra.mxu0 0
    %179 = vmatprep.subr.bf16.mxu0 0
    %180 = vmatpush1.bf16.msra.mxu0 0
    %181 = vmatprep.subr.bf16.mxu0 0
    %182 = vmatpush1.bf16.msra.mxu0 0
    %183 = vmatprep.subr.bf16.mxu0 0
    %184 = vmatpush1.bf16.msra.mxu0 0
    %185 = vmatprep.subr.bf16.mxu0 0
    %186 = vmatpush1.bf16.msra.mxu0 0
    %187 = vmatprep.subr.bf16.mxu0 0
    %188 = vmatpush1.bf16.msra.mxu0 0
    %189 = vmatprep.subr.bf16.mxu0 0
    %190 = vmatpush1.bf16.msra.mxu0 0
    %191 = vmatprep.subr.bf16.mxu0 0
    %192 = vmatpush1.bf16.msra.mxu0 0
    %193 = vmatprep.mubr.bf16.mxu0 0
    %194 = vmatmul.mubr.bf16.gmra.mrb[0].mxu0 %v159
    %v195 = vpop.f32.mrb[0].mxu0
    %v196 = vadd.f32 %v144, %v195
    %v197 = vpop.f32.mrb[0].mxu0
    %v198 = vpop.f32.mrb[0].mxu0
    %v199 = vadd.f32 %v144, %v198
    %v200 = vpop.f32.mrb[0].mxu0
    %201 = vdwg.mxu0
    %v202 = vpack.c.bf16 %v199, %v196
    %203 = vst [vmem:[#allocation3] sm:$0xff] %v202
    %v204 = vld [vmem:[#allocation3] sm:$0xff]
    %206 = vrot.lane.b32.xlu0 %v204, 96
    %v207 = vpop.permute.xlu0 %206
    %vm208 = vcmask 64512
    %v210 = vsel %vm208, %v204, 0
    %v213 = vsel %vm208, %v207, 0
    %215 = vmatprep.subr.bf16.mxu0 0
    %216 = vmatpush1.bf16.xpose.msra.mxu0 %v213
    %217 = vmatprep.subr.bf16.mxu0 0
    %218 = vmatpush1.bf16.xpose.msra.mxu0 0
    %219 = vmatprep.subr.bf16.mxu0 0
    %220 = vmatpush1.bf16.xpose.msra.mxu0 0
    %221 = vmatprep.subr.bf16.mxu0 0
    %222 = vmatpush1.bf16.xpose.msra.mxu0 0
    %223 = vmatprep.subr.bf16.mxu0 0
    %224 = vmatpush1.bf16.xpose.msra.mxu0 0
    %225 = vmatprep.subr.bf16.mxu0 0
    %226 = vmatpush1.bf16.xpose.msra.mxu0 0
    %227 = vmatprep.subr.bf16.mxu0 0
    %228 = vmatpush1.bf16.xpose.msra.mxu0 0
    %229 = vmatprep.subr.bf16.mxu0 0
    %230 = vmatpush1.bf16.xpose.msra.mxu0 0
    %231 = vmatprep.subr.bf16.mxu0 0
    %232 = vmatpush1.bf16.xpose.msra.mxu0 0
    %233 = vmatprep.subr.bf16.mxu0 0
    %234 = vmatpush1.bf16.xpose.msra.mxu0 0
    %235 = vmatprep.subr.bf16.mxu0 0
    %236 = vmatpush1.bf16.xpose.msra.mxu0 0
    %237 = vmatprep.subr.bf16.mxu0 0
    %238 = vmatpush1.bf16.xpose.msra.mxu0 0
    %239 = vmatprep.subr.bf16.mxu0 0
    %240 = vmatpush1.bf16.xpose.msra.mxu0 0
    %241 = vmatprep.subr.bf16.mxu0 0
    %242 = vmatpush1.bf16.xpose.msra.mxu0 0
    %243 = vmatprep.subr.bf16.mxu0 0
    %244 = vmatpush1.bf16.xpose.msra.mxu0 0
    %245 = vmatprep.subr.bf16.mxu0 0
    %246 = vmatpush1.bf16.xpose.msra.mxu0 0
    %247 = vmatprep.mubr.bf16.mxu0 0
    %248 = vmatmul.mubr.bf16.gmra.mrb[0].mxu0 %v210
    %v249 = vpop.f32.mrb[0].mxu0
    %v250 = vadd.f32 0.0, %v249
    %v251 = vpop.f32.mrb[0].mxu0
    %v252 = vpop.f32.mrb[0].mxu0
    %v253 = vadd.f32 0.0, %v252
    %v254 = vpop.f32.mrb[0].mxu0
    %255 = vdwg.mxu0
    %v256 = vmul.f32 %v250, 0.35355338
    %v257 = vmul.f32 %v253, 0.35355338
    %v258 = vadd.f32 %v256, %v68
    %v259 = vadd.f32 %v257, %v69
    %vm260 = vcmask 130048
    %v261 = vsel %vm260, %v258, -inf
    %262 = vmax.xlane.f32.xlu0 %v261
    %v263 = vpop.xlane.xlu0 %262
    %v264 = vsel %vm260, %v259, -inf
    %265 = vmax.xlane.f32.xlu0 %v264
    %v266 = vpop.xlane.xlu0 %265
    %v267 = vsub.f32 %v258, %v263
    %v268 = vsub.f32 %v259, %v266
    %v269 = vmul.f32 %v267, 1.442695
    %v270 = vpow.pop %v269
    %v271 = vmul.f32 %v268, 1.442695
    %v272 = vpow.pop %v271
    %v273 = vsel %vm260, %v270, 0.0
    %274 = vadd.xlane.f32.xlu0 %v273
    %v275 = vpop.xlane.xlu0 %274
    %v276 = vsel %vm260, %v272, 0.0
    %277 = vadd.xlane.f32.xlu0 %v276
    %v278 = vpop.xlane.xlu0 %277
    %v279 = vrcp.pop %v275
    %v280 = vrcp.pop %v278
    %v281 = vmul.f32 %v270, %v279
    %v282 = vmul.f32 %v272, %v280
    %v283 = vpack.c.bf16 %v282, %v281
    %284 = vrot.lane.b32.xlu0 %v204, 64
    %v285 = vpop.permute.xlu0 %284
    %v288 = vsel %vm260, %v283, 0
    %290 = vmatprep.subr.bf16.mxu0 0
    %291 = vmatpush1.bf16.msra.mxu0 %v285
    %292 = vmatprep.subr.bf16.mxu0 0
    %293 = vmatpush1.bf16.msra.mxu0 0
    %294 = vmatprep.subr.bf16.mxu0 0
    %295 = vmatpush1.bf16.msra.mxu0 0
    %296 = vmatprep.subr.bf16.mxu0 0
    %297 = vmatpush1.bf16.msra.mxu0 0
    %298 = vmatprep.subr.bf16.mxu0 0
    %299 = vmatpush1.bf16.msra.mxu0 0
    %300 = vmatprep.subr.bf16.mxu0 0
    %301 = vmatpush1.bf16.msra.mxu0 0
    %302 = vmatprep.subr.bf16.mxu0 0
    %303 = vmatpush1.bf16.msra.mxu0 0
    %304 = vmatprep.subr.bf16.mxu0 0
    %305 = vmatpush1.bf16.msra.mxu0 0
    %306 = vmatprep.subr.bf16.mxu0 0
    %307 = vmatpush1.bf16.msra.mxu0 0
    %308 = vmatprep.subr.bf16.mxu0 0
    %309 = vmatpush1.bf16.msra.mxu0 0
    %310 = vmatprep.subr.bf16.mxu0 0
    %311 = vmatpush1.bf16.msra.mxu0 0
    %312 = vmatprep.subr.bf16.mxu0 0
    %313 = vmatpush1.bf16.msra.mxu0 0
    %314 = vmatprep.subr.bf16.mxu0 0
    %315 = vmatpush1.bf16.msra.mxu0 0
    %316 = vmatprep.subr.bf16.mxu0 0
    %317 = vmatpush1.bf16.msra.mxu0 0
    %318 = vmatprep.subr.bf16.mxu0 0
    %319 = vmatpush1.bf16.msra.mxu0 0
    %320 = vmatprep.subr.bf16.mxu0 0
    %321 = vmatpush1.bf16.msra.mxu0 0
    %322 = vmatprep.mubr.bf16.mxu0 0
    %323 = vmatmul.mubr.bf16.gmra.mrb[0].mxu0 %v288
    %v324 = vpop.f32.mrb[0].mxu0
    %v325 = vadd.f32 0.0, %v324
    %v326 = vpop.f32.mrb[0].mxu0
    %v327 = vpop.f32.mrb[0].mxu0
    %v328 = vadd.f32 0.0, %v327
    %v329 = vpop.f32.mrb[0].mxu0
    %330 = vdwg.mxu0
    %v331 = vpack.c.bf16 %v328, %v325
    %332 = vst.msk [vmem:[#allocation4] sm:$0xff] %vm208, %v331
    %v333 = vld [vmem:[#allocation3] sm:$0xff]
    %335 = vrot.lane.b32.xlu0 %v333, 120
    %v336 = vpop.permute.xlu0 %335
    %337 = vrot.lane.b32.xlu0 %v333, 88
    %v338 = vpop.permute.xlu0 %337
    %v340 = vsel %vm208, %v336, 0
    %v343 = vsel %vm208, %v338, 0
    %345 = vmatprep.subr.bf16.mxu0 0
    %346 = vmatpush1.bf16.xpose.msra.mxu0 %v343
    %347 = vmatprep.subr.bf16.mxu0 0
    %348 = vmatpush1.bf16.xpose.msra.mxu0 0
    %349 = vmatprep.subr.bf16.mxu0 0
    %350 = vmatpush1.bf16.xpose.msra.mxu0 0
    %351 = vmatprep.subr.bf16.mxu0 0
    %352 = vmatpush1.bf16.xpose.msra.mxu0 0
    %353 = vmatprep.subr.bf16.mxu0 0
    %354 = vmatpush1.bf16.xpose.msra.mxu0 0
    %355 = vmatprep.subr.bf16.mxu0 0
    %356 = vmatpush1.bf16.xpose.msra.mxu0 0
    %357 = vmatprep.subr.bf16.mxu0 0
    %358 = vmatpush1.bf16.xpose.msra.mxu0 0
    %359 = vmatprep.subr.bf16.mxu0 0
    %360 = vmatpush1.bf16.xpose.msra.mxu0 0
    %361 = vmatprep.subr.bf16.mxu0 0
    %362 = vmatpush1.bf16.xpose.msra.mxu0 0
    %363 = vmatprep.subr.bf16.mxu0 0
    %364 = vmatpush1.bf16.xpose.msra.mxu0 0
    %365 = vmatprep.subr.bf16.mxu0 0
    %366 = vmatpush1.bf16.xpose.msra.mxu0 0
    %367 = vmatprep.subr.bf16.mxu0 0
    %368 = vmatpush1.bf16.xpose.msra.mxu0 0
    %369 = vmatprep.subr.bf16.mxu0 0
    %370 = vmatpush1.bf16.xpose.msra.mxu0 0
    %371 = vmatprep.subr.bf16.mxu0 0
    %372 = vmatpush1.bf16.xpose.msra.mxu0 0
    %373 = vmatprep.subr.bf16.mxu0 0
    %374 = vmatpush1.bf16.xpose.msra.mxu0 0
    %375 = vmatprep.subr.bf16.mxu0 0
    %376 = vmatpush1.bf16.xpose.msra.mxu0 0
    %377 = vmatprep.mubr.bf16.mxu0 0
    %378 = vmatmul.mubr.bf16.gmra.mrb[0].mxu0 %v340
    %v379 = vpop.f32.mrb[0].mxu0
    %v380 = vadd.f32 0.0, %v379
    %v381 = vpop.f32.mrb[0].mxu0
    %v382 = vpop.f32.mrb[0].mxu0
    %v383 = vadd.f32 0.0, %v382
    %v384 = vpop.f32.mrb[0].mxu0
    %385 = vdwg.mxu0
    %v386 = vmul.f32 %v380, 0.35355338
    %v387 = vmul.f32 %v383, 0.35355338
    %v388 = vadd.f32 %v386, %v68
    %v389 = vadd.f32 %v387, %v69
    %v390 = vsel %vm260, %v388, -inf
    %391 = vmax.xlane.f32.xlu0 %v390
    %v392 = vpop.xlane.xlu0 %391
    %v393 = vsel %vm260, %v389, -inf
    %394 = vmax.xlane.f32.xlu0 %v393
    %v395 = vpop.xlane.xlu0 %394
    %v396 = vsub.f32 %v388, %v392
    %v397 = vsub.f32 %v389, %v395
    %v398 = vmul.f32 %v396, 1.442695
    %v399 = vpow.pop %v398
    %v400 = vmul.f32 %v397, 1.442695
    %v401 = vpow.pop %v400
    %v402 = vsel %vm260, %v399, 0.0
    %403 = vadd.xlane.f32.xlu0 %v402
    %v404 = vpop.xlane.xlu0 %403
    %v405 = vsel %vm260, %v401, 0.0
    %406 = vadd.xlane.f32.xlu0 %v405
    %v407 = vpop.xlane.xlu0 %406
    %v408 = vrcp.pop %v404
    %v409 = vrcp.pop %v407
    %v410 = vmul.f32 %v399, %v408
    %v411 = vmul.f32 %v401, %v409
    %v412 = vpack.c.bf16 %v411, %v410
    %413 = vrot.lane.b32.xlu0 %v333, 56
    %v414 = vpop.permute.xlu0 %413
    %v417 = vsel %vm260, %v412, 0
    %419 = vmatprep.subr.bf16.mxu0 0
    %420 = vmatpush1.bf16.msra.mxu0 %v414
    %421 = vmatprep.subr.bf16.mxu0 0
    %422 = vmatpush1.bf16.msra.mxu0 0
    %423 = vmatprep.subr.bf16.mxu0 0
    %424 = vmatpush1.bf16.msra.mxu0 0
    %425 = vmatprep.subr.bf16.mxu0 0
    %426 = vmatpush1.bf16.msra.mxu0 0
    %427 = vmatprep.subr.bf16.mxu0 0
    %428 = vmatpush1.bf16.msra.mxu0 0
    %429 = vmatprep.subr.bf16.mxu0 0
    %430 = vmatpush1.bf16.msra.mxu0 0
    %431 = vmatprep.subr.bf16.mxu0 0
    %432 = vmatpush1.bf16.msra.mxu0 0
    %433 = vmatprep.subr.bf16.mxu0 0
    %434 = vmatpush1.bf16.msra.mxu0 0
    %435 = vmatprep.subr.bf16.mxu0 0
    %436 = vmatpush1.bf16.msra.mxu0 0
    %437 = vmatprep.subr.bf16.mxu0 0
    %438 = vmatpush1.bf16.msra.mxu0 0
    %439 = vmatprep.subr.bf16.mxu0 0
    %440 = vmatpush1.bf16.msra.mxu0 0
    %441 = vmatprep.subr.bf16.mxu0 0
    %442 = vmatpush1.bf16.msra.mxu0 0
    %443 = vmatprep.subr.bf16.mxu0 0
    %444 = vmatpush1.bf16.msra.mxu0 0
    %445 = vmatprep.subr.bf16.mxu0 0
    %446 = vmatpush1.bf16.msra.mxu0 0
    %447 = vmatprep.subr.bf16.mxu0 0
    %448 = vmatpush1.bf16.msra.mxu0 0
    %449 = vmatprep.subr.bf16.mxu0 0
    %450 = vmatpush1.bf16.msra.mxu0 0
    %451 = vmatprep.mubr.bf16.mxu0 0
    %452 = vmatmul.mubr.bf16.gmra.mrb[0].mxu0 %v417
    %v453 = vpop.f32.mrb[0].mxu0
    %v454 = vadd.f32 0.0, %v453
    %v455 = vpop.f32.mrb[0].mxu0
    %v456 = vpop.f32.mrb[0].mxu0
    %v457 = vadd.f32 0.0, %v456
    %v458 = vpop.f32.mrb[0].mxu0
    %459 = vdwg.mxu0
    %v460 = vpack.c.bf16 %v457, %v454
    %462 = vrot.lane.b32.xlu0 %v460, 8
    %v463 = vpop.permute.xlu0 %462
    %vm465 = vcmask 130112
    %466 = vst.msk [vmem:[#allocation4] sm:$0xff] %vm465, %v463
    %v467 = vld [vmem:[#allocation3] sm:$0xff]
    %469 = vrot.lane.b32.xlu0 %v467, 112
    %v470 = vpop.permute.xlu0 %469
    %471 = vrot.lane.b32.xlu0 %v467, 80
    %v472 = vpop.permute.xlu0 %471
    %v474 = vsel %vm208, %v470, 0
    %v477 = vsel %vm208, %v472, 0
    %479 = vmatprep.subr.bf16.mxu0 0
    %480 = vmatpush1.bf16.xpose.msra.mxu0 %v477
    %481 = vmatprep.subr.bf16.mxu0 0
    %482 = vmatpush1.bf16.xpose.msra.mxu0 0
    %483 = vmatprep.subr.bf16.mxu0 0
    %484 = vmatpush1.bf16.xpose.msra.mxu0 0
    %485 = vmatprep.subr.bf16.mxu0 0
    %486 = vmatpush1.bf16.xpose.msra.mxu0 0
    %487 = vmatprep.subr.bf16.mxu0 0
    %488 = vmatpush1.bf16.xpose.msra.mxu0 0
    %489 = vmatprep.subr.bf16.mxu0 0
    %490 = vmatpush1.bf16.xpose.msra.mxu0 0
    %491 = vmatprep.subr.bf16.mxu0 0
    %492 = vmatpush1.bf16.xpose.msra.mxu0 0
    %493 = vmatprep.subr.bf16.mxu0 0
    %494 = vmatpush1.bf16.xpose.msra.mxu0 0
    %495 = vmatprep.subr.bf16.mxu0 0
    %496 = vmatpush1.bf16.xpose.msra.mxu0 0
    %497 = vmatprep.subr.bf16.mxu0 0
    %498 = vmatpush1.bf16.xpose.msra.mxu0 0
    %499 = vmatprep.subr.bf16.mxu0 0
    %500 = vmatpush1.bf16.xpose.msra.mxu0 0
    %501 = vmatprep.subr.bf16.mxu0 0
    %502 = vmatpush1.bf16.xpose.msra.mxu0 0
    %503 = vmatprep.subr.bf16.mxu0 0
    %504 = vmatpush1.bf16.xpose.msra.mxu0 0
    %505 = vmatprep.subr.bf16.mxu0 0
    %506 = vmatpush1.bf16.xpose.msra.mxu0 0
    %507 = vmatprep.subr.bf16.mxu0 0
    %508 = vmatpush1.bf16.xpose.msra.mxu0 0
    %509 = vmatprep.subr.bf16.mxu0 0
    %510 = vmatpush1.bf16.xpose.msra.mxu0 0
    %511 = vmatprep.mubr.bf16.mxu0 0
    %512 = vmatmul.mubr.bf16.gmra.mrb[0].mxu0 %v474
    %v513 = vpop.f32.mrb[0].mxu0
    %v514 = vadd.f32 0.0, %v513
    %v515 = vpop.f32.mrb[0].mxu0
    %v516 = vpop.f32.mrb[0].mxu0
    %v517 = vadd.f32 0.0, %v516
    %v518 = vpop.f32.mrb[0].mxu0
    %519 = vdwg.mxu0
    %v520 = vmul.f32 %v514, 0.35355338
    %v521 = vmul.f32 %v517, 0.35355338
    %v522 = vadd.f32 %v520, %v68
    %v523 = vadd.f32 %v521, %v69
    %v524 = vsel %vm260, %v522, -inf
    %525 = vmax.xlane.f32.xlu0 %v524
    %v526 = vpop.xlane.xlu0 %525
    %v527 = vsel %vm260, %v523, -inf
    %528 = vmax.xlane.f32.xlu0 %v527
    %v529 = vpop.xlane.xlu0 %528
    %v530 = vsub.f32 %v522, %v526
    %v531 = vsub.f32 %v523, %v529
    %v532 = vmul.f32 %v530, 1.442695
    %v533 = vpow.pop %v532
    %v534 = vmul.f32 %v531, 1.442695
    %v535 = vpow.pop %v534
    %v536 = vsel %vm260, %v533, 0.0
    %537 = vadd.xlane.f32.xlu0 %v536
    %v538 = vpop.xlane.xlu0 %537
    %v539 = vsel %vm260, %v535, 0.0
    %540 = vadd.xlane.f32.xlu0 %v539
    %v541 = vpop.xlane.xlu0 %540
    %v542 = vrcp.pop %v538
    %v543 = vrcp.pop %v541
    %v544 = vmul.f32 %v533, %v542
    %v545 = vmul.f32 %v535, %v543
    %v546 = vpack.c.bf16 %v545, %v544
    %547 = vrot.lane.b32.xlu0 %v467, 48
    %v548 = vpop.permute.xlu0 %547
    %v551 = vsel %vm260, %v546, 0
    %553 = vmatprep.subr.bf16.mxu0 0
    %554 = vmatpush1.bf16.msra.mxu0 %v548
    %555 = vmatprep.subr.bf16.mxu0 0
    %556 = vmatpush1.bf16.msra.mxu0 0
    %557 = vmatprep.subr.bf16.mxu0 0
    %558 = vmatpush1.bf16.msra.mxu0 0
    %559 = vmatprep.subr.bf16.mxu0 0
    %560 = vmatpush1.bf16.msra.mxu0 0
    %561 = vmatprep.subr.bf16.mxu0 0
    %562 = vmatpush1.bf16.msra.mxu0 0
    %563 = vmatprep.subr.bf16.mxu0 0
    %564 = vmatpush1.bf16.msra.mxu0 0
    %565 = vmatprep.subr.bf16.mxu0 0
    %566 = vmatpush1.bf16.msra.mxu0 0
    %567 = vmatprep.subr.bf16.mxu0 0
    %568 = vmatpush1.bf16.msra.mxu0 0
    %569 = vmatprep.subr.bf16.mxu0 0
    %570 = vmatpush1.bf16.msra.mxu0 0
    %571 = vmatprep.subr.bf16.mxu0 0
    %572 = vmatpush1.bf16.msra.mxu0 0
    %573 = vmatprep.subr.bf16.mxu0 0
    %574 = vmatpush1.bf16.msra.mxu0 0
    %575 = vmatprep.subr.bf16.mxu0 0
    %576 = vmatpush1.bf16.msra.mxu0 0
    %577 = vmatprep.subr.bf16.mxu0 0
    %578 = vmatpush1.bf16.msra.mxu0 0
    %579 = vmatprep.subr.bf16.mxu0 0
    %580 = vmatpush1.bf16.msra.mxu0 0
    %581 = vmatprep.subr.bf16.mxu0 0
    %582 = vmatpush1.bf16.msra.mxu0 0
    %583 = vmatprep.subr.bf16.mxu0 0
    %584 = vmatpush1.bf16.msra.mxu0 0
    %585 = vmatprep.mubr.bf16.mxu0 0
    %586 = vmatmul.mubr.bf16.gmra.mrb[0].mxu0 %v551
    %v587 = vpop.f32.mrb[0].mxu0
    %v588 = vadd.f32 0.0, %v587
    %v589 = vpop.f32.mrb[0].mxu0
    %v590 = vpop.f32.mrb[0].mxu0
    %v591 = vadd.f32 0.0, %v590
    %v592 = vpop.f32.mrb[0].mxu0
    %593 = vdwg.mxu0
    %v594 = vpack.c.bf16 %v591, %v588
    %596 = vrot.lane.b32.xlu0 %v594, 16
    %v597 = vpop.permute.xlu0 %596
    %vm599 = vcmask 195712
    %600 = vst.msk [vmem:[#allocation4] sm:$0xff] %vm599, %v597
    %v601 = vld [vmem:[#allocation3] sm:$0xff]
    %603 = vrot.lane.b32.xlu0 %v601, 104
    %v604 = vpop.permute.xlu0 %603
    %605 = vrot.lane.b32.xlu0 %v601, 72
    %v606 = vpop.permute.xlu0 %605
    %v608 = vsel %vm208, %v604, 0
    %v611 = vsel %vm208, %v606, 0
    %613 = vmatprep.subr.bf16.mxu0 0
    %614 = vmatpush1.bf16.xpose.msra.mxu0 %v611
    %615 = vmatprep.subr.bf16.mxu0 0
    %616 = vmatpush1.bf16.xpose.msra.mxu0 0
    %617 = vmatprep.subr.bf16.mxu0 0
    %618 = vmatpush1.bf16.xpose.msra.mxu0 0
    %619 = vmatprep.subr.bf16.mxu0 0
    %620 = vmatpush1.bf16.xpose.msra.mxu0 0
    %621 = vmatprep.subr.bf16.mxu0 0
    %622 = vmatpush1.bf16.xpose.msra.mxu0 0
    %623 = vmatprep.subr.bf16.mxu0 0
    %624 = vmatpush1.bf16.xpose.msra.mxu0 0
    %625 = vmatprep.subr.bf16.mxu0 0
    %626 = vmatpush1.bf16.xpose.msra.mxu0 0
    %627 = vmatprep.subr.bf16.mxu0 0
    %628 = vmatpush1.bf16.xpose.msra.mxu0 0
    %629 = vmatprep.subr.bf16.mxu0 0
    %630 = vmatpush1.bf16.xpose.msra.mxu0 0
    %631 = vmatprep.subr.bf16.mxu0 0
    %632 = vmatpush1.bf16.xpose.msra.mxu0 0
    %633 = vmatprep.subr.bf16.mxu0 0
    %634 = vmatpush1.bf16.xpose.msra.mxu0 0
    %635 = vmatprep.subr.bf16.mxu0 0
    %636 = vmatpush1.bf16.xpose.msra.mxu0 0
    %637 = vmatprep.subr.bf16.mxu0 0
    %638 = vmatpush1.bf16.xpose.msra.mxu0 0
    %639 = vmatprep.subr.bf16.mxu0 0
    %640 = vmatpush1.bf16.xpose.msra.mxu0 0
    %641 = vmatprep.subr.bf16.mxu0 0
    %642 = vmatpush1.bf16.xpose.msra.mxu0 0
    %643 = vmatprep.subr.bf16.mxu0 0
    %644 = vmatpush1.bf16.xpose.msra.mxu0 0
    %645 = vmatprep.mubr.bf16.mxu0 0
    %646 = vmatmul.mubr.bf16.gmra.mrb[0].mxu0 %v608
    %v647 = vpop.f32.mrb[0].mxu0
    %v648 = vadd.f32 0.0, %v647
    %v649 = vpop.f32.mrb[0].mxu0
    %v650 = vpop.f32.mrb[0].mxu0
    %v651 = vadd.f32 0.0, %v650
    %v652 = vpop.f32.mrb[0].mxu0
    %653 = vdwg.mxu0
    %v654 = vmul.f32 %v648, 0.35355338
    %v655 = vmul.f32 %v651, 0.35355338
    %v656 = vadd.f32 %v654, %v68
    %v657 = vadd.f32 %v655, %v69
    %v658 = vsel %vm260, %v656, -inf
    %659 = vmax.xlane.f32.xlu0 %v658
    %v660 = vpop.xlane.xlu0 %659
    %v661 = vsel %vm260, %v657, -inf
    %662 = vmax.xlane.f32.xlu0 %v661
    %v663 = vpop.xlane.xlu0 %662
    %v664 = vsub.f32 %v656, %v660
    %v665 = vsub.f32 %v657, %v663
    %v666 = vmul.f32 %v664, 1.442695
    %v667 = vpow.pop %v666
    %v668 = vmul.f32 %v665, 1.442695
    %v669 = vpow.pop %v668
    %v670 = vsel %vm260, %v667, 0.0
    %671 = vadd.xlane.f32.xlu0 %v670
    %v672 = vpop.xlane.xlu0 %671
    %v673 = vsel %vm260, %v669, 0.0
    %674 = vadd.xlane.f32.xlu0 %v673
    %v675 = vpop.xlane.xlu0 %674
    %v676 = vrcp.pop %v672
    %v677 = vrcp.pop %v675
    %v678 = vmul.f32 %v667, %v676
    %v679 = vmul.f32 %v669, %v677
    %v680 = vpack.c.bf16 %v679, %v678
    %681 = vrot.lane.b32.xlu0 %v601, 40
    %v682 = vpop.permute.xlu0 %681
    %v685 = vsel %vm260, %v680, 0
    %687 = vmatprep.subr.bf16.mxu0 0
    %688 = vmatpush1.bf16.msra.mxu0 %v682
    %689 = vmatprep.subr.bf16.mxu0 0
    %690 = vmatpush1.bf16.msra.mxu0 0
    %691 = vmatprep.subr.bf16.mxu0 0
    %692 = vmatpush1.bf16.msra.mxu0 0
    %693 = vmatprep.subr.bf16.mxu0 0
    %694 = vmatpush1.bf16.msra.mxu0 0
    %695 = vmatprep.subr.bf16.mxu0 0
    %696 = vmatpush1.bf16.msra.mxu0 0
    %697 = vmatprep.subr.bf16.mxu0 0
    %698 = vmatpush1.bf16.msra.mxu0 0
    %699 = vmatprep.subr.bf16.mxu0 0
    %700 = vmatpush1.bf16.msra.mxu0 0
    %701 = vmatprep.subr.bf16.mxu0 0
    %702 = vmatpush1.bf16.msra.mxu0 0
    %703 = vmatprep.subr.bf16.mxu0 0
    %704 = vmatpush1.bf16.msra.mxu0 0
    %705 = vmatprep.subr.bf16.mxu0 0
    %706 = vmatpush1.bf16.msra.mxu0 0
    %707 = vmatprep.subr.bf16.mxu0 0
    %708 = vmatpush1.bf16.msra.mxu0 0
    %709 = vmatprep.subr.bf16.mxu0 0
    %710 = vmatpush1.bf16.msra.mxu0 0
    %711 = vmatprep.subr.bf16.mxu0 0
    %712 = vmatpush1.bf16.msra.mxu0 0
    %713 = vmatprep.subr.bf16.mxu0 0
    %714 = vmatpush1.bf16.msra.mxu0 0
    %715 = vmatprep.subr.bf16.mxu0 0
    %716 = vmatpush1.bf16.msra.mxu0 0
    %717 = vmatprep.subr.bf16.mxu0 0
    %718 = vmatpush1.bf16.msra.mxu0 0
    %719 = vmatprep.mubr.bf16.mxu0 0
    %720 = vmatmul.mubr.bf16.gmra.mrb[0].mxu0 %v685
    %v721 = vpop.f32.mrb[0].mxu0
    %v722 = vadd.f32 0.0, %v721
    %v723 = vpop.f32.mrb[0].mxu0
    %v724 = vpop.f32.mrb[0].mxu0
    %v725 = vadd.f32 0.0, %v724
    %v726 = vpop.f32.mrb[0].mxu0
    %727 = vdwg.mxu0
    %v728 = vpack.c.bf16 %v725, %v722
    %730 = vrot.lane.b32.xlu0 %v728, 24
    %v731 = vpop.permute.xlu0 %730
    %vm733 = vcmask 261312
    %734 = vst.msk [vmem:[#allocation4] sm:$0xff] %vm733, %v731
    %v735 = vld [vmem:[#allocation4] sm:$0xff]
    %v736 = vld [vmem:[%s7] sm:$0xf]
    %v737 = vld [vmem:[%s7 + $0x4] sm:$0xf]
    %v738 = vld [vmem:[%s7 + $0x8] sm:$0xf]
    %v739 = vld [vmem:[%s7 + $0xc] sm:$0xf]
    %v740 = vld [vmem:[%s8] sm:$0x1]
    %v742 = vlaneseq
    %v743 = vshrl.u32 %v742, 7
    %v744 = vsub.s32 0, %v743
    %v745 = vrot.slane %v740, %v744
    %v751 = vunpack.c.l.b16 %v736
    %v752 = vunpack.c.l.b16 %v737
    %v753 = vunpack.c.l.b16 %v738
    %v754 = vunpack.c.l.b16 %v739
    %v755 = vpack.c.b16 %v752, %v751
    %v756 = vpack.c.b16 %v754, %v753
    %v760 = vsel %vm74, %v735, 0
    %762 = vmatprep.subr.bf16.mxu0 0
    %763 = vmatpush1.bf16.msra.mxu0 %v755
    %764 = vmatprep.subr.bf16.mxu0 0
    %765 = vmatpush1.bf16.msra.mxu0 %v756
    %766 = vmatprep.subr.bf16.mxu0 0
    %767 = vmatpush1.bf16.msra.mxu0 0
    %768 = vmatprep.subr.bf16.mxu0 0
    %769 = vmatpush1.bf16.msra.mxu0 0
    %770 = vmatprep.subr.bf16.mxu0 0
    %771 = vmatpush1.bf16.msra.mxu0 0
    %772 = vmatprep.subr.bf16.mxu0 0
    %773 = vmatpush1.bf16.msra.mxu0 0
    %774 = vmatprep.subr.bf16.mxu0 0
    %775 = vmatpush1.bf16.msra.mxu0 0
    %776 = vmatprep.subr.bf16.mxu0 0
    %777 = vmatpush1.bf16.msra.mxu0 0
    %778 = vmatprep.subr.bf16.mxu0 0
    %779 = vmatpush1.bf16.msra.mxu0 0
    %780 = vmatprep.subr.bf16.mxu0 0
    %781 = vmatpush1.bf16.msra.mxu0 0
    %782 = vmatprep.subr.bf16.mxu0 0
    %783 = vmatpush1.bf16.msra.mxu0 0
    %784 = vmatprep.subr.bf16.mxu0 0
    %785 = vmatpush1.bf16.msra.mxu0 0
    %786 = vmatprep.subr.bf16.mxu0 0
    %787 = vmatpush1.bf16.msra.mxu0 0
    %788 = vmatprep.subr.bf16.mxu0 0
    %789 = vmatpush1.bf16.msra.mxu0 0
    %790 = vmatprep.subr.bf16.mxu0 0
    %791 = vmatpush1.bf16.msra.mxu0 0
    %792 = vmatprep.subr.bf16.mxu0 0
    %793 = vmatpush1.bf16.msra.mxu0 0
    %794 = vmatprep.mubr.bf16.mxu0 0
    %795 = vmatmul.mubr.bf16.gmra.mrb[0].mxu0 %v760
    %v796 = vpop.f32.mrb[0].mxu0
    %v797 = vadd.f32 %v745, %v796
    %v798 = vpop.f32.mrb[0].mxu0
    %v799 = vpop.f32.mrb[0].mxu0
    %v800 = vadd.f32 %v745, %v799
    %v801 = vpop.f32.mrb[0].mxu0
    %802 = vdwg.mxu0
    %v803 = vadd.f32 %v132, %v797
    %v804 = vadd.f32 %v133, %v800
    %v805 = vld [vmem:[%s9] sm:$0x1]
    %v806 = vld [vmem:[%s10] sm:$0x1]
    %v807 = vsel %vm74, %v803, 0.0
    %808 = vadd.xlane.f32.xlu0 %v807
    %v809 = vpop.xlane.xlu0 %808
    %v810 = vsel %vm74, %v804, 0.0
    %811 = vadd.xlane.f32.xlu0 %v810
    %v812 = vpop.xlane.xlu0 %811
    %v813 = vmul.f32 %v809, %v81
    %v814 = vmul.f32 %v812, %v81
    %v815 = vsub.f32 %v803, %v813
    %v816 = vsub.f32 %v804, %v814
    %v817 = vmul.f32 %v815, %v815
    %v818 = vmul.f32 %v816, %v816
    %v819 = vsel %vm74, %v817, 0.0
    %820 = vadd.xlane.f32.xlu0 %v819
    %v821 = vpop.xlane.xlu0 %820
    %v822 = vsel %vm74, %v818, 0.0
    %823 = vadd.xlane.f32.xlu0 %v822
    %v824 = vpop.xlane.xlu0 %823
    %v825 = vmul.f32 %v821, %v81
    %v826 = vmul.f32 %v824, %v81
    %v827 = vadd.f32 %v825, 1e-12
    %v828 = vadd.f32 %v826, 1e-12
    %v829 = vrsqrt.pop %v827
    %v830 = vrsqrt.pop %v828
    %v831 = vmul.f32 %v815, %v829
    %v832 = vmul.f32 %v816, %v830
    %v834 = vlaneseq
    %v835 = vshrl.u32 %v834, 7
    %v836 = vsub.s32 0, %v835
    %v837 = vrot.slane %v805, %v836
    %v839 = vmul.f32 %v831, %v837
    %v840 = vmul.f32 %v832, %v837
    %v842 = vlaneseq
    %v843 = vshrl.u32 %v842, 7
    %v844 = vsub.s32 0, %v843
    %v845 = vrot.slane %v806, %v844
    %v847 = vadd.f32 %v839, %v845
    %v848 = vadd.f32 %v840, %v845
    %v849 = vpack.c.bf16 %v848, %v847
    %v850 = vld [vmem:[%s11] sm:$0xf]
    %v851 = vld [vmem:[%s11 + $0x4] sm:$0xf]
    %v852 = vld [vmem:[%s11 + $0x8] sm:$0xf]
    %v853 = vld [vmem:[%s11 + $0xc] sm:$0xf]
    %v854 = vld [vmem:[%s12] sm:$0x1]
    %v856 = vlaneseq
    %v857 = vshrl.u32 %v856, 7
    %v858 = vsub.s32 0, %v857
    %v859 = vrot.slane %v854, %v858
    %v865 = vunpack.c.l.b16 %v850
    %v866 = vunpack.c.l.b16 %v851
    %v867 = vunpack.c.l.b16 %v852
    %v868 = vunpack.c.l.b16 %v853
    %v869 = vpack.c.b16 %v866, %v865
    %v870 = vpack.c.b16 %v868, %v867
    %v874 = vsel %vm74, %v849, 0
    %876 = vmatprep.subr.bf16.mxu0 0
    %877 = vmatpush1.bf16.msra.mxu0 %v869
    %878 = vmatprep.subr.bf16.mxu0 0
    %879 = vmatpush1.bf16.msra.mxu0 %v870
    %880 = vmatprep.subr.bf16.mxu0 0
    %881 = vmatpush1.bf16.msra.mxu0 0
    %882 = vmatprep.subr.bf16.mxu0 0
    %883 = vmatpush1.bf16.msra.mxu0 0
    %884 = vmatprep.subr.bf16.mxu0 0
    %885 = vmatpush1.bf16.msra.mxu0 0
    %886 = vmatprep.subr.bf16.mxu0 0
    %887 = vmatpush1.bf16.msra.mxu0 0
    %888 = vmatprep.subr.bf16.mxu0 0
    %889 = vmatpush1.bf16.msra.mxu0 0
    %890 = vmatprep.subr.bf16.mxu0 0
    %891 = vmatpush1.bf16.msra.mxu0 0
    %892 = vmatprep.subr.bf16.mxu0 0
    %893 = vmatpush1.bf16.msra.mxu0 0
    %894 = vmatprep.subr.bf16.mxu0 0
    %895 = vmatpush1.bf16.msra.mxu0 0
    %896 = vmatprep.subr.bf16.mxu0 0
    %897 = vmatpush1.bf16.msra.mxu0 0
    %898 = vmatprep.subr.bf16.mxu0 0
    %899 = vmatpush1.bf16.msra.mxu0 0
    %900 = vmatprep.subr.bf16.mxu0 0
    %901 = vmatpush1.bf16.msra.mxu0 0
    %902 = vmatprep.subr.bf16.mxu0 0
    %903 = vmatpush1.bf16.msra.mxu0 0
    %904 = vmatprep.subr.bf16.mxu0 0
    %905 = vmatpush1.bf16.msra.mxu0 0
    %906 = vmatprep.subr.bf16.mxu0 0
    %907 = vmatpush1.bf16.msra.mxu0 0
    %908 = vmatprep.mubr.bf16.mxu0 0
    %909 = vmatmul.mubr.bf16.gmra.mrb[0].mxu0 %v874
    %v910 = vpop.f32.mrb[0].mxu0
    %v911 = vadd.f32 %v859, %v910
    %v912 = vpop.f32.mrb[0].mxu0
    %v913 = vpop.f32.mrb[0].mxu0
    %v914 = vadd.f32 %v859, %v913
    %v915 = vpop.f32.mrb[0].mxu0
    %916 = vdwg.mxu0
    %v917 = vmul.f32 %v911, 0.5
    %v918 = vmul.f32 %v914, 0.5
    %v919 = vmul.f32 %v911, 0.044715
    %v920 = vmul.f32 %v914, 0.044715
    %v921 = vmul.f32 %v919, %v911
    %v922 = vmul.f32 %v920, %v914
    %v923 = vmul.f32 %v921, %v911
    %v924 = vmul.f32 %v922, %v914
    %v925 = vadd.f32 %v911, %v923
    %v926 = vadd.f32 %v914, %v924
    %v927 = vmul.f32 %v925, 0.7978846
    %v928 = vmul.f32 %v926, 0.7978846
    %v929 = vtanh.pop %v927
    %v930 = vtanh.pop %v928
    %v931 = vadd.f32 %v929, 1.0
    %v932 = vadd.f32 %v930, 1.0
    %v933 = vmul.f32 %v917, %v931
    %v934 = vmul.f32 %v918, %v932
    %v935 = vpack.c.bf16 %v934, %v933
    %v936 = vld [vmem:[%s13] sm:$0xf]
    %v937 = vld [vmem:[%s13 + $0x4] sm:$0xf]
    %v938 = vld [vmem:[%s13 + $0x8] sm:$0xf]
    %v939 = vld [vmem:[%s13 + $0xc] sm:$0xf]
    %v940 = vld [vmem:[%s13 + $0x10] sm:$0xf]
    %v941 = vld [vmem:[%s13 + $0x14] sm:$0xf]
    %v942 = vld [vmem:[%s13 + $0x18] sm:$0xf]
    %v943 = vld [vmem:[%s13 + $0x1c] sm:$0xf]
    %v944 = vld [vmem:[%s13 + $0x20] sm:$0xf]
    %v945 = vld [vmem:[%s13 + $0x24] sm:$0xf]
    %v946 = vld [vmem:[%s13 + $0x28] sm:$0xf]
    %v947 = vld [vmem:[%s13 + $0x2c] sm:$0xf]
    %v948 = vld [vmem:[%s13 + $0x30] sm:$0xf]
    %v949 = vld [vmem:[%s13 + $0x34] sm:$0xf]
    %v950 = vld [vmem:[%s13 + $0x38] sm:$0xf]
    %v951 = vld [vmem:[%s13 + $0x3c] sm:$0xf]
    %v952 = vld [vmem:[%s14] sm:$0x1]
    %v954 = vlaneseq
    %v955 = vshrl.u32 %v954, 7
    %v956 = vsub.s32 0, %v955
    %v957 = vrot.slane %v952, %v956
    %v975 = vunpack.c.l.b16 %v936
    %v976 = vunpack.c.l.b16 %v937
    %v977 = vunpack.c.l.b16 %v938
    %v978 = vunpack.c.l.b16 %v939
    %v979 = vunpack.c.l.b16 %v940
    %v980 = vunpack.c.l.b16 %v941
    %v981 = vunpack.c.l.b16 %v942
    %v982 = vunpack.c.l.b16 %v943
    %v983 = vunpack.c.l.b16 %v944
    %v984 = vunpack.c.l.b16 %v945
    %v985 = vunpack.c.l.b16 %v946
    %v986 = vunpack.c.l.b16 %v947
    %v987 = vunpack.c.l.b16 %v948
    %v988 = vunpack.c.l.b16 %v949
    %v989 = vunpack.c.l.b16 %v950
    %v990 = vunpack.c.l.b16 %v951
    %v991 = vpack.c.b16 %v976, %v975
    %v992 = vpack.c.b16 %v978, %v977
    %v993 = vpack.c.b16 %v980, %v979
    %v994 = vpack.c.b16 %v982, %v981
    %v995 = vpack.c.b16 %v984, %v983
    %v996 = vpack.c.b16 %v986, %v985
    %v997 = vpack.c.b16 %v988, %v987
    %v998 = vpack.c.b16 %v990, %v989
    %1007 = vmatprep.subr.bf16.mxu0 0
    %1008 = vmatpush1.bf16.msra.mxu0 %v991
    %1009 = vmatprep.subr.bf16.mxu0 0
    %1010 = vmatpush1.bf16.msra.mxu0 %v992
    %1011 = vmatprep.subr.bf16.mxu0 0
    %1012 = vmatpush1.bf16.msra.mxu0 %v993
    %1013 = vmatprep.subr.bf16.mxu0 0
    %1014 = vmatpush1.bf16.msra.mxu0 %v994
    %1015 = vmatprep.subr.bf16.mxu0 0
    %1016 = vmatpush1.bf16.msra.mxu0 %v995
    %1017 = vmatprep.subr.bf16.mxu0 0
    %1018 = vmatpush1.bf16.msra.mxu0 %v996
    %1019 = vmatprep.subr.bf16.mxu0 0
    %1020 = vmatpush1.bf16.msra.mxu0 %v997
    %1021 = vmatprep.subr.bf16.mxu0 0
    %1022 = vmatpush1.bf16.msra.mxu0 %v998
    %1023 = vmatprep.subr.bf16.mxu0 0
    %1024 = vmatpush1.bf16.msra.mxu0 0
    %1025 = vmatprep.subr.bf16.mxu0 0
    %1026 = vmatpush1.bf16.msra.mxu0 0
    %1027 = vmatprep.subr.bf16.mxu0 0
    %1028 = vmatpush1.bf16.msra.mxu0 0
    %1029 = vmatprep.subr.bf16.mxu0 0
    %1030 = vmatpush1.bf16.msra.mxu0 0
    %1031 = vmatprep.subr.bf16.mxu0 0
    %1032 = vmatpush1.bf16.msra.mxu0 0
    %1033 = vmatprep.subr.bf16.mxu0 0
    %1034 = vmatpush1.bf16.msra.mxu0 0
    %1035 = vmatprep.subr.bf16.mxu0 0
    %1036 = vmatpush1.bf16.msra.mxu0 0
    %1037 = vmatprep.subr.bf16.mxu0 0
    %1038 = vmatpush1.bf16.msra.mxu0 0
    %1039 = vmatprep.mubr.bf16.mxu0 0
    %1040 = vmatmul.mubr.bf16.gmra.mrb[0].mxu0 %v935
    %v1041 = vpop.f32.mrb[0].mxu0
    %v1042 = vadd.f32 %v957, %v1041
    %v1043 = vpop.f32.mrb[0].mxu0
    %v1044 = vpop.f32.mrb[0].mxu0
    %v1045 = vadd.f32 %v957, %v1044
    %v1046 = vpop.f32.mrb[0].mxu0
    %1047 = vdwg.mxu0
    %v1048 = vadd.f32 %v847, %v1042
    %v1049 = vadd.f32 %v848, %v1045
    %v1050 = vld [vmem:[%s15] sm:$0x1]
    %v1051 = vld [vmem:[%s16] sm:$0x1]
    %v1052 = vsel %vm74, %v1048, 0.0
    %1053 = vadd.xlane.f32.xlu0 %v1052
    %v1054 = vpop.xlane.xlu0 %1053
    %v1055 = vsel %vm74, %v1049, 0.0
    %1056 = vadd.xlane.f32.xlu0 %v1055
    %v1057 = vpop.xlane.xlu0 %1056
    %v1058 = vmul.f32 %v1054, %v81
    %v1059 = vmul.f32 %v1057, %v81
    %v1060 = vsub.f32 %v1048, %v1058
    %v1061 = vsub.f32 %v1049, %v1059
    %v1062 = vmul.f32 %v1060, %v1060
    %v1063 = vmul.f32 %v1061, %v1061
    %v1064 = vsel %vm74, %v1062, 0.0
    %1065 = vadd.xlane.f32.xlu0 %v1064
    %v1066 = vpop.xlane.xlu0 %1065
    %v1067 = vsel %vm74, %v1063, 0.0
    %1068 = vadd.xlane.f32.xlu0 %v1067
    %v1069 = vpop.xlane.xlu0 %1068
    %v1070 = vmul.f32 %v1066, %v81
    %v1071 = vmul.f32 %v1069, %v81
    %v1072 = vadd.f32 %v1070, 1e-12
    %v1073 = vadd.f32 %v1071, 1e-12
    %v1074 = vrsqrt.pop %v1072
    %v1075 = vrsqrt.pop %v1073
    %v1076 = vmul.f32 %v1060, %v1074
    %v1077 = vmul.f32 %v1061, %v1075
    %v1079 = vlaneseq
    %v1080 = vshrl.u32 %v1079, 7
    %v1081 = vsub.s32 0, %v1080
    %v1082 = vrot.slane %v1050, %v1081
    %v1084 = vmul.f32 %v1076, %v1082
    %v1085 = vmul.f32 %v1077, %v1082
    %v1087 = vlaneseq
    %v1088 = vshrl.u32 %v1087, 7
    %v1089 = vsub.s32 0, %v1088
    %v1090 = vrot.slane %v1051, %v1089
    %v1092 = vadd.f32 %v1084, %v1090
    %v1093 = vadd.f32 %v1085, %v1090
    %v1094 = vmul.f32 %v1092, %v121
    %v1095 = vmul.f32 %v1093, %v126
    %1096 = vst.msk [vmem:[#allocation2] sm:$0xff] %vm74, %v1094
    %1097 = vst.msk [vmem:[#allocation2 + $0x8] sm:$0xff] %vm74, %v1095
    %v1098 = vld [vmem:[#allocation2] sm:$0xff]
    %v1099 = vld [vmem:[#allocation2 + $0x8] sm:$0xff]
    %v1100 = vpack.c.bf16 %v1099, %v1098
    %s1101 = scalar_lea.vmem %s5, 16
    %v1102 = vld [vmem:[%s1101] sm:$0xf]
    %v1103 = vld [vmem:[%s1101 + $0x4] sm:$0xf]
    %v1104 = vld [vmem:[%s1101 + $0x8] sm:$0xf]
    %v1105 = vld [vmem:[%s1101 + $0xc] sm:$0xf]
    %s1106 = scalar_lea.vmem %s6, 1
    %v1107 = vld [vmem:[%s1106] sm:$0x1]
    %v1109 = vlaneseq
    %v1110 = vshrl.u32 %v1109, 7
    %v1111 = vsub.s32 0, %v1110
    %v1112 = vrot.slane %v1107, %v1111
    %v1118 = vunpack.c.l.b16 %v1102
    %v1119 = vunpack.c.l.b16 %v1103
    %v1120 = vunpack.c.l.b16 %v1104
    %v1121 = vunpack.c.l.b16 %v1105
    %v1122 = vpack.c.b16 %v1119, %v1118
    %v1123 = vpack.c.b16 %v1121, %v1120
    %v1127 = vsel %vm74, %v1100, 0
    %1129 = vmatprep.subr.bf16.mxu0 0
    %1130 = vmatpush1.bf16.msra.mxu0 %v1122
    %1131 = vmatprep.subr.bf16.mxu0 0
    %1132 = vmatpush1.bf16.msra.mxu0 %v1123
    %1133 = vmatprep.subr.bf16.mxu0 0
    %1134 = vmatpush1.bf16.msra.mxu0 0
    %1135 = vmatprep.subr.bf16.mxu0 0
    %1136 = vmatpush1.bf16.msra.mxu0 0
    %1137 = vmatprep.subr.bf16.mxu0 0
    %1138 = vmatpush1.bf16.msra.mxu0 0
    %1139 = vmatprep.subr.bf16.mxu0 0
    %1140 = vmatpush1.bf16.msra.mxu0 0
    %1141 = vmatprep.subr.bf16.mxu0 0
    %1142 = vmatpush1.bf16.msra.mxu0 0
    %1143 = vmatprep.subr.bf16.mxu0 0
    %1144 = vmatpush1.bf16.msra.mxu0 0
    %1145 = vmatprep.subr.bf16.mxu0 0
    %1146 = vmatpush1.bf16.msra.mxu0 0
    %1147 = vmatprep.subr.bf16.mxu0 0
    %1148 = vmatpush1.bf16.msra.mxu0 0
    %1149 = vmatprep.subr.bf16.mxu0 0
    %1150 = vmatpush1.bf16.msra.mxu0 0
    %1151 = vmatprep.subr.bf16.mxu0 0
    %1152 = vmatpush1.bf16.msra.mxu0 0
    %1153 = vmatprep.subr.bf16.mxu0 0
    %1154 = vmatpush1.bf16.msra.mxu0 0
    %1155 = vmatprep.subr.bf16.mxu0 0
    %1156 = vmatpush1.bf16.msra.mxu0 0
    %1157 = vmatprep.subr.bf16.mxu0 0
    %1158 = vmatpush1.bf16.msra.mxu0 0
    %1159 = vmatprep.subr.bf16.mxu0 0
    %1160 = vmatpush1.bf16.msra.mxu0 0
    %1161 = vmatprep.mubr.bf16.mxu0 0
    %1162 = vmatmul.mubr.bf16.gmra.mrb[0].mxu0 %v1127
    %v1163 = vpop.f32.mrb[0].mxu0
    %v1164 = vadd.f32 %v1112, %v1163
    %v1165 = vpop.f32.mrb[0].mxu0
    %v1166 = vpop.f32.mrb[0].mxu0
    %v1167 = vadd.f32 %v1112, %v1166
    %v1168 = vpop.f32.mrb[0].mxu0
    %1169 = vdwg.mxu0
    %v1170 = vpack.c.bf16 %v1167, %v1164
    %1171 = vst [vmem:[#allocation3] sm:$0xff] %v1170
    %v1172 = vld [vmem:[#allocation3] sm:$0xff]
    %1174 = vrot.lane.b32.xlu0 %v1172, 96
    %v1175 = vpop.permute.xlu0 %1174
    %v1177 = vsel %vm208, %v1172, 0
    %v1180 = vsel %vm208, %v1175, 0
    %1182 = vmatprep.subr.bf16.mxu0 0
    %1183 = vmatpush1.bf16.xpose.msra.mxu0 %v1180
    %1184 = vmatprep.subr.bf16.mxu0 0
    %1185 = vmatpush1.bf16.xpose.msra.mxu0 0
    %1186 = vmatprep.subr.bf16.mxu0 0
    %1187 = vmatpush1.bf16.xpose.msra.mxu0 0
    %1188 = vmatprep.subr.bf16.mxu0 0
    %1189 = vmatpush1.bf16.xpose.msra.mxu0 0
    %1190 = vmatprep.subr.bf16.mxu0 0
    %1191 = vmatpush1.bf16.xpose.msra.mxu0 0
    %1192 = vmatprep.subr.bf16.mxu0 0
    %1193 = vmatpush1.bf16.xpose.msra.mxu0 0
    %1194 = vmatprep.subr.bf16.mxu0 0
    %1195 = vmatpush1.bf16.xpose.msra.mxu0 0
    %1196 = vmatprep.subr.bf16.mxu0 0
    %1197 = vmatpush1.bf16.xpose.msra.mxu0 0
    %1198 = vmatprep.subr.bf16.mxu0 0
    %1199 = vmatpush1.bf16.xpose.msra.mxu0 0
    %1200 = vmatprep.subr.bf16.mxu0 0
    %1201 = vmatpush1.bf16.xpose.msra.mxu0 0
    %1202 = vmatprep.subr.bf16.mxu0 0
    %1203 = vmatpush1.bf16.xpose.msra.mxu0 0
    %1204 = vmatprep.subr.bf16.mxu0 0
    %1205 = vmatpush1.bf16.xpose.msra.mxu0 0
    %1206 = vmatprep.subr.bf16.mxu0 0
    %1207 = vmatpush1.bf16.xpose.msra.mxu0 0
    %1208 = vmatprep.subr.bf16.mxu0 0
    %1209 = vmatpush1.bf16.xpose.msra.mxu0 0
    %1210 = vmatprep.subr.bf16.mxu0 0
    %1211 = vmatpush1.bf16.xpose.msra.mxu0 0
    %1212 = vmatprep.subr.bf16.mxu0 0
    %1213 = vmatpush1.bf16.xpose.msra.mxu0 0
    %1214 = vmatprep.mubr.bf16.mxu0 0
    %1215 = vmatmul.mubr.bf16.gmra.mrb[0].mxu0 %v1177
    %v1216 = vpop.f32.mrb[0].mxu0
    %v1217 = vadd.f32 0.0, %v1216
    %v1218 = vpop.f32.mrb[0].mxu0
    %v1219 = vpop.f32.mrb[0].mxu0
    %v1220 = vadd.f32 0.0, %v1219
    %v1221 = vpop.f32.mrb[0].mxu0
    %1222 = vdwg.mxu0
    %v1223 = vmul.f32 %v1217, 0.35355338
    %v1224 = vmul.f32 %v1220, 0.35355338
    %v1225 = vadd.f32 %v1223, %v68
    %v1226 = vadd.f32 %v1224, %v69
    %v1227 = vsel %vm260, %v1225, -inf
    %1228 = vmax.xlane.f32.xlu0 %v1227
    %v1229 = vpop.xlane.xlu0 %1228
    %v1230 = vsel %vm260, %v1226, -inf
    %1231 = vmax.xlane.f32.xlu0 %v1230
    %v1232 = vpop.xlane.xlu0 %1231
    %v1233 = vsub.f32 %v1225, %v1229
    %v1234 = vsub.f32 %v1226, %v1232
    %v1235 = vmul.f32 %v1233, 1.442695
    %v1236 = vpow.pop %v1235
    %v1237 = vmul.f32 %v1234, 1.442695
    %v1238 = vpow.pop %v1237
    %v1239 = vsel %vm260, %v1236, 0.0
    %1240 = vadd.xlane.f32.xlu0 %v1239
    %v1241 = vpop.xlane.xlu0 %1240
    %v1242 = vsel %vm260, %v1238, 0.0
    %1243 = vadd.xlane.f32.xlu0 %v1242
    %v1244 = vpop.xlane.xlu0 %1243
    %v1245 = vrcp.pop %v1241
    %v1246 = vrcp.pop %v1244
    %v1247 = vmul.f32 %v1236, %v1245
    %v1248 = vmul.f32 %v1238, %v1246
    %v1250 = vrot.slane %v1248, 7
    %vm1252 = vcmask 1040384
    %v1253 = vsel %vm1252, %v1247, %v1250
    %v1254 = vadd.f32 %v1253, 0.0
    %v1255 = vpack.c.bf16 %v1248, %v1247
    %1256 = vrot.lane.b32.xlu0 %v1172, 64
    %v1257 = vpop.permute.xlu0 %1256
    %v1260 = vsel %vm260, %v1255, 0
    %1262 = vmatprep.subr.bf16.mxu0 0
    %1263 = vmatpush1.bf16.msra.mxu0 %v1257
    %1264 = vmatprep.subr.bf16.mxu0 0
    %1265 = vmatpush1.bf16.msra.mxu0 0
    %1266 = vmatprep.subr.bf16.mxu0 0
    %1267 = vmatpush1.bf16.msra.mxu0 0
    %1268 = vmatprep.subr.bf16.mxu0 0
    %1269 = vmatpush1.bf16.msra.mxu0 0
    %1270 = vmatprep.subr.bf16.mxu0 0
    %1271 = vmatpush1.bf16.msra.mxu0 0
    %1272 = vmatprep.subr.bf16.mxu0 0
    %1273 = vmatpush1.bf16.msra.mxu0 0
    %1274 = vmatprep.subr.bf16.mxu0 0
    %1275 = vmatpush1.bf16.msra.mxu0 0
    %1276 = vmatprep.subr.bf16.mxu0 0
    %1277 = vmatpush1.bf16.msra.mxu0 0
    %1278 = vmatprep.subr.bf16.mxu0 0
    %1279 = vmatpush1.bf16.msra.mxu0 0
    %1280 = vmatprep.subr.bf16.mxu0 0
    %1281 = vmatpush1.bf16.msra.mxu0 0
    %1282 = vmatprep.subr.bf16.mxu0 0
    %1283 = vmatpush1.bf16.msra.mxu0 0
    %1284 = vmatprep.subr.bf16.mxu0 0
    %1285 = vmatpush1.bf16.msra.mxu0 0
    %1286 = vmatprep.subr.bf16.mxu0 0
    %1287 = vmatpush1.bf16.msra.mxu0 0
    %1288 = vmatprep.subr.bf16.mxu0 0
    %1289 = vmatpush1.bf16.msra.mxu0 0
    %1290 = vmatprep.subr.bf16.mxu0 0
    %1291 = vmatpush1.bf16.msra.mxu0 0
    %1292 = vmatprep.subr.bf16.mxu0 0
    %1293 = vmatpush1.bf16.msra.mxu0 0
    %1294 = vmatprep.mubr.bf16.mxu0 0
    %1295 = vmatmul.mubr.bf16.gmra.mrb[0].mxu0 %v1260
    %v1296 = vpop.f32.mrb[0].mxu0
    %v1297 = vadd.f32 0.0, %v1296
    %v1298 = vpop.f32.mrb[0].mxu0
    %v1299 = vpop.f32.mrb[0].mxu0
    %v1300 = vadd.f32 0.0, %v1299
    %v1301 = vpop.f32.mrb[0].mxu0
    %1302 = vdwg.mxu0
    %v1303 = vpack.c.bf16 %v1300, %v1297
    %1304 = vst.msk [vmem:[#allocation4] sm:$0xff] %vm208, %v1303
    %v1305 = vld [vmem:[#allocation3] sm:$0xff]
    %1307 = vrot.lane.b32.xlu0 %v1305, 120
    %v1308 = vpop.permute.xlu0 %1307
    %1309 = vrot.lane.b32.xlu0 %v1305, 88
    %v1310 = vpop.permute.xlu0 %1309
    %v1312 = vsel %vm208, %v1308, 0
    %v1315 = vsel %vm208, %v1310, 0
    %1317 = vmatprep.subr.bf16.mxu0 0
    %1318 = vmatpush1.bf16.xpose.msra.mxu0 %v1315
    %1319 = vmatprep.subr.bf16.mxu0 0
    %1320 = vmatpush1.bf16.xpose.msra.mxu0 0
    %1321 = vmatprep.subr.bf16.mxu0 0
    %1322 = vmatpush1.bf16.xpose.msra.mxu0 0
    %1323 = vmatprep.subr.bf16.mxu0 0
    %1324 = vmatpush1.bf16.xpose.msra.mxu0 0
    %1325 = vmatprep.subr.bf16.mxu0 0
    %1326 = vmatpush1.bf16.xpose.msra.mxu0 0
    %1327 = vmatprep.subr.bf16.mxu0 0
    %1328 = vmatpush1.bf16.xpose.msra.mxu0 0
    %1329 = vmatprep.subr.bf16.mxu0 0
    %1330 = vmatpush1.bf16.xpose.msra.mxu0 0
    %1331 = vmatprep.subr.bf16.mxu0 0
    %1332 = vmatpush1.bf16.xpose.msra.mxu0 0
    %1333 = vmatprep.subr.bf16.mxu0 0
    %1334 = vmatpush1.bf16.xpose.msra.mxu0 0
    %1335 = vmatprep.subr.bf16.mxu0 0
    %1336 = vmatpush1.bf16.xpose.msra.mxu0 0
    %1337 = vmatprep.subr.bf16.mxu0 0
    %1338 = vmatpush1.bf16.xpose.msra.mxu0 0
    %1339 = vmatprep.subr.bf16.mxu0 0
    %1340 = vmatpush1.bf16.xpose.msra.mxu0 0
    %1341 = vmatprep.subr.bf16.mxu0 0
    %1342 = vmatpush1.bf16.xpose.msra.mxu0 0
    %1343 = vmatprep.subr.bf16.mxu0 0
    %1344 = vmatpush1.bf16.xpose.msra.mxu0 0
    %1345 = vmatprep.subr.bf16.mxu0 0
    %1346 = vmatpush1.bf16.xpose.msra.mxu0 0
    %1347 = vmatprep.subr.bf16.mxu0 0
    %1348 = vmatpush1.bf16.xpose.msra.mxu0 0
    %1349 = vmatprep.mubr.bf16.mxu0 0
    %1350 = vmatmul.mubr.bf16.gmra.mrb[0].mxu0 %v1312
    %v1351 = vpop.f32.mrb[0].mxu0
    %v1352 = vadd.f32 0.0, %v1351
    %v1353 = vpop.f32.mrb[0].mxu0
    %v1354 = vpop.f32.mrb[0].mxu0
    %v1355 = vadd.f32 0.0, %v1354
    %v1356 = vpop.f32.mrb[0].mxu0
    %1357 = vdwg.mxu0
    %v1358 = vmul.f32 %v1352, 0.35355338
    %v1359 = vmul.f32 %v1355, 0.35355338
    %v1360 = vadd.f32 %v1358, %v68
    %v1361 = vadd.f32 %v1359, %v69
    %v1362 = vsel %vm260, %v1360, -inf
    %1363 = vmax.xlane.f32.xlu0 %v1362
    %v1364 = vpop.xlane.xlu0 %1363
    %v1365 = vsel %vm260, %v1361, -inf
    %1366 = vmax.xlane.f32.xlu0 %v1365
    %v1367 = vpop.xlane.xlu0 %1366
    %v1368 = vsub.f32 %v1360, %v1364
    %v1369 = vsub.f32 %v1361, %v1367
    %v1370 = vmul.f32 %v1368, 1.442695
    %v1371 = vpow.pop %v1370
    %v1372 = vmul.f32 %v1369, 1.442695
    %v1373 = vpow.pop %v1372
    %v1374 = vsel %vm260, %v1371, 0.0
    %1375 = vadd.xlane.f32.xlu0 %v1374
    %v1376 = vpop.xlane.xlu0 %1375
    %v1377 = vsel %vm260, %v1373, 0.0
    %1378 = vadd.xlane.f32.xlu0 %v1377
    %v1379 = vpop.xlane.xlu0 %1378
    %v1380 = vrcp.pop %v1376
    %v1381 = vrcp.pop %v1379
    %v1382 = vmul.f32 %v1371, %v1380
    %v1383 = vmul.f32 %v1373, %v1381
    %v1385 = vrot.slane %v1383, 7
    %v1387 = vsel %vm1252, %v1382, %v1385
    %v1388 = vadd.f32 %v1254, %v1387
    %v1389 = vpack.c.bf16 %v1383, %v1382
    %1390 = vrot.lane.b32.xlu0 %v1305, 56
    %v1391 = vpop.permute.xlu0 %1390
    %v1394 = vsel %vm260, %v1389, 0
    %1396 = vmatprep.subr.bf16.mxu0 0
    %1397 = vmatpush1.bf16.msra.mxu0 %v1391
    %1398 = vmatprep.subr.bf16.mxu0 0
    %1399 = vmatpush1.bf16.msra.mxu0 0
    %1400 = vmatprep.subr.bf16.mxu0 0
    %1401 = vmatpush1.bf16.msra.mxu0 0
    %1402 = vmatprep.subr.bf16.mxu0 0
    %1403 = vmatpush1.bf16.msra.mxu0 0
    %1404 = vmatprep.subr.bf16.mxu0 0
    %1405 = vmatpush1.bf16.msra.mxu0 0
    %1406 = vmatprep.subr.bf16.mxu0 0
    %1407 = vmatpush1.bf16.msra.mxu0 0
    %1408 = vmatprep.subr.bf16.mxu0 0
    %1409 = vmatpush1.bf16.msra.mxu0 0
    %1410 = vmatprep.subr.bf16.mxu0 0
    %1411 = vmatpush1.bf16.msra.mxu0 0
    %1412 = vmatprep.subr.bf16.mxu0 0
    %1413 = vmatpush1.bf16.msra.mxu0 0
    %1414 = vmatprep.subr.bf16.mxu0 0
    %1415 = vmatpush1.bf16.msra.mxu0 0
    %1416 = vmatprep.subr.bf16.mxu0 0
    %1417 = vmatpush1.bf16.msra.mxu0 0
    %1418 = vmatprep.subr.bf16.mxu0 0
    %1419 = vmatpush1.bf16.msra.mxu0 0
    %1420 = vmatprep.subr.bf16.mxu0 0
    %1421 = vmatpush1.bf16.msra.mxu0 0
    %1422 = vmatprep.subr.bf16.mxu0 0
    %1423 = vmatpush1.bf16.msra.mxu0 0
    %1424 = vmatprep.subr.bf16.mxu0 0
    %1425 = vmatpush1.bf16.msra.mxu0 0
    %1426 = vmatprep.subr.bf16.mxu0 0
    %1427 = vmatpush1.bf16.msra.mxu0 0
    %1428 = vmatprep.mubr.bf16.mxu0 0
    %1429 = vmatmul.mubr.bf16.gmra.mrb[0].mxu0 %v1394
    %v1430 = vpop.f32.mrb[0].mxu0
    %v1431 = vadd.f32 0.0, %v1430
    %v1432 = vpop.f32.mrb[0].mxu0
    %v1433 = vpop.f32.mrb[0].mxu0
    %v1434 = vadd.f32 0.0, %v1433
    %v1435 = vpop.f32.mrb[0].mxu0
    %1436 = vdwg.mxu0
    %v1437 = vpack.c.bf16 %v1434, %v1431
    %1439 = vrot.lane.b32.xlu0 %v1437, 8
    %v1440 = vpop.permute.xlu0 %1439
    %1442 = vst.msk [vmem:[#allocation4] sm:$0xff] %vm465, %v1440
    %v1443 = vld [vmem:[#allocation3] sm:$0xff]
    %1445 = vrot.lane.b32.xlu0 %v1443, 112
    %v1446 = vpop.permute.xlu0 %1445
    %1447 = vrot.lane.b32.xlu0 %v1443, 80
    %v1448 = vpop.permute.xlu0 %1447
    %v1450 = vsel %vm208, %v1446, 0
    %v1453 = vsel %vm208, %v1448, 0
    %1455 = vmatprep.subr.bf16.mxu0 0
    %1456 = vmatpush1.bf16.xpose.msra.mxu0 %v1453
    %1457 = vmatprep.subr.bf16.mxu0 0
    %1458 = vmatpush1.bf16.xpose.msra.mxu0 0
    %1459 = vmatprep.subr.bf16.mxu0 0
    %1460 = vmatpush1.bf16.xpose.msra.mxu0 0
    %1461 = vmatprep.subr.bf16.mxu0 0
    %1462 = vmatpush1.bf16.xpose.msra.mxu0 0
    %1463 = vmatprep.subr.bf16.mxu0 0
    %1464 = vmatpush1.bf16.xpose.msra.mxu0 0
    %1465 = vmatprep.subr.bf16.mxu0 0
    %1466 = vmatpush1.bf16.xpose.msra.mxu0 0
    %1467 = vmatprep.subr.bf16.mxu0 0
    %1468 = vmatpush1.bf16.xpose.msra.mxu0 0
    %1469 = vmatprep.subr.bf16.mxu0 0
    %1470 = vmatpush1.bf16.xpose.msra.mxu0 0
    %1471 = vmatprep.subr.bf16.mxu0 0
    %1472 = vmatpush1.bf16.xpose.msra.mxu0 0
    %1473 = vmatprep.subr.bf16.mxu0 0
    %1474 = vmatpush1.bf16.xpose.msra.mxu0 0
    %1475 = vmatprep.subr.bf16.mxu0 0
    %1476 = vmatpush1.bf16.xpose.msra.mxu0 0
    %1477 = vmatprep.subr.bf16.mxu0 0
    %1478 = vmatpush1.bf16.xpose.msra.mxu0 0
    %1479 = vmatprep.subr.bf16.mxu0 0
    %1480 = vmatpush1.bf16.xpose.msra.mxu0 0
    %1481 = vmatprep.subr.bf16.mxu0 0
    %1482 = vmatpush1.bf16.xpose.msra.mxu0 0
    %1483 = vmatprep.subr.bf16.mxu0 0
    %1484 = vmatpush1.bf16.xpose.msra.mxu0 0
    %1485 = vmatprep.subr.bf16.mxu0 0
    %1486 = vmatpush1.bf16.xpose.msra.mxu0 0
    %1487 = vmatprep.mubr.bf16.mxu0 0
    %1488 = vmatmul.mubr.bf16.gmra.mrb[0].mxu0 %v1450
    %v1489 = vpop.f32.mrb[0].mxu0
    %v1490 = vadd.f32 0.0, %v1489
    %v1491 = vpop.f32.mrb[0].mxu0
    %v1492 = vpop.f32.mrb[0].mxu0
    %v1493 = vadd.f32 0.0, %v1492
    %v1494 = vpop.f32.mrb[0].mxu0
    %1495 = vdwg.mxu0
    %v1496 = vmul.f32 %v1490, 0.35355338
    %v1497 = vmul.f32 %v1493, 0.35355338
    %v1498 = vadd.f32 %v1496, %v68
    %v1499 = vadd.f32 %v1497, %v69
    %v1500 = vsel %vm260, %v1498, -inf
    %1501 = vmax.xlane.f32.xlu0 %v1500
    %v1502 = vpop.xlane.xlu0 %1501
    %v1503 = vsel %vm260, %v1499, -inf
    %1504 = vmax.xlane.f32.xlu0 %v1503
    %v1505 = vpop.xlane.xlu0 %1504
    %v1506 = vsub.f32 %v1498, %v1502
    %v1507 = vsub.f32 %v1499, %v1505
    %v1508 = vmul.f32 %v1506, 1.442695
    %v1509 = vpow.pop %v1508
    %v1510 = vmul.f32 %v1507, 1.442695
    %v1511 = vpow.pop %v1510
    %v1512 = vsel %vm260, %v1509, 0.0
    %1513 = vadd.xlane.f32.xlu0 %v1512
    %v1514 = vpop.xlane.xlu0 %1513
    %v1515 = vsel %vm260, %v1511, 0.0
    %1516 = vadd.xlane.f32.xlu0 %v1515
    %v1517 = vpop.xlane.xlu0 %1516
    %v1518 = vrcp.pop %v1514
    %v1519 = vrcp.pop %v1517
    %v1520 = vmul.f32 %v1509, %v1518
    %v1521 = vmul.f32 %v1511, %v1519
    %v1523 = vrot.slane %v1521, 7
    %v1525 = vsel %vm1252, %v1520, %v1523
    %v1526 = vadd.f32 %v1388, %v1525
    %v1527 = vpack.c.bf16 %v1521, %v1520
    %1528 = vrot.lane.b32.xlu0 %v1443, 48
    %v1529 = vpop.permute.xlu0 %1528
    %v1532 = vsel %vm260, %v1527, 0
    %1534 = vmatprep.subr.bf16.mxu0 0
    %1535 = vmatpush1.bf16.msra.mxu0 %v1529
    %1536 = vmatprep.subr.bf16.mxu0 0
    %1537 = vmatpush1.bf16.msra.mxu0 0
    %1538 = vmatprep.subr.bf16.mxu0 0
    %1539 = vmatpush1.bf16.msra.mxu0 0
    %1540 = vmatprep.subr.bf16.mxu0 0
    %1541 = vmatpush1.bf16.msra.mxu0 0
    %1542 = vmatprep.subr.bf16.mxu0 0
    %1543 = vmatpush1.bf16.msra.mxu0 0
    %1544 = vmatprep.subr.bf16.mxu0 0
    %1545 = vmatpush1.bf16.msra.mxu0 0
    %1546 = vmatprep.subr.bf16.mxu0 0
    %1547 = vmatpush1.bf16.msra.mxu0 0
    %1548 = vmatprep.subr.bf16.mxu0 0
    %1549 = vmatpush1.bf16.msra.mxu0 0
    %1550 = vmatprep.subr.bf16.mxu0 0
    %1551 = vmatpush1.bf16.msra.mxu0 0
    %1552 = vmatprep.subr.bf16.mxu0 0
    %1553 = vmatpush1.bf16.msra.mxu0 0
    %1554 = vmatprep.subr.bf16.mxu0 0
    %1555 = vmatpush1.bf16.msra.mxu0 0
    %1556 = vmatprep.subr.bf16.mxu0 0
    %1557 = vmatpush1.bf16.msra.mxu0 0
    %1558 = vmatprep.subr.bf16.mxu0 0
    %1559 = vmatpush1.bf16.msra.mxu0 0
    %1560 = vmatprep.subr.bf16.mxu0 0
    %1561 = vmatpush1.bf16.msra.mxu0 0
    %1562 = vmatprep.subr.bf16.mxu0 0
    %1563 = vmatpush1.bf16.msra.mxu0 0
    %1564 = vmatprep.subr.bf16.mxu0 0
    %1565 = vmatpush1.bf16.msra.mxu0 0
    %1566 = vmatprep.mubr.bf16.mxu0 0
    %1567 = vmatmul.mubr.bf16.gmra.mrb[0].mxu0 %v1532
    %v1568 = vpop.f32.mrb[0].mxu0
    %v1569 = vadd.f32 0.0, %v1568
    %v1570 = vpop.f32.mrb[0].mxu0
    %v1571 = vpop.f32.mrb[0].mxu0
    %v1572 = vadd.f32 0.0, %v1571
    %v1573 = vpop.f32.mrb[0].mxu0
    %1574 = vdwg.mxu0
    %v1575 = vpack.c.bf16 %v1572, %v1569
    %1577 = vrot.lane.b32.xlu0 %v1575, 16
    %v1578 = vpop.permute.xlu0 %1577
    %1580 = vst.msk [vmem:[#allocation4] sm:$0xff] %vm599, %v1578
    %v1581 = vld [vmem:[#allocation3] sm:$0xff]
    %1583 = vrot.lane.b32.xlu0 %v1581, 104
    %v1584 = vpop.permute.xlu0 %1583
    %1585 = vrot.lane.b32.xlu0 %v1581, 72
    %v1586 = vpop.permute.xlu0 %1585
    %v1588 = vsel %vm208, %v1584, 0
    %v1591 = vsel %vm208, %v1586, 0
    %1593 = vmatprep.subr.bf16.mxu0 0
    %1594 = vmatpush1.bf16.xpose.msra.mxu0 %v1591
    %1595 = vmatprep.subr.bf16.mxu0 0
    %1596 = vmatpush1.bf16.xpose.msra.mxu0 0
    %1597 = vmatprep.subr.bf16.mxu0 0
    %1598 = vmatpush1.bf16.xpose.msra.mxu0 0
    %1599 = vmatprep.subr.bf16.mxu0 0
    %1600 = vmatpush1.bf16.xpose.msra.mxu0 0
    %1601 = vmatprep.subr.bf16.mxu0 0
    %1602 = vmatpush1.bf16.xpose.msra.mxu0 0
    %1603 = vmatprep.subr.bf16.mxu0 0
    %1604 = vmatpush1.bf16.xpose.msra.mxu0 0
    %1605 = vmatprep.subr.bf16.mxu0 0
    %1606 = vmatpush1.bf16.xpose.msra.mxu0 0
    %1607 = vmatprep.subr.bf16.mxu0 0
    %1608 = vmatpush1.bf16.xpose.msra.mxu0 0
    %1609 = vmatprep.subr.bf16.mxu0 0
    %1610 = vmatpush1.bf16.xpose.msra.mxu0 0
    %1611 = vmatprep.subr.bf16.mxu0 0
    %1612 = vmatpush1.bf16.xpose.msra.mxu0 0
    %1613 = vmatprep.subr.bf16.mxu0 0
    %1614 = vmatpush1.bf16.xpose.msra.mxu0 0
    %1615 = vmatprep.subr.bf16.mxu0 0
    %1616 = vmatpush1.bf16.xpose.msra.mxu0 0
    %1617 = vmatprep.subr.bf16.mxu0 0
    %1618 = vmatpush1.bf16.xpose.msra.mxu0 0
    %1619 = vmatprep.subr.bf16.mxu0 0
    %1620 = vmatpush1.bf16.xpose.msra.mxu0 0
    %1621 = vmatprep.subr.bf16.mxu0 0
    %1622 = vmatpush1.bf16.xpose.msra.mxu0 0
    %1623 = vmatprep.subr.bf16.mxu0 0
    %1624 = vmatpush1.bf16.xpose.msra.mxu0 0
    %1625 = vmatprep.mubr.bf16.mxu0 0
    %1626 = vmatmul.mubr.bf16.gmra.mrb[0].mxu0 %v1588
    %v1627 = vpop.f32.mrb[0].mxu0
    %v1628 = vadd.f32 0.0, %v1627
    %v1629 = vpop.f32.mrb[0].mxu0
    %v1630 = vpop.f32.mrb[0].mxu0
    %v1631 = vadd.f32 0.0, %v1630
    %v1632 = vpop.f32.mrb[0].mxu0
    %1633 = vdwg.mxu0
    %v1634 = vmul.f32 %v1628, 0.35355338
    %v1635 = vmul.f32 %v1631, 0.35355338
    %v1636 = vadd.f32 %v1634, %v68
    %v1637 = vadd.f32 %v1635, %v69
    %v1638 = vsel %vm260, %v1636, -inf
    %1639 = vmax.xlane.f32.xlu0 %v1638
    %v1640 = vpop.xlane.xlu0 %1639
    %v1641 = vsel %vm260, %v1637, -inf
    %1642 = vmax.xlane.f32.xlu0 %v1641
    %v1643 = vpop.xlane.xlu0 %1642
    %v1644 = vsub.f32 %v1636, %v1640
    %v1645 = vsub.f32 %v1637, %v1643
    %v1646 = vmul.f32 %v1644, 1.442695
    %v1647 = vpow.pop %v1646
    %v1648 = vmul.f32 %v1645, 1.442695
    %v1649 = vpow.pop %v1648
    %v1650 = vsel %vm260, %v1647, 0.0
    %1651 = vadd.xlane.f32.xlu0 %v1650
    %v1652 = vpop.xlane.xlu0 %1651
    %v1653 = vsel %vm260, %v1649, 0.0
    %1654 = vadd.xlane.f32.xlu0 %v1653
    %v1655 = vpop.xlane.xlu0 %1654
    %v1656 = vrcp.pop %v1652
    %v1657 = vrcp.pop %v1655
    %v1658 = vmul.f32 %v1647, %v1656
    %v1659 = vmul.f32 %v1649, %v1657
    %v1661 = vrot.slane %v1659, 7
    %v1663 = vsel %vm1252, %v1658, %v1661
    %v1664 = vadd.f32 %v1526, %v1663
    %v1665 = vpack.c.bf16 %v1659, %v1658
    %1666 = vrot.lane.b32.xlu0 %v1581, 40
    %v1667 = vpop.permute.xlu0 %1666
    %v1670 = vsel %vm260, %v1665, 0
    %1672 = vmatprep.subr.bf16.mxu0 0
    %1673 = vmatpush1.bf16.msra.mxu0 %v1667
    %1674 = vmatprep.subr.bf16.mxu0 0
    %1675 = vmatpush1.bf16.msra.mxu0 0
    %1676 = vmatprep.subr.bf16.mxu0 0
    %1677 = vmatpush1.bf16.msra.mxu0 0
    %1678 = vmatprep.subr.bf16.mxu0 0
    %1679 = vmatpush1.bf16.msra.mxu0 0
    %1680 = vmatprep.subr.bf16.mxu0 0
    %1681 = vmatpush1.bf16.msra.mxu0 0
    %1682 = vmatprep.subr.bf16.mxu0 0
    %1683 = vmatpush1.bf16.msra.mxu0 0
    %1684 = vmatprep.subr.bf16.mxu0 0
    %1685 = vmatpush1.bf16.msra.mxu0 0
    %1686 = vmatprep.subr.bf16.mxu0 0
    %1687 = vmatpush1.bf16.msra.mxu0 0
    %1688 = vmatprep.subr.bf16.mxu0 0
    %1689 = vmatpush1.bf16.msra.mxu0 0
    %1690 = vmatprep.subr.bf16.mxu0 0
    %1691 = vmatpush1.bf16.msra.mxu0 0
    %1692 = vmatprep.subr.bf16.mxu0 0
    %1693 = vmatpush1.bf16.msra.mxu0 0
    %1694 = vmatprep.subr.bf16.mxu0 0
    %1695 = vmatpush1.bf16.msra.mxu0 0
    %1696 = vmatprep.subr.bf16.mxu0 0
    %1697 = vmatpush1.bf16.msra.mxu0 0
    %1698 = vmatprep.subr.bf16.mxu0 0
    %1699 = vmatpush1.bf16.msra.mxu0 0
    %1700 = vmatprep.subr.bf16.mxu0 0
    %1701 = vmatpush1.bf16.msra.mxu0 0
    %1702 = vmatprep.subr.bf16.mxu0 0
    %1703 = vmatpush1.bf16.msra.mxu0 0
    %1704 = vmatprep.mubr.bf16.mxu0 0
    %1705 = vmatmul.mubr.bf16.gmra.mrb[0].mxu0 %v1670
    %v1706 = vpop.f32.mrb[0].mxu0
    %v1707 = vadd.f32 0.0, %v1706
    %v1708 = vpop.f32.mrb[0].mxu0
    %v1709 = vpop.f32.mrb[0].mxu0
    %v1710 = vadd.f32 0.0, %v1709
    %v1711 = vpop.f32.mrb[0].mxu0
    %1712 = vdwg.mxu0
    %v1713 = vpack.c.bf16 %v1710, %v1707
    %1715 = vrot.lane.b32.xlu0 %v1713, 24
    %v1716 = vpop.permute.xlu0 %1715
    %1718 = vst.msk [vmem:[#allocation4] sm:$0xff] %vm733, %v1716
    %v1719 = vld [vmem:[#allocation4] sm:$0xff]
    %s1720 = scalar_lea.vmem %s7, 16
    %v1721 = vld [vmem:[%s1720] sm:$0xf]
    %v1722 = vld [vmem:[%s1720 + $0x4] sm:$0xf]
    %v1723 = vld [vmem:[%s1720 + $0x8] sm:$0xf]
    %v1724 = vld [vmem:[%s1720 + $0xc] sm:$0xf]
    %s1725 = scalar_lea.vmem %s8, 1
    %v1726 = vld [vmem:[%s1725] sm:$0x1]
    %v1728 = vlaneseq
    %v1729 = vshrl.u32 %v1728, 7
    %v1730 = vsub.s32 0, %v1729
    %v1731 = vrot.slane %v1726, %v1730
    %v1737 = vunpack.c.l.b16 %v1721
    %v1738 = vunpack.c.l.b16 %v1722
    %v1739 = vunpack.c.l.b16 %v1723
    %v1740 = vunpack.c.l.b16 %v1724
    %v1741 = vpack.c.b16 %v1738, %v1737
    %v1742 = vpack.c.b16 %v1740, %v1739
    %v1746 = vsel %vm74, %v1719, 0
    %1748 = vmatprep.subr.bf16.mxu0 0
    %1749 = vmatpush1.bf16.msra.mxu0 %v1741
    %1750 = vmatprep.subr.bf16.mxu0 0
    %1751 = vmatpush1.bf16.msra.mxu0 %v1742
    %1752 = vmatprep.subr.bf16.mxu0 0
    %1753 = vmatpush1.bf16.msra.mxu0 0
    %1754 = vmatprep.subr.bf16.mxu0 0
    %1755 = vmatpush1.bf16.msra.mxu0 0
    %1756 = vmatprep.subr.bf16.mxu0 0
    %1757 = vmatpush1.bf16.msra.mxu0 0
    %1758 = vmatprep.subr.bf16.mxu0 0
    %1759 = vmatpush1.bf16.msra.mxu0 0
    %1760 = vmatprep.subr.bf16.mxu0 0
    %1761 = vmatpush1.bf16.msra.mxu0 0
    %1762 = vmatprep.subr.bf16.mxu0 0
    %1763 = vmatpush1.bf16.msra.mxu0 0
    %1764 = vmatprep.subr.bf16.mxu0 0
    %1765 = vmatpush1.bf16.msra.mxu0 0
    %1766 = vmatprep.subr.bf16.mxu0 0
    %1767 = vmatpush1.bf16.msra.mxu0 0
    %1768 = vmatprep.subr.bf16.mxu0 0
    %1769 = vmatpush1.bf16.msra.mxu0 0
    %1770 = vmatprep.subr.bf16.mxu0 0
    %1771 = vmatpush1.bf16.msra.mxu0 0
    %1772 = vmatprep.subr.bf16.mxu0 0
    %1773 = vmatpush1.bf16.msra.mxu0 0
    %1774 = vmatprep.subr.bf16.mxu0 0
    %1775 = vmatpush1.bf16.msra.mxu0 0
    %1776 = vmatprep.subr.bf16.mxu0 0
    %1777 = vmatpush1.bf16.msra.mxu0 0
    %1778 = vmatprep.subr.bf16.mxu0 0
    %1779 = vmatpush1.bf16.msra.mxu0 0
    %1780 = vmatprep.mubr.bf16.mxu0 0
    %1781 = vmatmul.mubr.bf16.gmra.mrb[0].mxu0 %v1746
    %v1782 = vpop.f32.mrb[0].mxu0
    %v1783 = vadd.f32 %v1731, %v1782
    %v1784 = vpop.f32.mrb[0].mxu0
    %v1785 = vpop.f32.mrb[0].mxu0
    %v1786 = vadd.f32 %v1731, %v1785
    %v1787 = vpop.f32.mrb[0].mxu0
    %1788 = vdwg.mxu0
    %v1789 = vadd.f32 %v1098, %v1783
    %v1790 = vadd.f32 %v1099, %v1786
    %s1791 = scalar_lea.vmem %s9, 1
    %v1792 = vld [vmem:[%s1791] sm:$0x1]
    %s1793 = scalar_lea.vmem %s10, 1
    %v1794 = vld [vmem:[%s1793] sm:$0x1]
    %v1795 = vsel %vm74, %v1789, 0.0
    %1796 = vadd.xlane.f32.xlu0 %v1795
    %v1797 = vpop.xlane.xlu0 %1796
    %v1798 = vsel %vm74, %v1790, 0.0
    %1799 = vadd.xlane.f32.xlu0 %v1798
    %v1800 = vpop.xlane.xlu0 %1799
    %v1801 = vmul.f32 %v1797, %v81
    %v1802 = vmul.f32 %v1800, %v81
    %v1803 = vsub.f32 %v1789, %v1801
    %v1804 = vsub.f32 %v1790, %v1802
    %v1805 = vmul.f32 %v1803, %v1803
    %v1806 = vmul.f32 %v1804, %v1804
    %v1807 = vsel %vm74, %v1805, 0.0
    %1808 = vadd.xlane.f32.xlu0 %v1807
    %v1809 = vpop.xlane.xlu0 %1808
    %v1810 = vsel %vm74, %v1806, 0.0
    %1811 = vadd.xlane.f32.xlu0 %v1810
    %v1812 = vpop.xlane.xlu0 %1811
    %v1813 = vmul.f32 %v1809, %v81
    %v1814 = vmul.f32 %v1812, %v81
    %v1815 = vadd.f32 %v1813, 1e-12
    %v1816 = vadd.f32 %v1814, 1e-12
    %v1817 = vrsqrt.pop %v1815
    %v1818 = vrsqrt.pop %v1816
    %v1819 = vmul.f32 %v1803, %v1817
    %v1820 = vmul.f32 %v1804, %v1818
    %v1822 = vlaneseq
    %v1823 = vshrl.u32 %v1822, 7
    %v1824 = vsub.s32 0, %v1823
    %v1825 = vrot.slane %v1792, %v1824
    %v1827 = vmul.f32 %v1819, %v1825
    %v1828 = vmul.f32 %v1820, %v1825
    %v1830 = vlaneseq
    %v1831 = vshrl.u32 %v1830, 7
    %v1832 = vsub.s32 0, %v1831
    %v1833 = vrot.slane %v1794, %v1832
    %v1835 = vadd.f32 %v1827, %v1833
    %v1836 = vadd.f32 %v1828, %v1833
    %v1837 = vpack.c.bf16 %v1836, %v1835
    %s1838 = scalar_lea.vmem %s11, 16
    %v1839 = vld [vmem:[%s1838] sm:$0xf]
    %v1840 = vld [vmem:[%s1838 + $0x4] sm:$0xf]
    %v1841 = vld [vmem:[%s1838 + $0x8] sm:$0xf]
    %v1842 = vld [vmem:[%s1838 + $0xc] sm:$0xf]
    %s1843 = scalar_lea.vmem %s12, 1
    %v1844 = vld [vmem:[%s1843] sm:$0x1]
    %v1846 = vlaneseq
    %v1847 = vshrl.u32 %v1846, 7
    %v1848 = vsub.s32 0, %v1847
    %v1849 = vrot.slane %v1844, %v1848
    %v1855 = vunpack.c.l.b16 %v1839
    %v1856 = vunpack.c.l.b16 %v1840
    %v1857 = vunpack.c.l.b16 %v1841
    %v1858 = vunpack.c.l.b16 %v1842
    %v1859 = vpack.c.b16 %v1856, %v1855
    %v1860 = vpack.c.b16 %v1858, %v1857
    %v1864 = vsel %vm74, %v1837, 0
    %1866 = vmatprep.subr.bf16.mxu0 0
    %1867 = vmatpush1.bf16.msra.mxu0 %v1859
    %1868 = vmatprep.subr.bf16.mxu0 0
    %1869 = vmatpush1.bf16.msra.mxu0 %v1860
    %1870 = vmatprep.subr.bf16.mxu0 0
    %1871 = vmatpush1.bf16.msra.mxu0 0
    %1872 = vmatprep.subr.bf16.mxu0 0
    %1873 = vmatpush1.bf16.msra.mxu0 0
    %1874 = vmatprep.subr.bf16.mxu0 0
    %1875 = vmatpush1.bf16.msra.mxu0 0
    %1876 = vmatprep.subr.bf16.mxu0 0
    %1877 = vmatpush1.bf16.msra.mxu0 0
    %1878 = vmatprep.subr.bf16.mxu0 0
    %1879 = vmatpush1.bf16.msra.mxu0 0
    %1880 = vmatprep.subr.bf16.mxu0 0
    %1881 = vmatpush1.bf16.msra.mxu0 0
    %1882 = vmatprep.subr.bf16.mxu0 0
    %1883 = vmatpush1.bf16.msra.mxu0 0
    %1884 = vmatprep.subr.bf16.mxu0 0
    %1885 = vmatpush1.bf16.msra.mxu0 0
    %1886 = vmatprep.subr.bf16.mxu0 0
    %1887 = vmatpush1.bf16.msra.mxu0 0
    %1888 = vmatprep.subr.bf16.mxu0 0
    %1889 = vmatpush1.bf16.msra.mxu0 0
    %1890 = vmatprep.subr.bf16.mxu0 0
    %1891 = vmatpush1.bf16.msra.mxu0 0
    %1892 = vmatprep.subr.bf16.mxu0 0
    %1893 = vmatpush1.bf16.msra.mxu0 0
    %1894 = vmatprep.subr.bf16.mxu0 0
    %1895 = vmatpush1.bf16.msra.mxu0 0
    %1896 = vmatprep.subr.bf16.mxu0 0
    %1897 = vmatpush1.bf16.msra.mxu0 0
    %1898 = vmatprep.mubr.bf16.mxu0 0
    %1899 = vmatmul.mubr.bf16.gmra.mrb[0].mxu0 %v1864
    %v1900 = vpop.f32.mrb[0].mxu0
    %v1901 = vadd.f32 %v1849, %v1900
    %v1902 = vpop.f32.mrb[0].mxu0
    %v1903 = vpop.f32.mrb[0].mxu0
    %v1904 = vadd.f32 %v1849, %v1903
    %v1905 = vpop.f32.mrb[0].mxu0
    %1906 = vdwg.mxu0
    %v1907 = vmul.f32 %v1901, 0.5
    %v1908 = vmul.f32 %v1904, 0.5
    %v1909 = vmul.f32 %v1901, 0.044715
    %v1910 = vmul.f32 %v1904, 0.044715
    %v1911 = vmul.f32 %v1909, %v1901
    %v1912 = vmul.f32 %v1910, %v1904
    %v1913 = vmul.f32 %v1911, %v1901
    %v1914 = vmul.f32 %v1912, %v1904
    %v1915 = vadd.f32 %v1901, %v1913
    %v1916 = vadd.f32 %v1904, %v1914
    %v1917 = vmul.f32 %v1915, 0.7978846
    %v1918 = vmul.f32 %v1916, 0.7978846
    %v1919 = vtanh.pop %v1917
    %v1920 = vtanh.pop %v1918
    %v1921 = vadd.f32 %v1919, 1.0
    %v1922 = vadd.f32 %v1920, 1.0
    %v1923 = vmul.f32 %v1907, %v1921
    %v1924 = vmul.f32 %v1908, %v1922
    %v1925 = vpack.c.bf16 %v1924, %v1923
    %s1926 = scalar_lea.vmem %s13, 64
    %v1927 = vld [vmem:[%s1926] sm:$0xf]
    %v1928 = vld [vmem:[%s1926 + $0x4] sm:$0xf]
    %v1929 = vld [vmem:[%s1926 + $0x8] sm:$0xf]
    %v1930 = vld [vmem:[%s1926 + $0xc] sm:$0xf]
    %v1931 = vld [vmem:[%s1926 + $0x10] sm:$0xf]
    %v1932 = vld [vmem:[%s1926 + $0x14] sm:$0xf]
    %v1933 = vld [vmem:[%s1926 + $0x18] sm:$0xf]
    %v1934 = vld [vmem:[%s1926 + $0x1c] sm:$0xf]
    %v1935 = vld [vmem:[%s1926 + $0x20] sm:$0xf]
    %v1936 = vld [vmem:[%s1926 + $0x24] sm:$0xf]
    %v1937 = vld [vmem:[%s1926 + $0x28] sm:$0xf]
    %v1938 = vld [vmem:[%s1926 + $0x2c] sm:$0xf]
    %v1939 = vld [vmem:[%s1926 + $0x30] sm:$0xf]
    %v1940 = vld [vmem:[%s1926 + $0x34] sm:$0xf]
    %v1941 = vld [vmem:[%s1926 + $0x38] sm:$0xf]
    %v1942 = vld [vmem:[%s1926 + $0x3c] sm:$0xf]
    %s1943 = scalar_lea.vmem %s14, 1
    %v1944 = vld [vmem:[%s1943] sm:$0x1]
    %v1946 = vlaneseq
    %v1947 = vshrl.u32 %v1946, 7
    %v1948 = vsub.s32 0, %v1947
    %v1949 = vrot.slane %v1944, %v1948
    %v1967 = vunpack.c.l.b16 %v1927
    %v1968 = vunpack.c.l.b16 %v1928
    %v1969 = vunpack.c.l.b16 %v1929
    %v1970 = vunpack.c.l.b16 %v1930
    %v1971 = vunpack.c.l.b16 %v1931
    %v1972 = vunpack.c.l.b16 %v1932
    %v1973 = vunpack.c.l.b16 %v1933
    %v1974 = vunpack.c.l.b16 %v1934
    %v1975 = vunpack.c.l.b16 %v1935
    %v1976 = vunpack.c.l.b16 %v1936
    %v1977 = vunpack.c.l.b16 %v1937
    %v1978 = vunpack.c.l.b16 %v1938
    %v1979 = vunpack.c.l.b16 %v1939
    %v1980 = vunpack.c.l.b16 %v1940
    %v1981 = vunpack.c.l.b16 %v1941
    %v1982 = vunpack.c.l.b16 %v1942
    %v1983 = vpack.c.b16 %v1968, %v1967
    %v1984 = vpack.c.b16 %v1970, %v1969
    %v1985 = vpack.c.b16 %v1972, %v1971
    %v1986 = vpack.c.b16 %v1974, %v1973
    %v1987 = vpack.c.b16 %v1976, %v1975
    %v1988 = vpack.c.b16 %v1978, %v1977
    %v1989 = vpack.c.b16 %v1980, %v1979
    %v1990 = vpack.c.b16 %v1982, %v1981
    %1999 = vmatprep.subr.bf16.mxu0 0
    %2000 = vmatpush1.bf16.msra.mxu0 %v1983
    %2001 = vmatprep.subr.bf16.mxu0 0
    %2002 = vmatpush1.bf16.msra.mxu0 %v1984
    %2003 = vmatprep.subr.bf16.mxu0 0
    %2004 = vmatpush1.bf16.msra.mxu0 %v1985
    %2005 = vmatprep.subr.bf16.mxu0 0
    %2006 = vmatpush1.bf16.msra.mxu0 %v1986
    %2007 = vmatprep.subr.bf16.mxu0 0
    %2008 = vmatpush1.bf16.msra.mxu0 %v1987
    %2009 = vmatprep.subr.bf16.mxu0 0
    %2010 = vmatpush1.bf16.msra.mxu0 %v1988
    %2011 = vmatprep.subr.bf16.mxu0 0
    %2012 = vmatpush1.bf16.msra.mxu0 %v1989
    %2013 = vmatprep.subr.bf16.mxu0 0
    %2014 = vmatpush1.bf16.msra.mxu0 %v1990
    %2015 = vmatprep.subr.bf16.mxu0 0
    %2016 = vmatpush1.bf16.msra.mxu0 0
    %2017 = vmatprep.subr.bf16.mxu0 0
    %2018 = vmatpush1.bf16.msra.mxu0 0
    %2019 = vmatprep.subr.bf16.mxu0 0
    %2020 = vmatpush1.bf16.msra.mxu0 0
    %2021 = vmatprep.subr.bf16.mxu0 0
    %2022 = vmatpush1.bf16.msra.mxu0 0
    %2023 = vmatprep.subr.bf16.mxu0 0
    %2024 = vmatpush1.bf16.msra.mxu0 0
    %2025 = vmatprep.subr.bf16.mxu0 0
    %2026 = vmatpush1.bf16.msra.mxu0 0
    %2027 = vmatprep.subr.bf16.mxu0 0
    %2028 = vmatpush1.bf16.msra.mxu0 0
    %2029 = vmatprep.subr.bf16.mxu0 0
    %2030 = vmatpush1.bf16.msra.mxu0 0
    %2031 = vmatprep.mubr.bf16.mxu0 0
    %2032 = vmatmul.mubr.bf16.gmra.mrb[0].mxu0 %v1925
    %v2033 = vpop.f32.mrb[0].mxu0
    %v2034 = vadd.f32 %v1949, %v2033
    %v2035 = vpop.f32.mrb[0].mxu0
    %v2036 = vpop.f32.mrb[0].mxu0
    %v2037 = vadd.f32 %v1949, %v2036
    %v2038 = vpop.f32.mrb[0].mxu0
    %2039 = vdwg.mxu0
    %v2040 = vadd.f32 %v1835, %v2034
    %v2041 = vadd.f32 %v1836, %v2037
    %s2042 = scalar_lea.vmem %s15, 1
    %v2043 = vld [vmem:[%s2042] sm:$0x1]
    %s2044 = scalar_lea.vmem %s16, 1
    %v2045 = vld [vmem:[%s2044] sm:$0x1]
    %v2046 = vsel %vm74, %v2040, 0.0
    %2047 = vadd.xlane.f32.xlu0 %v2046
    %v2048 = vpop.xlane.xlu0 %2047
    %v2049 = vsel %vm74, %v2041, 0.0
    %2050 = vadd.xlane.f32.xlu0 %v2049
    %v2051 = vpop.xlane.xlu0 %2050
    %v2052 = vmul.f32 %v2048, %v81
    %v2053 = vmul.f32 %v2051, %v81
    %v2054 = vsub.f32 %v2040, %v2052
    %v2055 = vsub.f32 %v2041, %v2053
    %v2056 = vmul.f32 %v2054, %v2054
    %v2057 = vmul.f32 %v2055, %v2055
    %v2058 = vsel %vm74, %v2056, 0.0
    %2059 = vadd.xlane.f32.xlu0 %v2058
    %v2060 = vpop.xlane.xlu0 %2059
    %v2061 = vsel %vm74, %v2057, 0.0
    %2062 = vadd.xlane.f32.xlu0 %v2061
    %v2063 = vpop.xlane.xlu0 %2062
    %v2064 = vmul.f32 %v2060, %v81
    %v2065 = vmul.f32 %v2063, %v81
    %v2066 = vadd.f32 %v2064, 1e-12
    %v2067 = vadd.f32 %v2065, 1e-12
    %v2068 = vrsqrt.pop %v2066
    %v2069 = vrsqrt.pop %v2067
    %v2070 = vmul.f32 %v2054, %v2068
    %v2071 = vmul.f32 %v2055, %v2069
    %v2073 = vlaneseq
    %v2074 = vshrl.u32 %v2073, 7
    %v2075 = vsub.s32 0, %v2074
    %v2076 = vrot.slane %v2043, %v2075
    %v2078 = vmul.f32 %v2070, %v2076
    %v2079 = vmul.f32 %v2071, %v2076
    %v2081 = vlaneseq
    %v2082 = vshrl.u32 %v2081, 7
    %v2083 = vsub.s32 0, %v2082
    %v2084 = vrot.slane %v2045, %v2083
    %v2086 = vadd.f32 %v2078, %v2084
    %v2087 = vadd.f32 %v2079, %v2084
    %v2088 = vmul.f32 %v2086, %v121
    %v2089 = vmul.f32 %v2087, %v126
    %2090 = vst.msk [vmem:[#allocation2] sm:$0xff] %vm74, %v2088
    %2091 = vst.msk [vmem:[#allocation2 + $0x8] sm:$0xff] %vm74, %v2089
    %v2092 = vmul.f32 %v1664, 0.25
    %v2093 = vsel %vm260, %v2092, 0.0
    %2094 = vst [vmem:[#allocation5] sm:$0x3] %v2093
    %v2095 = vld [vmem:[#allocation2] sm:$0xff]
    %v2096 = vld [vmem:[#allocation2 + $0x8] sm:$0xff]
    %v2097 = vpack.c.bf16 %v2096, %v2095
    %v2098 = vld [vmem:[%s17] sm:$0xf]
    %v2099 = vld [vmem:[%s17 + $0x4] sm:$0xf]
    %v2100 = vld [vmem:[%s17 + $0x8] sm:$0xf]
    %v2101 = vld [vmem:[%s17 + $0xc] sm:$0xf]
    %v2102 = vld [vmem:[%s18] sm:$0x1]
    %v2104 = vlaneseq
    %v2105 = vshrl.u32 %v2104, 7
    %v2106 = vsub.s32 0, %v2105
    %v2107 = vrot.slane %v2102, %v2106
    %v2113 = vunpack.c.l.b16 %v2098
    %v2114 = vunpack.c.l.b16 %v2099
    %v2115 = vunpack.c.l.b16 %v2100
    %v2116 = vunpack.c.l.b16 %v2101
    %v2117 = vpack.c.b16 %v2114, %v2113
    %v2118 = vpack.c.b16 %v2116, %v2115
    %v2122 = vsel %vm74, %v2097, 0
    %2124 = vmatprep.subr.bf16.mxu0 0
    %2125 = vmatpush1.bf16.msra.mxu0 %v2117
    %2126 = vmatprep.subr.bf16.mxu0 0
    %2127 = vmatpush1.bf16.msra.mxu0 %v2118
    %2128 = vmatprep.subr.bf16.mxu0 0
    %2129 = vmatpush1.bf16.msra.mxu0 0
    %2130 = vmatprep.subr.bf16.mxu0 0
    %2131 = vmatpush1.bf16.msra.mxu0 0
    %2132 = vmatprep.subr.bf16.mxu0 0
    %2133 = vmatpush1.bf16.msra.mxu0 0
    %2134 = vmatprep.subr.bf16.mxu0 0
    %2135 = vmatpush1.bf16.msra.mxu0 0
    %2136 = vmatprep.subr.bf16.mxu0 0
    %2137 = vmatpush1.bf16.msra.mxu0 0
    %2138 = vmatprep.subr.bf16.mxu0 0
    %2139 = vmatpush1.bf16.msra.mxu0 0
    %2140 = vmatprep.subr.bf16.mxu0 0
    %2141 = vmatpush1.bf16.msra.mxu0 0
    %2142 = vmatprep.subr.bf16.mxu0 0
    %2143 = vmatpush1.bf16.msra.mxu0 0
    %2144 = vmatprep.subr.bf16.mxu0 0
    %2145 = vmatpush1.bf16.msra.mxu0 0
    %2146 = vmatprep.subr.bf16.mxu0 0
    %2147 = vmatpush1.bf16.msra.mxu0 0
    %2148 = vmatprep.subr.bf16.mxu0 0
    %2149 = vmatpush1.bf16.msra.mxu0 0
    %2150 = vmatprep.subr.bf16.mxu0 0
    %2151 = vmatpush1.bf16.msra.mxu0 0
    %2152 = vmatprep.subr.bf16.mxu0 0
    %2153 = vmatpush1.bf16.msra.mxu0 0
    %2154 = vmatprep.subr.bf16.mxu0 0
    %2155 = vmatpush1.bf16.msra.mxu0 0
    %2156 = vmatprep.mubr.bf16.mxu0 0
    %2157 = vmatmul.mubr.bf16.gmra.mrb[0].mxu0 %v2122
    %v2158 = vpop.f32.mrb[0].mxu0
    %v2159 = vadd.f32 %v2107, %v2158
    %v2160 = vpop.f32.mrb[0].mxu0
    %v2161 = vpop.f32.mrb[0].mxu0
    %v2162 = vadd.f32 %v2107, %v2161
    %v2163 = vpop.f32.mrb[0].mxu0
    %2164 = vdwg.mxu0
    %2165 = vst [vmem:[%s19] sm:$0xff] %v2159
    %2166 = vst [vmem:[%s19 + $0x8] sm:$0xff] %v2162
    // Predicated region
    $region78: #{flaubert_pallas_forward.1} parent=1 // pred_check
      _
    $region79: #{flaubert_pallas_forward.1} parent=1 // pred_check_branch
      %2168 = sbr.rel (0) target = $region81
    $region80: #{flaubert_pallas_forward.1} parent=1 // pred_region
      _
    $region81: #{flaubert_pallas_forward.1} parent=1 // pred_fallthru
      _
    // Predicated region
    $region82: #{flaubert_pallas_forward.1} parent=1 // pred_check
      _
    $region83: #{flaubert_pallas_forward.1} parent=1 // pred_check_branch
      %2170 = sbr.rel (0) target = $region85
    $region84: #{flaubert_pallas_forward.1} parent=1 // pred_region
      %s2172 = ssub.s32 32, 32
      %2173 = vsyncadd [#allocation6], %s2172
      %s2175 = sshll.u32 [#allocation5], 4
      %s2176 = int_to_ptr.vmem [resolvable:$true] %s2175
      %2178 = dma.vmem_to_hbm [thread:$0]  %s2176, 32, %s20, [#allocation6]
    $region85: #{flaubert_pallas_forward.1} parent=1 // pred_fallthru
      _
    // Predicated region
    $region86: #{flaubert_pallas_forward.1} parent=1 // pred_check
      _
    $region87: #{flaubert_pallas_forward.1} parent=1 // pred_check_branch
      %2180 = sbr.rel (0) target = $region89
    $region88: #{flaubert_pallas_forward.1} parent=1 // pred_region
      _
    $region89: #{flaubert_pallas_forward.1} parent=1 // pred_fallthru
      _
    // Predicated region
    $region90: #{flaubert_pallas_forward.1} parent=1 // pred_check
      _
    $region91: #{flaubert_pallas_forward.1} parent=1 // pred_check_branch
      %2182 = sbr.rel (0) target = $region93
    $region92: #{flaubert_pallas_forward.1} parent=1 // pred_region
      %2183 = dma.done [#allocation6], 32
    $region93: #{flaubert_pallas_forward.1} parent=1 // pred_fallthru
      _
    %2184 = vsyncpa [#allocation6], 1

</llo_original>
